<compile_context>
chip_gen: v7x
topology: tpu7x:2x2x1
jax: 0.10.0
libtpu: 0.0.40
codegen_flags: <defaults>
</compile_context>

<pallas_src>
import functools

import jax
import jax.numpy as jnp
from jax.experimental import pallas as pl
from jax.experimental.pallas import tpu as pltpu

EPS = 1e-5
LEAKY_SLOPE = 0.01

# Set to jnp.bfloat16 on v6e/v7x to use the MXU's native bf16 path (BN stats
# and matmul accumulation stay in f32).  Kept at f32 to match PyTorch numerics.
MATMUL_DTYPE = jnp.float32


def _mm(a, b):
    """MXU matmul with f32 accumulation; optional bf16 operand cast."""
    return jnp.dot(a.astype(MATMUL_DTYPE), b.astype(MATMUL_DTYPE),
                   preferred_element_type=jnp.float32)


def _bn_act(y, gamma, beta, *, leaky):
    """Train-mode BatchNorm over axis 0 (all rows of this block) per channel,
    folded into one per-element fused multiply-add, with activation fused in."""
    mean = jnp.mean(y, axis=0, keepdims=True)
    var = jnp.mean(jnp.square(y - mean), axis=0, keepdims=True)  # biased, like PyTorch
    scale = gamma * jax.lax.rsqrt(var + EPS)
    shift = beta - mean * scale
    h = y * scale + shift
    if leaky:
        return jnp.where(h >= 0.0, h, LEAKY_SLOPE * h)
    return jnp.maximum(h, 0.0)


# ---------------------------------------------------------------------------
# Fused kernel: the entire forward pass, activations never leave VMEM.
# ---------------------------------------------------------------------------
def fused_forward_kernel(x_ref, w1_ref, g1_ref, b1_ref,
                         sel2_ref, w2_ref, g2_ref, b2_ref,
                         sel3_ref, w3_ref, g3_ref, b3_ref,
                         selp_ref, f1w_ref, f1b_ref, gf1_ref, bf1_ref,
                         f2w_ref, f2b_ref, gf2_ref, bf2_ref,
                         f3w_ref, f3b_ref, o_ref):
    # conv1: kernel (1,128), stride 1, no pad == matmul over the mel axis.
    # (B*32, 128) @ (128, 128)
    h1 = _bn_act(_mm(x_ref[...], w1_ref[...]), g1_ref[...], b1_ref[...], leaky=False)

    # conv2: (4,1) kernel, stride (2,1), pad (1,0): 32 -> 16 rows, 128 ch.
    # 4-tap sum; sel2[k] gathers (with zero padding) the tap-k input rows.
    acc2 = _mm(_mm(sel2_ref[0], h1), w2_ref[0])
    for k in range(1, 4):
        acc2 = acc2 + _mm(_mm(sel2_ref[k], h1), w2_ref[k])
    h2 = _bn_act(acc2, g2_ref[...], b2_ref[...], leaky=False)

    # conv3: (4,1) kernel, stride (2,1), pad (1,0): 16 -> 8 rows, 128 -> 256 ch.
    acc3 = _mm(_mm(sel3_ref[0], h2), w3_ref[0])
    for k in range(1, 4):
        acc3 = acc3 + _mm(_mm(sel3_ref[k], h2), w3_ref[k])
    h3 = _bn_act(acc3, g3_ref[...], b3_ref[...], leaky=False)

    # fc1 with the NCHW channel-major flatten folded into per-spatial-row
    # weight blocks: out = sum_h (rows at spatial pos h) @ W1_block[h].
    acc = _mm(_mm(selp_ref[0], h3), f1w_ref[0])
    for h in range(1, 8):
        acc = acc + _mm(_mm(selp_ref[h], h3), f1w_ref[h])
    f1 = _bn_act(acc + f1b_ref[...], gf1_ref[...], bf1_ref[...], leaky=True)

    # fc2 -> BN1d -> LeakyReLU
    f2 = _bn_act(_mm(f1, f2w_ref[...]) + f2b_ref[...],
                 gf2_ref[...], bf2_ref[...], leaky=True)

    # fc3 (logits)
    out = _mm(f2, f3w_ref[...]) + f3b_ref[...]
    o_ref[...] = out.astype(o_ref.dtype)


# ---------------------------------------------------------------------------
# Constant selection matrices (built once per static B; XLA constant-folds them)
# ---------------------------------------------------------------------------
def _stride2_select(B, h_in):
    """sel[k, b*H_out+i, b*h_in+j] = 1 iff j == 2*i - 1 + k (zero if padded)."""
    h_out = h_in // 2
    i = jnp.arange(h_out)
    j = jnp.arange(h_in)
    k = jnp.arange(4)
    blk = (j[None, None, :] == (2 * i[None, :, None] - 1 + k[:, None, None]))
    blk = blk.astype(jnp.float32)                       # (4, h_out, h_in)
    eye_b = jnp.eye(B, dtype=jnp.float32)
    sel = jnp.einsum('kij,ab->kaibj', blk, eye_b)
    return sel.reshape(4, B * h_out, B * h_in)


def _spatial_select(B, H):
    """selp[h, b, b*H + h'] = 1 iff h' == h (picks spatial row h of batch b)."""
    eye_h = jnp.eye(H, dtype=jnp.float32)
    eye_b = jnp.eye(B, dtype=jnp.float32)
    sel = jnp.einsum('hH,bB->hbBH', eye_h, eye_b)
    return sel.reshape(H, B, B * H)


# ---------------------------------------------------------------------------
# pallas_call wrapper: single launch, single full-array block, grid=(1,)
# ---------------------------------------------------------------------------
def _full_spec(arr):
    nd = arr.ndim
    return pl.BlockSpec(arr.shape, lambda i, nd=nd: (0,) * nd)


def sound_classifier_forward(x, params):
    """x: (B, 1, 32, 128) float32 (NCHW, like PyTorch).  Returns (B, 10)."""
    B = x.shape[0]
    assert x.shape[1:] == (1, 32, 128), "expected (B, 1, 32, 128) input"
    assert B >= 2, "train-mode BatchNorm1d needs batch >= 2 (matches PyTorch)"

    x2d = x.reshape(B * 32, 128)          # free, contiguous reshape
    sel2 = _stride2_select(B, 32)         # (4, B*16, B*32)
    sel3 = _stride2_select(B, 16)         # (4, B*8,  B*16)
    selp = _spatial_select(B, 8)          # (8, B,    B*8)

    args = (x2d, params["w1"], params["bn1_g"], params["bn1_b"],
            sel2, params["w2"], params["bn2_g"], params["bn2_b"],
            sel3, params["w3"], params["bn3_g"], params["bn3_b"],
            selp, params["fc1_w"], params["fc1_b"], params["bnf1_g"], params["bnf1_b"],
            params["fc2_w"], params["fc2_b"], params["bnf2_g"], params["bnf2_b"],
            params["fc3_w"], params["fc3_b"])

    return pl.pallas_call(
        fused_forward_kernel,
        grid=(1,),
        in_specs=[_full_spec(a) for a in args],
        out_specs=pl.BlockSpec((B, 10), lambda i: (0, 0)),
        out_shape=jax.ShapeDtypeStruct((B, 10), jnp.float32),
        compiler_params=pltpu.CompilerParams(
            dimension_semantics=("arbitrary",)),
    )(*args)


# ---------------------------------------------------------------------------
# Deterministic synthetic parameters in torch layout, converted to kernel layout
# ---------------------------------------------------------------------------
def init_params(key):
    ks = jax.random.split(key, 20)

    def nrm(k, shape, scale):
        return scale * jax.random.normal(k, shape, dtype=jnp.float32)

    p = {}
    # Conv2d(1, 128, (1,128), bias=False): torch weight (128, 1, 1, 128)
    w1_t = nrm(ks[0], (128, 1, 1, 128), 0.05)
    p["w1"] = jnp.transpose(w1_t[:, 0, 0, :], (1, 0))                  # (128_in, 128_out)
    # Conv2d(128, 128, (4,1), bias=False): torch weight (128, 128, 4, 1)
    w2_t = nrm(ks[1], (128, 128, 4, 1), 0.05)
    p["w2"] = jnp.transpose(w2_t[:, :, :, 0], (2, 1, 0))               # (4, 128_in, 128_out)
    # Conv2d(128, 256, (4,1), bias=False): torch weight (256, 128, 4, 1)
    w3_t = nrm(ks[2], (256, 128, 4, 1), 0.05)
    p["w3"] = jnp.transpose(w3_t[:, :, :, 0], (2, 1, 0))               # (4, 128_in, 256_out)

    # BatchNorm2d affine params (gamma, beta), stored (1, C)
    for i, (name, c) in enumerate([("bn1", 128), ("bn2", 128), ("bn3", 256)]):
        p[f"{name}_g"] = 1.0 + 0.1 * jax.random.normal(ks[3 + 2 * i], (1, c), jnp.float32)
        p[f"{name}_b"] = 0.1 * jax.random.normal(ks[4 + 2 * i], (1, c), jnp.float32)

    # Linear(2048, 128): torch weight (128, 2048) with input flattened as
    # channel-major (c*8 + h).  Fold that flatten into per-spatial-row blocks:
    # fc1_w[h, c, f] = W_torch[f, c*8 + h]  -> shape (8, 256, 128).
    fc1_t = nrm(ks[9], (128, 2048), 0.02)
    p["fc1_w"] = jnp.transpose(fc1_t.reshape(128, 256, 8), (2, 1, 0))
    p["fc1_b"] = nrm(ks[10], (1, 128), 0.02)
    p["bnf1_g"] = 1.0 + 0.1 * jax.random.normal(ks[11], (1, 128), jnp.float32)
    p["bnf1_b"] = 0.1 * jax.random.normal(ks[12], (1, 128), jnp.float32)

    # Linear(128, 64) / BN1d(64)
    fc2_t = nrm(ks[13], (64, 128), 0.05)
    p["fc2_w"] = jnp.transpose(fc2_t, (1, 0))                          # (128, 64)
    p["fc2_b"] = nrm(ks[14], (1, 64), 0.05)
    p["bnf2_g"] = 1.0 + 0.1 * jax.random.normal(ks[15], (1, 64), jnp.float32)
    p["bnf2_b"] = 0.1 * jax.random.normal(ks[16], (1, 64), jnp.float32)

    # Linear(64, 10)
    fc3_t = nrm(ks[17], (10, 64), 0.1)
    p["fc3_w"] = jnp.transpose(fc3_t, (1, 0))                          # (64, 10)
    p["fc3_b"] = nrm(ks[18], (1, 10), 0.1)
    return p


if __name__ == "__main__":
    # (B, 1, 32, 128): 32 time frames x 128 mel bins so that the flattened CNN
    # feature is 256 * 8 * 1 = 2048, as required by the fc head.
    x = jax.random.normal(jax.random.PRNGKey(0), (2, 1, 32, 128), dtype=jnp.float32)
    params = init_params(jax.random.PRNGKey(1))

    fwd = jax.jit(functools.partial(sound_classifier_forward, params=params))
    out = fwd(x)
    jax.block_until_ready(out)

    assert out.shape == (2, 10) and out.dtype == jnp.float32
    assert bool(jnp.all(jnp.isfinite(out)))
    print("KERNEL_OK")
</pallas_src>

<mosaic_0001>
module attributes {stable_mosaic.version = 11 : i64} {
  func.func @fused_forward_kernel(%arg0: i32, %arg1: memref<64x128xf32, #tpu.memory_space<vmem>>, %arg2: memref<128x128xf32, #tpu.memory_space<vmem>>, %arg3: memref<1x128xf32, #tpu.memory_space<vmem>>, %arg4: memref<1x128xf32, #tpu.memory_space<vmem>>, %arg5: memref<4x32x64xf32, #tpu.memory_space<vmem>>, %arg6: memref<4x128x128xf32, #tpu.memory_space<vmem>>, %arg7: memref<1x128xf32, #tpu.memory_space<vmem>>, %arg8: memref<1x128xf32, #tpu.memory_space<vmem>>, %arg9: memref<4x16x32xf32, #tpu.memory_space<vmem>>, %arg10: memref<4x128x256xf32, #tpu.memory_space<vmem>>, %arg11: memref<1x256xf32, #tpu.memory_space<vmem>>, %arg12: memref<1x256xf32, #tpu.memory_space<vmem>>, %arg13: memref<8x2x16xf32, #tpu.memory_space<vmem>>, %arg14: memref<8x256x128xf32, #tpu.memory_space<vmem>>, %arg15: memref<1x128xf32, #tpu.memory_space<vmem>>, %arg16: memref<1x128xf32, #tpu.memory_space<vmem>>, %arg17: memref<1x128xf32, #tpu.memory_space<vmem>>, %arg18: memref<128x64xf32, #tpu.memory_space<vmem>>, %arg19: memref<1x64xf32, #tpu.memory_space<vmem>>, %arg20: memref<1x64xf32, #tpu.memory_space<vmem>>, %arg21: memref<1x64xf32, #tpu.memory_space<vmem>>, %arg22: memref<64x10xf32, #tpu.memory_space<vmem>>, %arg23: memref<1x10xf32, #tpu.memory_space<vmem>>, %arg24: memref<2x10xf32, #tpu.memory_space<vmem>>) attributes {dimension_semantics = [#tpu.dimension_semantics<arbitrary>], iteration_bounds = array<i64: 1>, scalar_prefetch = 0 : i64, scratch_operands = 0 : i64, tpu.core_type = #tpu.core_type<tc>, window_params = [{pipeline_mode = #tpu.pipeline_mode<synchronous>, transform_indices = @transform_0, window_bounds = array<i64: 64, 128>}, {pipeline_mode = #tpu.pipeline_mode<synchronous>, transform_indices = @transform_1, window_bounds = array<i64: 128, 128>}, {pipeline_mode = #tpu.pipeline_mode<synchronous>, transform_indices = @transform_2, window_bounds = array<i64: 1, 128>}, {pipeline_mode = #tpu.pipeline_mode<synchronous>, transform_indices = @transform_3, window_bounds = array<i64: 1, 128>}, {pipeline_mode = #tpu.pipeline_mode<synchronous>, transform_indices = @transform_4, window_bounds = array<i64: 4, 32, 64>}, {pipeline_mode = #tpu.pipeline_mode<synchronous>, transform_indices = @transform_5, window_bounds = array<i64: 4, 128, 128>}, {pipeline_mode = #tpu.pipeline_mode<synchronous>, transform_indices = @transform_6, window_bounds = array<i64: 1, 128>}, {pipeline_mode = #tpu.pipeline_mode<synchronous>, transform_indices = @transform_7, window_bounds = array<i64: 1, 128>}, {pipeline_mode = #tpu.pipeline_mode<synchronous>, transform_indices = @transform_8, window_bounds = array<i64: 4, 16, 32>}, {pipeline_mode = #tpu.pipeline_mode<synchronous>, transform_indices = @transform_9, window_bounds = array<i64: 4, 128, 256>}, {pipeline_mode = #tpu.pipeline_mode<synchronous>, transform_indices = @transform_10, window_bounds = array<i64: 1, 256>}, {pipeline_mode = #tpu.pipeline_mode<synchronous>, transform_indices = @transform_11, window_bounds = array<i64: 1, 256>}, {pipeline_mode = #tpu.pipeline_mode<synchronous>, transform_indices = @transform_12, window_bounds = array<i64: 8, 2, 16>}, {pipeline_mode = #tpu.pipeline_mode<synchronous>, transform_indices = @transform_13, window_bounds = array<i64: 8, 256, 128>}, {pipeline_mode = #tpu.pipeline_mode<synchronous>, transform_indices = @transform_14, window_bounds = array<i64: 1, 128>}, {pipeline_mode = #tpu.pipeline_mode<synchronous>, transform_indices = @transform_15, window_bounds = array<i64: 1, 128>}, {pipeline_mode = #tpu.pipeline_mode<synchronous>, transform_indices = @transform_16, window_bounds = array<i64: 1, 128>}, {pipeline_mode = #tpu.pipeline_mode<synchronous>, transform_indices = @transform_17, window_bounds = array<i64: 128, 64>}, {pipeline_mode = #tpu.pipeline_mode<synchronous>, transform_indices = @transform_18, window_bounds = array<i64: 1, 64>}, {pipeline_mode = #tpu.pipeline_mode<synchronous>, transform_indices = @transform_19, window_bounds = array<i64: 1, 64>}, {pipeline_mode = #tpu.pipeline_mode<synchronous>, transform_indices = @transform_20, window_bounds = array<i64: 1, 64>}, {pipeline_mode = #tpu.pipeline_mode<synchronous>, transform_indices = @transform_21, window_bounds = array<i64: 64, 10>}, {pipeline_mode = #tpu.pipeline_mode<synchronous>, transform_indices = @transform_22, window_bounds = array<i64: 1, 10>}, {pipeline_mode = #tpu.pipeline_mode<synchronous>, transform_indices = @transform_23, window_bounds = array<i64: 2, 10>}]} {
    %c0 = arith.constant 0 : index
    %c0_0 = arith.constant 0 : index
    %0 = vector.load %arg1[%c0, %c0_0] : memref<64x128xf32, #tpu.memory_space<vmem>>, vector<64x128xf32>
    %c0_1 = arith.constant 0 : index
    %c0_2 = arith.constant 0 : index
    %1 = vector.load %arg2[%c0_1, %c0_2] : memref<128x128xf32, #tpu.memory_space<vmem>>, vector<128x128xf32>
    %cst = arith.constant dense<0.000000e+00> : vector<64x128xf32>
    %2 = tpu.matmul %0, %1, %cst {dimension_numbers = #tpu.dot_dimension_numbers<[1], [0], [0], [1], [0, 0, 1, 1], [], []>} : vector<64x128xf32>, vector<128x128xf32>, vector<64x128xf32> -> vector<64x128xf32>
    %c0_3 = arith.constant 0 : index
    %c0_4 = arith.constant 0 : index
    %3 = vector.load %arg3[%c0_3, %c0_4] : memref<1x128xf32, #tpu.memory_space<vmem>>, vector<1x128xf32>
    %c0_5 = arith.constant 0 : index
    %c0_6 = arith.constant 0 : index
    %4 = vector.load %arg4[%c0_5, %c0_6] : memref<1x128xf32, #tpu.memory_space<vmem>>, vector<1x128xf32>
    %cst_7 = arith.constant dense<0.000000e+00> : vector<128xf32>
    %5 = vector.multi_reduction <add>, %2, %cst_7 [0] : vector<64x128xf32> to vector<128xf32>
    %6 = vector.shape_cast %5 : vector<128xf32> to vector<1x128xf32>
    %cst_8 = arith.constant 6.400000e+01 : f32
    %7 = vector.broadcast %cst_8 : f32 to vector<1x128xf32>
    %8 = arith.divf %6, %7 : vector<1x128xf32>
    %9 = vector.broadcast %8 : vector<1x128xf32> to vector<64x128xf32>
    %10 = arith.subf %2, %9 : vector<64x128xf32>
    %11 = arith.mulf %10, %10 : vector<64x128xf32>
    %cst_9 = arith.constant dense<0.000000e+00> : vector<128xf32>
    %12 = vector.multi_reduction <add>, %11, %cst_9 [0] : vector<64x128xf32> to vector<128xf32>
    %13 = vector.shape_cast %12 : vector<128xf32> to vector<1x128xf32>
    %cst_10 = arith.constant 6.400000e+01 : f32
    %14 = vector.broadcast %cst_10 : f32 to vector<1x128xf32>
    %15 = arith.divf %13, %14 : vector<1x128xf32>
    %cst_11 = arith.constant 9.99999974E-6 : f32
    %16 = vector.broadcast %cst_11 : f32 to vector<1x128xf32>
    %17 = arith.addf %15, %16 : vector<1x128xf32>
    %18 = math.rsqrt %17 : vector<1x128xf32>
    %19 = arith.mulf %3, %18 : vector<1x128xf32>
    %20 = arith.mulf %8, %19 : vector<1x128xf32>
    %21 = arith.subf %4, %20 : vector<1x128xf32>
    %22 = vector.broadcast %19 : vector<1x128xf32> to vector<64x128xf32>
    %23 = arith.mulf %2, %22 : vector<64x128xf32>
    %24 = vector.broadcast %21 : vector<1x128xf32> to vector<64x128xf32>
    %25 = arith.addf %23, %24 : vector<64x128xf32>
    %cst_12 = arith.constant 0.000000e+00 : f32
    %26 = vector.broadcast %cst_12 : f32 to vector<64x128xf32>
    %27 = arith.maximumf %25, %26 : vector<64x128xf32>
    %c0_13 = arith.constant 0 : index
    %c0_14 = arith.constant 0 : index
    %c0_15 = arith.constant 0 : index
    %28 = vector.load %arg5[%c0_13, %c0_14, %c0_15] : memref<4x32x64xf32, #tpu.memory_space<vmem>>, vector<1x32x64xf32>
    %29 = vector.shape_cast %28 : vector<1x32x64xf32> to vector<32x64xf32>
    %cst_16 = arith.constant dense<0.000000e+00> : vector<32x128xf32>
    %30 = tpu.matmul %29, %27, %cst_16 {dimension_numbers = #tpu.dot_dimension_numbers<[1], [0], [0], [1], [0, 0, 1, 1], [], []>} : vector<32x64xf32>, vector<64x128xf32>, vector<32x128xf32> -> vector<32x128xf32>
    %c0_17 = arith.constant 0 : index
    %c0_18 = arith.constant 0 : index
    %c0_19 = arith.constant 0 : index
    %31 = vector.load %arg6[%c0_17, %c0_18, %c0_19] : memref<4x128x128xf32, #tpu.memory_space<vmem>>, vector<1x128x128xf32>
    %32 = vector.shape_cast %31 : vector<1x128x128xf32> to vector<128x128xf32>
    %cst_20 = arith.constant dense<0.000000e+00> : vector<32x128xf32>
    %33 = tpu.matmul %30, %32, %cst_20 {dimension_numbers = #tpu.dot_dimension_numbers<[1], [0], [0], [1], [0, 0, 1, 1], [], []>} : vector<32x128xf32>, vector<128x128xf32>, vector<32x128xf32> -> vector<32x128xf32>
    %c1 = arith.constant 1 : index
    %c0_21 = arith.constant 0 : index
    %c0_22 = arith.constant 0 : index
    %34 = vector.load %arg5[%c1, %c0_21, %c0_22] : memref<4x32x64xf32, #tpu.memory_space<vmem>>, vector<1x32x64xf32>
    %35 = vector.shape_cast %34 : vector<1x32x64xf32> to vector<32x64xf32>
    %cst_23 = arith.constant dense<0.000000e+00> : vector<32x128xf32>
    %36 = tpu.matmul %35, %27, %cst_23 {dimension_numbers = #tpu.dot_dimension_numbers<[1], [0], [0], [1], [0, 0, 1, 1], [], []>} : vector<32x64xf32>, vector<64x128xf32>, vector<32x128xf32> -> vector<32x128xf32>
    %c1_24 = arith.constant 1 : index
    %c0_25 = arith.constant 0 : index
    %c0_26 = arith.constant 0 : index
    %37 = vector.load %arg6[%c1_24, %c0_25, %c0_26] : memref<4x128x128xf32, #tpu.memory_space<vmem>>, vector<1x128x128xf32>
    %38 = vector.shape_cast %37 : vector<1x128x128xf32> to vector<128x128xf32>
    %cst_27 = arith.constant dense<0.000000e+00> : vector<32x128xf32>
    %39 = tpu.matmul %36, %38, %cst_27 {dimension_numbers = #tpu.dot_dimension_numbers<[1], [0], [0], [1], [0, 0, 1, 1], [], []>} : vector<32x128xf32>, vector<128x128xf32>, vector<32x128xf32> -> vector<32x128xf32>
    %40 = arith.addf %33, %39 : vector<32x128xf32>
    %c2 = arith.constant 2 : index
    %c0_28 = arith.constant 0 : index
    %c0_29 = arith.constant 0 : index
    %41 = vector.load %arg5[%c2, %c0_28, %c0_29] : memref<4x32x64xf32, #tpu.memory_space<vmem>>, vector<1x32x64xf32>
    %42 = vector.shape_cast %41 : vector<1x32x64xf32> to vector<32x64xf32>
    %cst_30 = arith.constant dense<0.000000e+00> : vector<32x128xf32>
    %43 = tpu.matmul %42, %27, %cst_30 {dimension_numbers = #tpu.dot_dimension_numbers<[1], [0], [0], [1], [0, 0, 1, 1], [], []>} : vector<32x64xf32>, vector<64x128xf32>, vector<32x128xf32> -> vector<32x128xf32>
    %c2_31 = arith.constant 2 : index
    %c0_32 = arith.constant 0 : index
    %c0_33 = arith.constant 0 : index
    %44 = vector.load %arg6[%c2_31, %c0_32, %c0_33] : memref<4x128x128xf32, #tpu.memory_space<vmem>>, vector<1x128x128xf32>
    %45 = vector.shape_cast %44 : vector<1x128x128xf32> to vector<128x128xf32>
    %cst_34 = arith.constant dense<0.000000e+00> : vector<32x128xf32>
    %46 = tpu.matmul %43, %45, %cst_34 {dimension_numbers = #tpu.dot_dimension_numbers<[1], [0], [0], [1], [0, 0, 1, 1], [], []>} : vector<32x128xf32>, vector<128x128xf32>, vector<32x128xf32> -> vector<32x128xf32>
    %47 = arith.addf %40, %46 : vector<32x128xf32>
    %c3 = arith.constant 3 : index
    %c0_35 = arith.constant 0 : index
    %c0_36 = arith.constant 0 : index
    %48 = vector.load %arg5[%c3, %c0_35, %c0_36] : memref<4x32x64xf32, #tpu.memory_space<vmem>>, vector<1x32x64xf32>
    %49 = vector.shape_cast %48 : vector<1x32x64xf32> to vector<32x64xf32>
    %cst_37 = arith.constant dense<0.000000e+00> : vector<32x128xf32>
    %50 = tpu.matmul %49, %27, %cst_37 {dimension_numbers = #tpu.dot_dimension_numbers<[1], [0], [0], [1], [0, 0, 1, 1], [], []>} : vector<32x64xf32>, vector<64x128xf32>, vector<32x128xf32> -> vector<32x128xf32>
    %c3_38 = arith.constant 3 : index
    %c0_39 = arith.constant 0 : index
    %c0_40 = arith.constant 0 : index
    %51 = vector.load %arg6[%c3_38, %c0_39, %c0_40] : memref<4x128x128xf32, #tpu.memory_space<vmem>>, vector<1x128x128xf32>
    %52 = vector.shape_cast %51 : vector<1x128x128xf32> to vector<128x128xf32>
    %cst_41 = arith.constant dense<0.000000e+00> : vector<32x128xf32>
    %53 = tpu.matmul %50, %52, %cst_41 {dimension_numbers = #tpu.dot_dimension_numbers<[1], [0], [0], [1], [0, 0, 1, 1], [], []>} : vector<32x128xf32>, vector<128x128xf32>, vector<32x128xf32> -> vector<32x128xf32>
    %54 = arith.addf %47, %53 : vector<32x128xf32>
    %c0_42 = arith.constant 0 : index
    %c0_43 = arith.constant 0 : index
    %55 = vector.load %arg7[%c0_42, %c0_43] : memref<1x128xf32, #tpu.memory_space<vmem>>, vector<1x128xf32>
    %c0_44 = arith.constant 0 : index
    %c0_45 = arith.constant 0 : index
    %56 = vector.load %arg8[%c0_44, %c0_45] : memref<1x128xf32, #tpu.memory_space<vmem>>, vector<1x128xf32>
    %cst_46 = arith.constant dense<0.000000e+00> : vector<128xf32>
    %57 = vector.multi_reduction <add>, %54, %cst_46 [0] : vector<32x128xf32> to vector<128xf32>
    %58 = vector.shape_cast %57 : vector<128xf32> to vector<1x128xf32>
    %cst_47 = arith.constant 3.200000e+01 : f32
    %59 = vector.broadcast %cst_47 : f32 to vector<1x128xf32>
    %60 = arith.divf %58, %59 : vector<1x128xf32>
    %61 = vector.broadcast %60 : vector<1x128xf32> to vector<32x128xf32>
    %62 = arith.subf %54, %61 : vector<32x128xf32>
    %63 = arith.mulf %62, %62 : vector<32x128xf32>
    %cst_48 = arith.constant dense<0.000000e+00> : vector<128xf32>
    %64 = vector.multi_reduction <add>, %63, %cst_48 [0] : vector<32x128xf32> to vector<128xf32>
    %65 = vector.shape_cast %64 : vector<128xf32> to vector<1x128xf32>
    %cst_49 = arith.constant 3.200000e+01 : f32
    %66 = vector.broadcast %cst_49 : f32 to vector<1x128xf32>
    %67 = arith.divf %65, %66 : vector<1x128xf32>
    %cst_50 = arith.constant 9.99999974E-6 : f32
    %68 = vector.broadcast %cst_50 : f32 to vector<1x128xf32>
    %69 = arith.addf %67, %68 : vector<1x128xf32>
    %70 = math.rsqrt %69 : vector<1x128xf32>
    %71 = arith.mulf %55, %70 : vector<1x128xf32>
    %72 = arith.mulf %60, %71 : vector<1x128xf32>
    %73 = arith.subf %56, %72 : vector<1x128xf32>
    %74 = vector.broadcast %71 : vector<1x128xf32> to vector<32x128xf32>
    %75 = arith.mulf %54, %74 : vector<32x128xf32>
    %76 = vector.broadcast %73 : vector<1x128xf32> to vector<32x128xf32>
    %77 = arith.addf %75, %76 : vector<32x128xf32>
    %cst_51 = arith.constant 0.000000e+00 : f32
    %78 = vector.broadcast %cst_51 : f32 to vector<32x128xf32>
    %79 = arith.maximumf %77, %78 : vector<32x128xf32>
    %c0_52 = arith.constant 0 : index
    %c0_53 = arith.constant 0 : index
    %c0_54 = arith.constant 0 : index
    %80 = vector.load %arg9[%c0_52, %c0_53, %c0_54] : memref<4x16x32xf32, #tpu.memory_space<vmem>>, vector<1x16x32xf32>
    %81 = vector.shape_cast %80 : vector<1x16x32xf32> to vector<16x32xf32>
    %cst_55 = arith.constant dense<0.000000e+00> : vector<16x128xf32>
    %82 = tpu.matmul %81, %79, %cst_55 {dimension_numbers = #tpu.dot_dimension_numbers<[1], [0], [0], [1], [0, 0, 1, 1], [], []>} : vector<16x32xf32>, vector<32x128xf32>, vector<16x128xf32> -> vector<16x128xf32>
    %c0_56 = arith.constant 0 : index
    %c0_57 = arith.constant 0 : index
    %c0_58 = arith.constant 0 : index
    %83 = vector.load %arg10[%c0_56, %c0_57, %c0_58] : memref<4x128x256xf32, #tpu.memory_space<vmem>>, vector<1x128x256xf32>
    %84 = vector.shape_cast %83 : vector<1x128x256xf32> to vector<128x256xf32>
    %cst_59 = arith.constant dense<0.000000e+00> : vector<16x256xf32>
    %85 = tpu.matmul %82, %84, %cst_59 {dimension_numbers = #tpu.dot_dimension_numbers<[1], [0], [0], [1], [0, 0, 1, 1], [], []>} : vector<16x128xf32>, vector<128x256xf32>, vector<16x256xf32> -> vector<16x256xf32>
    %c1_60 = arith.constant 1 : index
    %c0_61 = arith.constant 0 : index
    %c0_62 = arith.constant 0 : index
    %86 = vector.load %arg9[%c1_60, %c0_61, %c0_62] : memref<4x16x32xf32, #tpu.memory_space<vmem>>, vector<1x16x32xf32>
    %87 = vector.shape_cast %86 : vector<1x16x32xf32> to vector<16x32xf32>
    %cst_63 = arith.constant dense<0.000000e+00> : vector<16x128xf32>
    %88 = tpu.matmul %87, %79, %cst_63 {dimension_numbers = #tpu.dot_dimension_numbers<[1], [0], [0], [1], [0, 0, 1, 1], [], []>} : vector<16x32xf32>, vector<32x128xf32>, vector<16x128xf32> -> vector<16x128xf32>
    %c1_64 = arith.constant 1 : index
    %c0_65 = arith.constant 0 : index
    %c0_66 = arith.constant 0 : index
    %89 = vector.load %arg10[%c1_64, %c0_65, %c0_66] : memref<4x128x256xf32, #tpu.memory_space<vmem>>, vector<1x128x256xf32>
    %90 = vector.shape_cast %89 : vector<1x128x256xf32> to vector<128x256xf32>
    %cst_67 = arith.constant dense<0.000000e+00> : vector<16x256xf32>
    %91 = tpu.matmul %88, %90, %cst_67 {dimension_numbers = #tpu.dot_dimension_numbers<[1], [0], [0], [1], [0, 0, 1, 1], [], []>} : vector<16x128xf32>, vector<128x256xf32>, vector<16x256xf32> -> vector<16x256xf32>
    %92 = arith.addf %85, %91 : vector<16x256xf32>
    %c2_68 = arith.constant 2 : index
    %c0_69 = arith.constant 0 : index
    %c0_70 = arith.constant 0 : index
    %93 = vector.load %arg9[%c2_68, %c0_69, %c0_70] : memref<4x16x32xf32, #tpu.memory_space<vmem>>, vector<1x16x32xf32>
    %94 = vector.shape_cast %93 : vector<1x16x32xf32> to vector<16x32xf32>
    %cst_71 = arith.constant dense<0.000000e+00> : vector<16x128xf32>
    %95 = tpu.matmul %94, %79, %cst_71 {dimension_numbers = #tpu.dot_dimension_numbers<[1], [0], [0], [1], [0, 0, 1, 1], [], []>} : vector<16x32xf32>, vector<32x128xf32>, vector<16x128xf32> -> vector<16x128xf32>
    %c2_72 = arith.constant 2 : index
    %c0_73 = arith.constant 0 : index
    %c0_74 = arith.constant 0 : index
    %96 = vector.load %arg10[%c2_72, %c0_73, %c0_74] : memref<4x128x256xf32, #tpu.memory_space<vmem>>, vector<1x128x256xf32>
    %97 = vector.shape_cast %96 : vector<1x128x256xf32> to vector<128x256xf32>
    %cst_75 = arith.constant dense<0.000000e+00> : vector<16x256xf32>
    %98 = tpu.matmul %95, %97, %cst_75 {dimension_numbers = #tpu.dot_dimension_numbers<[1], [0], [0], [1], [0, 0, 1, 1], [], []>} : vector<16x128xf32>, vector<128x256xf32>, vector<16x256xf32> -> vector<16x256xf32>
    %99 = arith.addf %92, %98 : vector<16x256xf32>
    %c3_76 = arith.constant 3 : index
    %c0_77 = arith.constant 0 : index
    %c0_78 = arith.constant 0 : index
    %100 = vector.load %arg9[%c3_76, %c0_77, %c0_78] : memref<4x16x32xf32, #tpu.memory_space<vmem>>, vector<1x16x32xf32>
    %101 = vector.shape_cast %100 : vector<1x16x32xf32> to vector<16x32xf32>
    %cst_79 = arith.constant dense<0.000000e+00> : vector<16x128xf32>
    %102 = tpu.matmul %101, %79, %cst_79 {dimension_numbers = #tpu.dot_dimension_numbers<[1], [0], [0], [1], [0, 0, 1, 1], [], []>} : vector<16x32xf32>, vector<32x128xf32>, vector<16x128xf32> -> vector<16x128xf32>
    %c3_80 = arith.constant 3 : index
    %c0_81 = arith.constant 0 : index
    %c0_82 = arith.constant 0 : index
    %103 = vector.load %arg10[%c3_80, %c0_81, %c0_82] : memref<4x128x256xf32, #tpu.memory_space<vmem>>, vector<1x128x256xf32>
    %104 = vector.shape_cast %103 : vector<1x128x256xf32> to vector<128x256xf32>
    %cst_83 = arith.constant dense<0.000000e+00> : vector<16x256xf32>
    %105 = tpu.matmul %102, %104, %cst_83 {dimension_numbers = #tpu.dot_dimension_numbers<[1], [0], [0], [1], [0, 0, 1, 1], [], []>} : vector<16x128xf32>, vector<128x256xf32>, vector<16x256xf32> -> vector<16x256xf32>
    %106 = arith.addf %99, %105 : vector<16x256xf32>
    %c0_84 = arith.constant 0 : index
    %c0_85 = arith.constant 0 : index
    %107 = vector.load %arg11[%c0_84, %c0_85] : memref<1x256xf32, #tpu.memory_space<vmem>>, vector<1x256xf32>
    %c0_86 = arith.constant 0 : index
    %c0_87 = arith.constant 0 : index
    %108 = vector.load %arg12[%c0_86, %c0_87] : memref<1x256xf32, #tpu.memory_space<vmem>>, vector<1x256xf32>
    %cst_88 = arith.constant dense<0.000000e+00> : vector<256xf32>
    %109 = vector.multi_reduction <add>, %106, %cst_88 [0] : vector<16x256xf32> to vector<256xf32>
    %110 = vector.shape_cast %109 : vector<256xf32> to vector<1x256xf32>
    %cst_89 = arith.constant 1.600000e+01 : f32
    %111 = vector.broadcast %cst_89 : f32 to vector<1x256xf32>
    %112 = arith.divf %110, %111 : vector<1x256xf32>
    %113 = vector.broadcast %112 : vector<1x256xf32> to vector<16x256xf32>
    %114 = arith.subf %106, %113 : vector<16x256xf32>
    %115 = arith.mulf %114, %114 : vector<16x256xf32>
    %cst_90 = arith.constant dense<0.000000e+00> : vector<256xf32>
    %116 = vector.multi_reduction <add>, %115, %cst_90 [0] : vector<16x256xf32> to vector<256xf32>
    %117 = vector.shape_cast %116 : vector<256xf32> to vector<1x256xf32>
    %cst_91 = arith.constant 1.600000e+01 : f32
    %118 = vector.broadcast %cst_91 : f32 to vector<1x256xf32>
    %119 = arith.divf %117, %118 : vector<1x256xf32>
    %cst_92 = arith.constant 9.99999974E-6 : f32
    %120 = vector.broadcast %cst_92 : f32 to vector<1x256xf32>
    %121 = arith.addf %119, %120 : vector<1x256xf32>
    %122 = math.rsqrt %121 : vector<1x256xf32>
    %123 = arith.mulf %107, %122 : vector<1x256xf32>
    %124 = arith.mulf %112, %123 : vector<1x256xf32>
    %125 = arith.subf %108, %124 : vector<1x256xf32>
    %126 = vector.broadcast %123 : vector<1x256xf32> to vector<16x256xf32>
    %127 = arith.mulf %106, %126 : vector<16x256xf32>
    %128 = vector.broadcast %125 : vector<1x256xf32> to vector<16x256xf32>
    %129 = arith.addf %127, %128 : vector<16x256xf32>
    %cst_93 = arith.constant 0.000000e+00 : f32
    %130 = vector.broadcast %cst_93 : f32 to vector<16x256xf32>
    %131 = arith.maximumf %129, %130 : vector<16x256xf32>
    %c0_94 = arith.constant 0 : index
    %c0_95 = arith.constant 0 : index
    %c0_96 = arith.constant 0 : index
    %132 = vector.load %arg13[%c0_94, %c0_95, %c0_96] : memref<8x2x16xf32, #tpu.memory_space<vmem>>, vector<1x2x16xf32>
    %133 = vector.shape_cast %132 : vector<1x2x16xf32> to vector<2x16xf32>
    %cst_97 = arith.constant dense<0.000000e+00> : vector<2x256xf32>
    %134 = tpu.matmul %133, %131, %cst_97 {dimension_numbers = #tpu.dot_dimension_numbers<[1], [0], [0], [1], [0, 0, 1, 1], [], []>} : vector<2x16xf32>, vector<16x256xf32>, vector<2x256xf32> -> vector<2x256xf32>
    %c0_98 = arith.constant 0 : index
    %c0_99 = arith.constant 0 : index
    %c0_100 = arith.constant 0 : index
    %135 = vector.load %arg14[%c0_98, %c0_99, %c0_100] : memref<8x256x128xf32, #tpu.memory_space<vmem>>, vector<1x256x128xf32>
    %136 = vector.shape_cast %135 : vector<1x256x128xf32> to vector<256x128xf32>
    %cst_101 = arith.constant dense<0.000000e+00> : vector<2x128xf32>
    %137 = tpu.matmul %134, %136, %cst_101 {dimension_numbers = #tpu.dot_dimension_numbers<[1], [0], [0], [1], [0, 0, 1, 1], [], []>} : vector<2x256xf32>, vector<256x128xf32>, vector<2x128xf32> -> vector<2x128xf32>
    %c1_102 = arith.constant 1 : index
    %c0_103 = arith.constant 0 : index
    %c0_104 = arith.constant 0 : index
    %138 = vector.load %arg13[%c1_102, %c0_103, %c0_104] : memref<8x2x16xf32, #tpu.memory_space<vmem>>, vector<1x2x16xf32>
    %139 = vector.shape_cast %138 : vector<1x2x16xf32> to vector<2x16xf32>
    %cst_105 = arith.constant dense<0.000000e+00> : vector<2x256xf32>
    %140 = tpu.matmul %139, %131, %cst_105 {dimension_numbers = #tpu.dot_dimension_numbers<[1], [0], [0], [1], [0, 0, 1, 1], [], []>} : vector<2x16xf32>, vector<16x256xf32>, vector<2x256xf32> -> vector<2x256xf32>
    %c1_106 = arith.constant 1 : index
    %c0_107 = arith.constant 0 : index
    %c0_108 = arith.constant 0 : index
    %141 = vector.load %arg14[%c1_106, %c0_107, %c0_108] : memref<8x256x128xf32, #tpu.memory_space<vmem>>, vector<1x256x128xf32>
    %142 = vector.shape_cast %141 : vector<1x256x128xf32> to vector<256x128xf32>
    %cst_109 = arith.constant dense<0.000000e+00> : vector<2x128xf32>
    %143 = tpu.matmul %140, %142, %cst_109 {dimension_numbers = #tpu.dot_dimension_numbers<[1], [0], [0], [1], [0, 0, 1, 1], [], []>} : vector<2x256xf32>, vector<256x128xf32>, vector<2x128xf32> -> vector<2x128xf32>
    %144 = arith.addf %137, %143 : vector<2x128xf32>
    %c2_110 = arith.constant 2 : index
    %c0_111 = arith.constant 0 : index
    %c0_112 = arith.constant 0 : index
    %145 = vector.load %arg13[%c2_110, %c0_111, %c0_112] : memref<8x2x16xf32, #tpu.memory_space<vmem>>, vector<1x2x16xf32>
    %146 = vector.shape_cast %145 : vector<1x2x16xf32> to vector<2x16xf32>
    %cst_113 = arith.constant dense<0.000000e+00> : vector<2x256xf32>
    %147 = tpu.matmul %146, %131, %cst_113 {dimension_numbers = #tpu.dot_dimension_numbers<[1], [0], [0], [1], [0, 0, 1, 1], [], []>} : vector<2x16xf32>, vector<16x256xf32>, vector<2x256xf32> -> vector<2x256xf32>
    %c2_114 = arith.constant 2 : index
    %c0_115 = arith.constant 0 : index
    %c0_116 = arith.constant 0 : index
    %148 = vector.load %arg14[%c2_114, %c0_115, %c0_116] : memref<8x256x128xf32, #tpu.memory_space<vmem>>, vector<1x256x128xf32>
    %149 = vector.shape_cast %148 : vector<1x256x128xf32> to vector<256x128xf32>
    %cst_117 = arith.constant dense<0.000000e+00> : vector<2x128xf32>
    %150 = tpu.matmul %147, %149, %cst_117 {dimension_numbers = #tpu.dot_dimension_numbers<[1], [0], [0], [1], [0, 0, 1, 1], [], []>} : vector<2x256xf32>, vector<256x128xf32>, vector<2x128xf32> -> vector<2x128xf32>
    %151 = arith.addf %144, %150 : vector<2x128xf32>
    %c3_118 = arith.constant 3 : index
    %c0_119 = arith.constant 0 : index
    %c0_120 = arith.constant 0 : index
    %152 = vector.load %arg13[%c3_118, %c0_119, %c0_120] : memref<8x2x16xf32, #tpu.memory_space<vmem>>, vector<1x2x16xf32>
    %153 = vector.shape_cast %152 : vector<1x2x16xf32> to vector<2x16xf32>
    %cst_121 = arith.constant dense<0.000000e+00> : vector<2x256xf32>
    %154 = tpu.matmul %153, %131, %cst_121 {dimension_numbers = #tpu.dot_dimension_numbers<[1], [0], [0], [1], [0, 0, 1, 1], [], []>} : vector<2x16xf32>, vector<16x256xf32>, vector<2x256xf32> -> vector<2x256xf32>
    %c3_122 = arith.constant 3 : index
    %c0_123 = arith.constant 0 : index
    %c0_124 = arith.constant 0 : index
    %155 = vector.load %arg14[%c3_122, %c0_123, %c0_124] : memref<8x256x128xf32, #tpu.memory_space<vmem>>, vector<1x256x128xf32>
    %156 = vector.shape_cast %155 : vector<1x256x128xf32> to vector<256x128xf32>
    %cst_125 = arith.constant dense<0.000000e+00> : vector<2x128xf32>
    %157 = tpu.matmul %154, %156, %cst_125 {dimension_numbers = #tpu.dot_dimension_numbers<[1], [0], [0], [1], [0, 0, 1, 1], [], []>} : vector<2x256xf32>, vector<256x128xf32>, vector<2x128xf32> -> vector<2x128xf32>
    %158 = arith.addf %151, %157 : vector<2x128xf32>
    %c4 = arith.constant 4 : index
    %c0_126 = arith.constant 0 : index
    %c0_127 = arith.constant 0 : index
    %159 = vector.load %arg13[%c4, %c0_126, %c0_127] : memref<8x2x16xf32, #tpu.memory_space<vmem>>, vector<1x2x16xf32>
    %160 = vector.shape_cast %159 : vector<1x2x16xf32> to vector<2x16xf32>
    %cst_128 = arith.constant dense<0.000000e+00> : vector<2x256xf32>
    %161 = tpu.matmul %160, %131, %cst_128 {dimension_numbers = #tpu.dot_dimension_numbers<[1], [0], [0], [1], [0, 0, 1, 1], [], []>} : vector<2x16xf32>, vector<16x256xf32>, vector<2x256xf32> -> vector<2x256xf32>
    %c4_129 = arith.constant 4 : index
    %c0_130 = arith.constant 0 : index
    %c0_131 = arith.constant 0 : index
    %162 = vector.load %arg14[%c4_129, %c0_130, %c0_131] : memref<8x256x128xf32, #tpu.memory_space<vmem>>, vector<1x256x128xf32>
    %163 = vector.shape_cast %162 : vector<1x256x128xf32> to vector<256x128xf32>
    %cst_132 = arith.constant dense<0.000000e+00> : vector<2x128xf32>
    %164 = tpu.matmul %161, %163, %cst_132 {dimension_numbers = #tpu.dot_dimension_numbers<[1], [0], [0], [1], [0, 0, 1, 1], [], []>} : vector<2x256xf32>, vector<256x128xf32>, vector<2x128xf32> -> vector<2x128xf32>
    %165 = arith.addf %158, %164 : vector<2x128xf32>
    %c5 = arith.constant 5 : index
    %c0_133 = arith.constant 0 : index
    %c0_134 = arith.constant 0 : index
    %166 = vector.load %arg13[%c5, %c0_133, %c0_134] : memref<8x2x16xf32, #tpu.memory_space<vmem>>, vector<1x2x16xf32>
    %167 = vector.shape_cast %166 : vector<1x2x16xf32> to vector<2x16xf32>
    %cst_135 = arith.constant dense<0.000000e+00> : vector<2x256xf32>
    %168 = tpu.matmul %167, %131, %cst_135 {dimension_numbers = #tpu.dot_dimension_numbers<[1], [0], [0], [1], [0, 0, 1, 1], [], []>} : vector<2x16xf32>, vector<16x256xf32>, vector<2x256xf32> -> vector<2x256xf32>
    %c5_136 = arith.constant 5 : index
    %c0_137 = arith.constant 0 : index
    %c0_138 = arith.constant 0 : index
    %169 = vector.load %arg14[%c5_136, %c0_137, %c0_138] : memref<8x256x128xf32, #tpu.memory_space<vmem>>, vector<1x256x128xf32>
    %170 = vector.shape_cast %169 : vector<1x256x128xf32> to vector<256x128xf32>
    %cst_139 = arith.constant dense<0.000000e+00> : vector<2x128xf32>
    %171 = tpu.matmul %168, %170, %cst_139 {dimension_numbers = #tpu.dot_dimension_numbers<[1], [0], [0], [1], [0, 0, 1, 1], [], []>} : vector<2x256xf32>, vector<256x128xf32>, vector<2x128xf32> -> vector<2x128xf32>
    %172 = arith.addf %165, %171 : vector<2x128xf32>
    %c6 = arith.constant 6 : index
    %c0_140 = arith.constant 0 : index
    %c0_141 = arith.constant 0 : index
    %173 = vector.load %arg13[%c6, %c0_140, %c0_141] : memref<8x2x16xf32, #tpu.memory_space<vmem>>, vector<1x2x16xf32>
    %174 = vector.shape_cast %173 : vector<1x2x16xf32> to vector<2x16xf32>
    %cst_142 = arith.constant dense<0.000000e+00> : vector<2x256xf32>
    %175 = tpu.matmul %174, %131, %cst_142 {dimension_numbers = #tpu.dot_dimension_numbers<[1], [0], [0], [1], [0, 0, 1, 1], [], []>} : vector<2x16xf32>, vector<16x256xf32>, vector<2x256xf32> -> vector<2x256xf32>
    %c6_143 = arith.constant 6 : index
    %c0_144 = arith.constant 0 : index
    %c0_145 = arith.constant 0 : index
    %176 = vector.load %arg14[%c6_143, %c0_144, %c0_145] : memref<8x256x128xf32, #tpu.memory_space<vmem>>, vector<1x256x128xf32>
    %177 = vector.shape_cast %176 : vector<1x256x128xf32> to vector<256x128xf32>
    %cst_146 = arith.constant dense<0.000000e+00> : vector<2x128xf32>
    %178 = tpu.matmul %175, %177, %cst_146 {dimension_numbers = #tpu.dot_dimension_numbers<[1], [0], [0], [1], [0, 0, 1, 1], [], []>} : vector<2x256xf32>, vector<256x128xf32>, vector<2x128xf32> -> vector<2x128xf32>
    %179 = arith.addf %172, %178 : vector<2x128xf32>
    %c7 = arith.constant 7 : index
    %c0_147 = arith.constant 0 : index
    %c0_148 = arith.constant 0 : index
    %180 = vector.load %arg13[%c7, %c0_147, %c0_148] : memref<8x2x16xf32, #tpu.memory_space<vmem>>, vector<1x2x16xf32>
    %181 = vector.shape_cast %180 : vector<1x2x16xf32> to vector<2x16xf32>
    %cst_149 = arith.constant dense<0.000000e+00> : vector<2x256xf32>
    %182 = tpu.matmul %181, %131, %cst_149 {dimension_numbers = #tpu.dot_dimension_numbers<[1], [0], [0], [1], [0, 0, 1, 1], [], []>} : vector<2x16xf32>, vector<16x256xf32>, vector<2x256xf32> -> vector<2x256xf32>
    %c7_150 = arith.constant 7 : index
    %c0_151 = arith.constant 0 : index
    %c0_152 = arith.constant 0 : index
    %183 = vector.load %arg14[%c7_150, %c0_151, %c0_152] : memref<8x256x128xf32, #tpu.memory_space<vmem>>, vector<1x256x128xf32>
    %184 = vector.shape_cast %183 : vector<1x256x128xf32> to vector<256x128xf32>
    %cst_153 = arith.constant dense<0.000000e+00> : vector<2x128xf32>
    %185 = tpu.matmul %182, %184, %cst_153 {dimension_numbers = #tpu.dot_dimension_numbers<[1], [0], [0], [1], [0, 0, 1, 1], [], []>} : vector<2x256xf32>, vector<256x128xf32>, vector<2x128xf32> -> vector<2x128xf32>
    %186 = arith.addf %179, %185 : vector<2x128xf32>
    %c0_154 = arith.constant 0 : index
    %c0_155 = arith.constant 0 : index
    %187 = vector.load %arg15[%c0_154, %c0_155] : memref<1x128xf32, #tpu.memory_space<vmem>>, vector<1x128xf32>
    %188 = vector.broadcast %187 : vector<1x128xf32> to vector<2x128xf32>
    %189 = arith.addf %186, %188 : vector<2x128xf32>
    %c0_156 = arith.constant 0 : index
    %c0_157 = arith.constant 0 : index
    %190 = vector.load %arg16[%c0_156, %c0_157] : memref<1x128xf32, #tpu.memory_space<vmem>>, vector<1x128xf32>
    %c0_158 = arith.constant 0 : index
    %c0_159 = arith.constant 0 : index
    %191 = vector.load %arg17[%c0_158, %c0_159] : memref<1x128xf32, #tpu.memory_space<vmem>>, vector<1x128xf32>
    %cst_160 = arith.constant dense<0.000000e+00> : vector<128xf32>
    %192 = vector.multi_reduction <add>, %189, %cst_160 [0] : vector<2x128xf32> to vector<128xf32>
    %193 = vector.shape_cast %192 : vector<128xf32> to vector<1x128xf32>
    %cst_161 = arith.constant 2.000000e+00 : f32
    %194 = vector.broadcast %cst_161 : f32 to vector<1x128xf32>
    %195 = arith.divf %193, %194 : vector<1x128xf32>
    %196 = vector.broadcast %195 : vector<1x128xf32> to vector<2x128xf32>
    %197 = arith.subf %189, %196 : vector<2x128xf32>
    %198 = arith.mulf %197, %197 : vector<2x128xf32>
    %cst_162 = arith.constant dense<0.000000e+00> : vector<128xf32>
    %199 = vector.multi_reduction <add>, %198, %cst_162 [0] : vector<2x128xf32> to vector<128xf32>
    %200 = vector.shape_cast %199 : vector<128xf32> to vector<1x128xf32>
    %cst_163 = arith.constant 2.000000e+00 : f32
    %201 = vector.broadcast %cst_163 : f32 to vector<1x128xf32>
    %202 = arith.divf %200, %201 : vector<1x128xf32>
    %cst_164 = arith.constant 9.99999974E-6 : f32
    %203 = vector.broadcast %cst_164 : f32 to vector<1x128xf32>
    %204 = arith.addf %202, %203 : vector<1x128xf32>
    %205 = math.rsqrt %204 : vector<1x128xf32>
    %206 = arith.mulf %190, %205 : vector<1x128xf32>
    %207 = arith.mulf %195, %206 : vector<1x128xf32>
    %208 = arith.subf %191, %207 : vector<1x128xf32>
    %209 = vector.broadcast %206 : vector<1x128xf32> to vector<2x128xf32>
    %210 = arith.mulf %189, %209 : vector<2x128xf32>
    %211 = vector.broadcast %208 : vector<1x128xf32> to vector<2x128xf32>
    %212 = arith.addf %210, %211 : vector<2x128xf32>
    %cst_165 = arith.constant 0.000000e+00 : f32
    %213 = vector.broadcast %cst_165 : f32 to vector<2x128xf32>
    %214 = arith.cmpf oge, %212, %213 : vector<2x128xf32>
    %cst_166 = arith.constant 0.00999999977 : f32
    %215 = vector.broadcast %cst_166 : f32 to vector<2x128xf32>
    %216 = arith.mulf %215, %212 : vector<2x128xf32>
    %217 = arith.select %214, %212, %216 : vector<2x128xi1>, vector<2x128xf32>
    %c0_167 = arith.constant 0 : index
    %c0_168 = arith.constant 0 : index
    %218 = vector.load %arg18[%c0_167, %c0_168] : memref<128x64xf32, #tpu.memory_space<vmem>>, vector<128x64xf32>
    %cst_169 = arith.constant dense<0.000000e+00> : vector<2x64xf32>
    %219 = tpu.matmul %217, %218, %cst_169 {dimension_numbers = #tpu.dot_dimension_numbers<[1], [0], [0], [1], [0, 0, 1, 1], [], []>} : vector<2x128xf32>, vector<128x64xf32>, vector<2x64xf32> -> vector<2x64xf32>
    %c0_170 = arith.constant 0 : index
    %c0_171 = arith.constant 0 : index
    %220 = vector.load %arg19[%c0_170, %c0_171] : memref<1x64xf32, #tpu.memory_space<vmem>>, vector<1x64xf32>
    %221 = vector.broadcast %220 : vector<1x64xf32> to vector<2x64xf32>
    %222 = arith.addf %219, %221 : vector<2x64xf32>
    %c0_172 = arith.constant 0 : index
    %c0_173 = arith.constant 0 : index
    %223 = vector.load %arg20[%c0_172, %c0_173] : memref<1x64xf32, #tpu.memory_space<vmem>>, vector<1x64xf32>
    %c0_174 = arith.constant 0 : index
    %c0_175 = arith.constant 0 : index
    %224 = vector.load %arg21[%c0_174, %c0_175] : memref<1x64xf32, #tpu.memory_space<vmem>>, vector<1x64xf32>
    %cst_176 = arith.constant dense<0.000000e+00> : vector<64xf32>
    %225 = vector.multi_reduction <add>, %222, %cst_176 [0] : vector<2x64xf32> to vector<64xf32>
    %226 = vector.shape_cast %225 : vector<64xf32> to vector<1x64xf32>
    %cst_177 = arith.constant 2.000000e+00 : f32
    %227 = vector.broadcast %cst_177 : f32 to vector<1x64xf32>
    %228 = arith.divf %226, %227 : vector<1x64xf32>
    %229 = vector.broadcast %228 : vector<1x64xf32> to vector<2x64xf32>
    %230 = arith.subf %222, %229 : vector<2x64xf32>
    %231 = arith.mulf %230, %230 : vector<2x64xf32>
    %cst_178 = arith.constant dense<0.000000e+00> : vector<64xf32>
    %232 = vector.multi_reduction <add>, %231, %cst_178 [0] : vector<2x64xf32> to vector<64xf32>
    %233 = vector.shape_cast %232 : vector<64xf32> to vector<1x64xf32>
    %cst_179 = arith.constant 2.000000e+00 : f32
    %234 = vector.broadcast %cst_179 : f32 to vector<1x64xf32>
    %235 = arith.divf %233, %234 : vector<1x64xf32>
    %cst_180 = arith.constant 9.99999974E-6 : f32
    %236 = vector.broadcast %cst_180 : f32 to vector<1x64xf32>
    %237 = arith.addf %235, %236 : vector<1x64xf32>
    %238 = math.rsqrt %237 : vector<1x64xf32>
    %239 = arith.mulf %223, %238 : vector<1x64xf32>
    %240 = arith.mulf %228, %239 : vector<1x64xf32>
    %241 = arith.subf %224, %240 : vector<1x64xf32>
    %242 = vector.broadcast %239 : vector<1x64xf32> to vector<2x64xf32>
    %243 = arith.mulf %222, %242 : vector<2x64xf32>
    %244 = vector.broadcast %241 : vector<1x64xf32> to vector<2x64xf32>
    %245 = arith.addf %243, %244 : vector<2x64xf32>
    %cst_181 = arith.constant 0.000000e+00 : f32
    %246 = vector.broadcast %cst_181 : f32 to vector<2x64xf32>
    %247 = arith.cmpf oge, %245, %246 : vector<2x64xf32>
    %cst_182 = arith.constant 0.00999999977 : f32
    %248 = vector.broadcast %cst_182 : f32 to vector<2x64xf32>
    %249 = arith.mulf %248, %245 : vector<2x64xf32>
    %250 = arith.select %247, %245, %249 : vector<2x64xi1>, vector<2x64xf32>
    %c0_183 = arith.constant 0 : index
    %c0_184 = arith.constant 0 : index
    %251 = vector.load %arg22[%c0_183, %c0_184] : memref<64x10xf32, #tpu.memory_space<vmem>>, vector<64x10xf32>
    %cst_185 = arith.constant dense<0.000000e+00> : vector<2x10xf32>
    %252 = tpu.matmul %250, %251, %cst_185 {dimension_numbers = #tpu.dot_dimension_numbers<[1], [0], [0], [1], [0, 0, 1, 1], [], []>} : vector<2x64xf32>, vector<64x10xf32>, vector<2x10xf32> -> vector<2x10xf32>
    %c0_186 = arith.constant 0 : index
    %c0_187 = arith.constant 0 : index
    %253 = vector.load %arg23[%c0_186, %c0_187] : memref<1x10xf32, #tpu.memory_space<vmem>>, vector<1x10xf32>
    %254 = vector.broadcast %253 : vector<1x10xf32> to vector<2x10xf32>
    %255 = arith.addf %252, %254 : vector<2x10xf32>
    %c0_188 = arith.constant 0 : index
    %c0_189 = arith.constant 0 : index
    %256 = vector.load %arg24[%c0_188, %c0_189] : memref<2x10xf32, #tpu.memory_space<vmem>>, vector<2x10xf32>
    tpu.vector_store %arg24[%c0_188, %c0_189], %255 {strides = array<i32>} : memref<2x10xf32, #tpu.memory_space<vmem>>, vector<2x10xf32>,
    return
  }
  func.func @transform_0(%arg0: i32) -> (i32, i32) {
    %c0_i32 = arith.constant 0 : i32
    %c0_i32_0 = arith.constant 0 : i32
    %c0_i32_1 = arith.constant 0 : i32
    return %c0_i32, %c0_i32_0 : i32, i32
  }
  func.func @transform_1(%arg0: i32) -> (i32, i32) {
    %c0_i32 = arith.constant 0 : i32
    %c0_i32_0 = arith.constant 0 : i32
    %c0_i32_1 = arith.constant 0 : i32
    return %c0_i32, %c0_i32_0 : i32, i32
  }
  func.func @transform_2(%arg0: i32) -> (i32, i32) {
    %c0_i32 = arith.constant 0 : i32
    %c0_i32_0 = arith.constant 0 : i32
    %c0_i32_1 = arith.constant 0 : i32
    return %c0_i32, %c0_i32_0 : i32, i32
  }
  func.func @transform_3(%arg0: i32) -> (i32, i32) {
    %c0_i32 = arith.constant 0 : i32
    %c0_i32_0 = arith.constant 0 : i32
    %c0_i32_1 = arith.constant 0 : i32
    return %c0_i32, %c0_i32_0 : i32, i32
  }
  func.func @transform_4(%arg0: i32) -> (i32, i32, i32) {
    %c0_i32 = arith.constant 0 : i32
    %c0_i32_0 = arith.constant 0 : i32
    %c0_i32_1 = arith.constant 0 : i32
    %c0_i32_2 = arith.constant 0 : i32
    return %c0_i32, %c0_i32_0, %c0_i32_1 : i32, i32, i32
  }
  func.func @transform_5(%arg0: i32) -> (i32, i32, i32) {
    %c0_i32 = arith.constant 0 : i32
    %c0_i32_0 = arith.constant 0 : i32
    %c0_i32_1 = arith.constant 0 : i32
    %c0_i32_2 = arith.constant 0 : i32
    return %c0_i32, %c0_i32_0, %c0_i32_1 : i32, i32, i32
  }
  func.func @transform_6(%arg0: i32) -> (i32, i32) {
    %c0_i32 = arith.constant 0 : i32
    %c0_i32_0 = arith.constant 0 : i32
    %c0_i32_1 = arith.constant 0 : i32
    return %c0_i32, %c0_i32_0 : i32, i32
  }
  func.func @transform_7(%arg0: i32) -> (i32, i32) {
    %c0_i32 = arith.constant 0 : i32
    %c0_i32_0 = arith.constant 0 : i32
    %c0_i32_1 = arith.constant 0 : i32
    return %c0_i32, %c0_i32_0 : i32, i32
  }
  func.func @transform_8(%arg0: i32) -> (i32, i32, i32) {
    %c0_i32 = arith.constant 0 : i32
    %c0_i32_0 = arith.constant 0 : i32
    %c0_i32_1 = arith.constant 0 : i32
    %c0_i32_2 = arith.constant 0 : i32
    return %c0_i32, %c0_i32_0, %c0_i32_1 : i32, i32, i32
  }
  func.func @transform_9(%arg0: i32) -> (i32, i32, i32) {
    %c0_i32 = arith.constant 0 : i32
    %c0_i32_0 = arith.constant 0 : i32
    %c0_i32_1 = arith.constant 0 : i32
    %c0_i32_2 = arith.constant 0 : i32
    return %c0_i32, %c0_i32_0, %c0_i32_1 : i32, i32, i32
  }
  func.func @transform_10(%arg0: i32) -> (i32, i32) {
    %c0_i32 = arith.constant 0 : i32
    %c0_i32_0 = arith.constant 0 : i32
    %c0_i32_1 = arith.constant 0 : i32
    return %c0_i32, %c0_i32_0 : i32, i32
  }
  func.func @transform_11(%arg0: i32) -> (i32, i32) {
    %c0_i32 = arith.constant 0 : i32
    %c0_i32_0 = arith.constant 0 : i32
    %c0_i32_1 = arith.constant 0 : i32
    return %c0_i32, %c0_i32_0 : i32, i32
  }
  func.func @transform_12(%arg0: i32) -> (i32, i32, i32) {
    %c0_i32 = arith.constant 0 : i32
    %c0_i32_0 = arith.constant 0 : i32
    %c0_i32_1 = arith.constant 0 : i32
    %c0_i32_2 = arith.constant 0 : i32
    return %c0_i32, %c0_i32_0, %c0_i32_1 : i32, i32, i32
  }
  func.func @transform_13(%arg0: i32) -> (i32, i32, i32) {
    %c0_i32 = arith.constant 0 : i32
    %c0_i32_0 = arith.constant 0 : i32
    %c0_i32_1 = arith.constant 0 : i32
    %c0_i32_2 = arith.constant 0 : i32
    return %c0_i32, %c0_i32_0, %c0_i32_1 : i32, i32, i32
  }
  func.func @transform_14(%arg0: i32) -> (i32, i32) {
    %c0_i32 = arith.constant 0 : i32
    %c0_i32_0 = arith.constant 0 : i32
    %c0_i32_1 = arith.constant 0 : i32
    return %c0_i32, %c0_i32_0 : i32, i32
  }
  func.func @transform_15(%arg0: i32) -> (i32, i32) {
    %c0_i32 = arith.constant 0 : i32
    %c0_i32_0 = arith.constant 0 : i32
    %c0_i32_1 = arith.constant 0 : i32
    return %c0_i32, %c0_i32_0 : i32, i32
  }
  func.func @transform_16(%arg0: i32) -> (i32, i32) {
    %c0_i32 = arith.constant 0 : i32
    %c0_i32_0 = arith.constant 0 : i32
    %c0_i32_1 = arith.constant 0 : i32
    return %c0_i32, %c0_i32_0 : i32, i32
  }
  func.func @transform_17(%arg0: i32) -> (i32, i32) {
    %c0_i32 = arith.constant 0 : i32
    %c0_i32_0 = arith.constant 0 : i32
    %c0_i32_1 = arith.constant 0 : i32
    return %c0_i32, %c0_i32_0 : i32, i32
  }
  func.func @transform_18(%arg0: i32) -> (i32, i32) {
    %c0_i32 = arith.constant 0 : i32
    %c0_i32_0 = arith.constant 0 : i32
    %c0_i32_1 = arith.constant 0 : i32
    return %c0_i32, %c0_i32_0 : i32, i32
  }
  func.func @transform_19(%arg0: i32) -> (i32, i32) {
    %c0_i32 = arith.constant 0 : i32
    %c0_i32_0 = arith.constant 0 : i32
    %c0_i32_1 = arith.constant 0 : i32
    return %c0_i32, %c0_i32_0 : i32, i32
  }
  func.func @transform_20(%arg0: i32) -> (i32, i32) {
    %c0_i32 = arith.constant 0 : i32
    %c0_i32_0 = arith.constant 0 : i32
    %c0_i32_1 = arith.constant 0 : i32
    return %c0_i32, %c0_i32_0 : i32, i32
  }
  func.func @transform_21(%arg0: i32) -> (i32, i32) {
    %c0_i32 = arith.constant 0 : i32
    %c0_i32_0 = arith.constant 0 : i32
    %c0_i32_1 = arith.constant 0 : i32
    return %c0_i32, %c0_i32_0 : i32, i32
  }
  func.func @transform_22(%arg0: i32) -> (i32, i32) {
    %c0_i32 = arith.constant 0 : i32
    %c0_i32_0 = arith.constant 0 : i32
    %c0_i32_1 = arith.constant 0 : i32
    return %c0_i32, %c0_i32_0 : i32, i32
  }
  func.func @transform_23(%arg0: i32) -> (i32, i32) {
    %c0_i32 = arith.constant 0 : i32
    %c0_i32_0 = arith.constant 0 : i32
    %c0_i32_1 = arith.constant 0 : i32
    return %c0_i32, %c0_i32_0 : i32, i32
  }
}

</mosaic_0001>

<llo_original>
// kernel: sound_classifier_forward.1
$region0: #{sound_classifier_forward.1}
  #allocation0 [shape = 'u32[]', space=smem, size = 0x4, offset = 0x4, fixed_abs, tag = 'smem constant byte address 0x4 - core index']
  #allocation1 [shape = 'u32[144,128]{1,0:T(1,128)}', space=vmem, size = 0x12000, scoped, tag = 'internal scratch']
  %s0 = inlined_call_operand.hbm [shape: f32[64,128], index: 0, kind: input, shape index: {}]
  %s1 = inlined_call_operand.vmem [shape: f32[128,128], index: 1, kind: input, shape index: {}]
  %s2 = inlined_call_operand.vmem [shape: f32[1,128], index: 2, kind: input, shape index: {}]
  %s3 = inlined_call_operand.vmem [shape: f32[1,128], index: 3, kind: input, shape index: {}]
  %s4 = inlined_call_operand.vmem [shape: f32[4,32,64], index: 4, kind: input, shape index: {}]
  %s5 = inlined_call_operand.hbm [shape: f32[4,128,128], index: 5, kind: input, shape index: {}]
  %s6 = inlined_call_operand.vmem [shape: f32[1,128], index: 6, kind: input, shape index: {}]
  %s7 = inlined_call_operand.vmem [shape: f32[1,128], index: 7, kind: input, shape index: {}]
  %s8 = inlined_call_operand.vmem [shape: f32[4,16,32], index: 8, kind: input, shape index: {}]
  %s9 = inlined_call_operand.vmem [shape: f32[4,128,256], index: 9, kind: input, shape index: {}]
  %s10 = inlined_call_operand.vmem [shape: f32[1,256], index: 10, kind: input, shape index: {}]
  %s11 = inlined_call_operand.vmem [shape: f32[1,256], index: 11, kind: input, shape index: {}]
  %s12 = inlined_call_operand.vmem [shape: f32[8,2,16], index: 12, kind: input, shape index: {}]
  %s13 = inlined_call_operand.hbm [shape: f32[8,256,128], index: 13, kind: input, shape index: {}]
  %s14 = inlined_call_operand.vmem [shape: f32[1,128], index: 14, kind: input, shape index: {}]
  %s15 = inlined_call_operand.vmem [shape: f32[1,128], index: 15, kind: input, shape index: {}]
  %s16 = inlined_call_operand.vmem [shape: f32[1,128], index: 16, kind: input, shape index: {}]
  %s17 = inlined_call_operand.vmem [shape: f32[128,64], index: 17, kind: input, shape index: {}]
  %s18 = inlined_call_operand.vmem [shape: f32[1,64], index: 18, kind: input, shape index: {}]
  %s19 = inlined_call_operand.vmem [shape: f32[1,64], index: 19, kind: input, shape index: {}]
  %s20 = inlined_call_operand.vmem [shape: f32[1,64], index: 20, kind: input, shape index: {}]
  %s21 = inlined_call_operand.hbm [shape: f32[64,10], index: 21, kind: input, shape index: {}]
  %s22 = inlined_call_operand.vmem [shape: f32[1,10], index: 22, kind: input, shape index: {}]
  %s23 = inlined_call_operand.hbm [shape: f32[2,10], index: 23, kind: output, shape index: {}]
  %s24 = sld [smem:[#allocation0]]
  $region118: #{sound_classifier_forward.1} parent=0
    _
  %s26 = ssub.s32 1, %s24
  %s27 = scalar_select 0, %s26, %s24
  $region1: #{sound_classifier_forward.1} parent=0
    #allocation2 [shape = 'u8[32768]{0}', space=vmem, size = 0x8000, scoped, tag = 'input window, operand 0, single buffered']
    #allocation3 [shape = 's32[1]{0}', space=sflag, size = 0x4, scoped, tag = 'scoped memory for sound_classifier_forward.1']
    #allocation4 [shape = 's32[1]{0}', space=sflag, size = 0x4, scoped, tag = 'scoped memory for sound_classifier_forward.1']
    #allocation5 [shape = 'u8[262144]{0}', space=vmem, size = 0x40000, scoped, tag = 'input window, operand 5, single buffered']
    #allocation6 [shape = 's32[1]{0}', space=sflag, size = 0x4, scoped, tag = 'scoped memory for sound_classifier_forward.1']
    #allocation7 [shape = 'u8[1048576]{0}', space=vmem, size = 0x100000, scoped, tag = 'input window, operand 13, single buffered']
    #allocation8 [shape = 'u8[32768]{0}', space=vmem, size = 0x8000, scoped, tag = 'input window, operand 21, single buffered']
    #allocation9 [shape = 's32[1]{0}', space=sflag, size = 0x4, scoped, tag = 'scoped memory for sound_classifier_forward.1']
    #allocation10 [shape = 'u8[1024]{0}', space=vmem, size = 0x400, scoped, tag = 'output window, operand 0, single buffered']
    %28 = vsyncpa [#allocation3], 0
    %29 = vsyncpa [#allocation6], 0
    %30 = vsyncpa [#allocation9], 0
    %31 = vsyncpa [#allocation4], 0
    // Predicated region
    $region2: #{sound_classifier_forward.1} parent=1 // pred_check
      _
    $region3: #{sound_classifier_forward.1} parent=1 // pred_check_branch
      %33 = sbr.rel (0) target = $region5
    $region4: #{sound_classifier_forward.1} parent=1 // pred_region
      %s35 = ssub.s32 1024, 1024
      %36 = vsyncadd [#allocation3], %s35
      %s37 = sshll.u32 [#allocation2], 4
      %s38 = int_to_ptr.vmem [resolvable:$true] %s37
      %43 = dma.hbm_to_vmem [thread:$0]  %s0, 1024, %s38, [#allocation3], 128, 128, 8
    $region5: #{sound_classifier_forward.1} parent=1 // pred_fallthru
      _
    // Predicated region
    $region6: #{sound_classifier_forward.1} parent=1 // pred_check
      _
    $region7: #{sound_classifier_forward.1} parent=1 // pred_check_branch
      %45 = sbr.rel (0) target = $region9
    $region8: #{sound_classifier_forward.1} parent=1 // pred_region
      _
    $region9: #{sound_classifier_forward.1} parent=1 // pred_fallthru
      _
    // Predicated region
    $region10: #{sound_classifier_forward.1} parent=1 // pred_check
      _
    $region11: #{sound_classifier_forward.1} parent=1 // pred_check_branch
      %47 = sbr.rel (0) target = $region13
    $region12: #{sound_classifier_forward.1} parent=1 // pred_region
      _
    $region13: #{sound_classifier_forward.1} parent=1 // pred_fallthru
      _
    // Predicated region
    $region14: #{sound_classifier_forward.1} parent=1 // pred_check
      _
    $region15: #{sound_classifier_forward.1} parent=1 // pred_check_branch
      %49 = sbr.rel (0) target = $region17
    $region16: #{sound_classifier_forward.1} parent=1 // pred_region
      _
    $region17: #{sound_classifier_forward.1} parent=1 // pred_fallthru
      _
    // Predicated region
    $region18: #{sound_classifier_forward.1} parent=1 // pred_check
      _
    $region19: #{sound_classifier_forward.1} parent=1 // pred_check_branch
      %51 = sbr.rel (0) target = $region21
    $region20: #{sound_classifier_forward.1} parent=1 // pred_region
      _
    $region21: #{sound_classifier_forward.1} parent=1 // pred_fallthru
      _
    // Predicated region
    $region22: #{sound_classifier_forward.1} parent=1 // pred_check
      _
    $region23: #{sound_classifier_forward.1} parent=1 // pred_check_branch
      %53 = sbr.rel (0) target = $region25
    $region24: #{sound_classifier_forward.1} parent=1 // pred_region
      %s55 = ssub.s32 8192, 8192
      %56 = vsyncadd [#allocation6], %s55
      %s57 = sshll.u32 [#allocation5], 4
      %s58 = int_to_ptr.vmem [resolvable:$true] %s57
      %63 = dma.hbm_to_vmem [thread:$0]  %s5, 8192, %s58, [#allocation6], 128, 128, 8
    $region25: #{sound_classifier_forward.1} parent=1 // pred_fallthru
      _
    // Predicated region
    $region26: #{sound_classifier_forward.1} parent=1 // pred_check
      _
    $region27: #{sound_classifier_forward.1} parent=1 // pred_check_branch
      %65 = sbr.rel (0) target = $region29
    $region28: #{sound_classifier_forward.1} parent=1 // pred_region
      _
    $region29: #{sound_classifier_forward.1} parent=1 // pred_fallthru
      _
    // Predicated region
    $region30: #{sound_classifier_forward.1} parent=1 // pred_check
      _
    $region31: #{sound_classifier_forward.1} parent=1 // pred_check_branch
      %67 = sbr.rel (0) target = $region33
    $region32: #{sound_classifier_forward.1} parent=1 // pred_region
      _
    $region33: #{sound_classifier_forward.1} parent=1 // pred_fallthru
      _
    // Predicated region
    $region34: #{sound_classifier_forward.1} parent=1 // pred_check
      _
    $region35: #{sound_classifier_forward.1} parent=1 // pred_check_branch
      %69 = sbr.rel (0) target = $region37
    $region36: #{sound_classifier_forward.1} parent=1 // pred_region
      _
    $region37: #{sound_classifier_forward.1} parent=1 // pred_fallthru
      _
    // Predicated region
    $region38: #{sound_classifier_forward.1} parent=1 // pred_check
      _
    $region39: #{sound_classifier_forward.1} parent=1 // pred_check_branch
      %71 = sbr.rel (0) target = $region41
    $region40: #{sound_classifier_forward.1} parent=1 // pred_region
      _
    $region41: #{sound_classifier_forward.1} parent=1 // pred_fallthru
      _
    // Predicated region
    $region42: #{sound_classifier_forward.1} parent=1 // pred_check
      _
    $region43: #{sound_classifier_forward.1} parent=1 // pred_check_branch
      %73 = sbr.rel (0) target = $region45
    $region44: #{sound_classifier_forward.1} parent=1 // pred_region
      _
    $region45: #{sound_classifier_forward.1} parent=1 // pred_fallthru
      _
    // Predicated region
    $region46: #{sound_classifier_forward.1} parent=1 // pred_check
      _
    $region47: #{sound_classifier_forward.1} parent=1 // pred_check_branch
      %75 = sbr.rel (0) target = $region49
    $region48: #{sound_classifier_forward.1} parent=1 // pred_region
      _
    $region49: #{sound_classifier_forward.1} parent=1 // pred_fallthru
      _
    // Predicated region
    $region50: #{sound_classifier_forward.1} parent=1 // pred_check
      _
    $region51: #{sound_classifier_forward.1} parent=1 // pred_check_branch
      %77 = sbr.rel (0) target = $region53
    $region52: #{sound_classifier_forward.1} parent=1 // pred_region
      _
    $region53: #{sound_classifier_forward.1} parent=1 // pred_fallthru
      _
    // Predicated region
    $region54: #{sound_classifier_forward.1} parent=1 // pred_check
      _
    $region55: #{sound_classifier_forward.1} parent=1 // pred_check_branch
      %79 = sbr.rel (0) target = $region57
    $region56: #{sound_classifier_forward.1} parent=1 // pred_region
      %s81 = ssub.s32 32768, 32768
      %82 = vsyncadd [#allocation6], %s81
      %s83 = sshll.u32 [#allocation7], 4
      %s84 = int_to_ptr.vmem [resolvable:$true] %s83
      %89 = dma.hbm_to_vmem [thread:$0]  %s13, 32768, %s84, [#allocation6], 128, 128, 8
    $region57: #{sound_classifier_forward.1} parent=1 // pred_fallthru
      _
    // Predicated region
    $region58: #{sound_classifier_forward.1} parent=1 // pred_check
      _
    $region59: #{sound_classifier_forward.1} parent=1 // pred_check_branch
      %91 = sbr.rel (0) target = $region61
    $region60: #{sound_classifier_forward.1} parent=1 // pred_region
      _
    $region61: #{sound_classifier_forward.1} parent=1 // pred_fallthru
      _
    // Predicated region
    $region62: #{sound_classifier_forward.1} parent=1 // pred_check
      _
    $region63: #{sound_classifier_forward.1} parent=1 // pred_check_branch
      %93 = sbr.rel (0) target = $region65
    $region64: #{sound_classifier_forward.1} parent=1 // pred_region
      _
    $region65: #{sound_classifier_forward.1} parent=1 // pred_fallthru
      _
    // Predicated region
    $region66: #{sound_classifier_forward.1} parent=1 // pred_check
      _
    $region67: #{sound_classifier_forward.1} parent=1 // pred_check_branch
      %95 = sbr.rel (0) target = $region69
    $region68: #{sound_classifier_forward.1} parent=1 // pred_region
      _
    $region69: #{sound_classifier_forward.1} parent=1 // pred_fallthru
      _
    // Predicated region
    $region70: #{sound_classifier_forward.1} parent=1 // pred_check
      _
    $region71: #{sound_classifier_forward.1} parent=1 // pred_check_branch
      %97 = sbr.rel (0) target = $region73
    $region72: #{sound_classifier_forward.1} parent=1 // pred_region
      _
    $region73: #{sound_classifier_forward.1} parent=1 // pred_fallthru
      _
    // Predicated region
    $region74: #{sound_classifier_forward.1} parent=1 // pred_check
      _
    $region75: #{sound_classifier_forward.1} parent=1 // pred_check_branch
      %99 = sbr.rel (0) target = $region77
    $region76: #{sound_classifier_forward.1} parent=1 // pred_region
      _
    $region77: #{sound_classifier_forward.1} parent=1 // pred_fallthru
      _
    // Predicated region
    $region78: #{sound_classifier_forward.1} parent=1 // pred_check
      _
    $region79: #{sound_classifier_forward.1} parent=1 // pred_check_branch
      %101 = sbr.rel (0) target = $region81
    $region80: #{sound_classifier_forward.1} parent=1 // pred_region
      _
    $region81: #{sound_classifier_forward.1} parent=1 // pred_fallthru
      _
    // Predicated region
    $region82: #{sound_classifier_forward.1} parent=1 // pred_check
      _
    $region83: #{sound_classifier_forward.1} parent=1 // pred_check_branch
      %103 = sbr.rel (0) target = $region85
    $region84: #{sound_classifier_forward.1} parent=1 // pred_region
      _
    $region85: #{sound_classifier_forward.1} parent=1 // pred_fallthru
      _
    // Predicated region
    $region86: #{sound_classifier_forward.1} parent=1 // pred_check
      _
    $region87: #{sound_classifier_forward.1} parent=1 // pred_check_branch
      %105 = sbr.rel (0) target = $region89
    $region88: #{sound_classifier_forward.1} parent=1 // pred_region
      %s107 = ssub.s32 1024, 1024
      %108 = vsyncadd [#allocation9], %s107
      %s109 = sshll.u32 [#allocation8], 4
      %s110 = int_to_ptr.vmem [resolvable:$true] %s109
      %115 = dma.hbm_to_vmem [thread:$0]  %s21, 1024, %s110, [#allocation9], 128, 128, 8
    $region89: #{sound_classifier_forward.1} parent=1 // pred_fallthru
      _
    // Predicated region
    $region90: #{sound_classifier_forward.1} parent=1 // pred_check
      _
    $region91: #{sound_classifier_forward.1} parent=1 // pred_check_branch
      %117 = sbr.rel (0) target = $region93
    $region92: #{sound_classifier_forward.1} parent=1 // pred_region
      _
    $region93: #{sound_classifier_forward.1} parent=1 // pred_fallthru
      _
    // Predicated region
    $region94: #{sound_classifier_forward.1} parent=1 // pred_check
      _
    $region95: #{sound_classifier_forward.1} parent=1 // pred_check_branch
      %119 = sbr.rel (0) target = $region97
    $region96: #{sound_classifier_forward.1} parent=1 // pred_region
      %120 = dma.done [#allocation3], 1024
    $region97: #{sound_classifier_forward.1} parent=1 // pred_fallthru
      _
    // Predicated region
    $region98: #{sound_classifier_forward.1} parent=1 // pred_check
      _
    $region99: #{sound_classifier_forward.1} parent=1 // pred_check_branch
      %122 = sbr.rel (0) target = $region101
    $region100: #{sound_classifier_forward.1} parent=1 // pred_region
      %123 = dma.done [#allocation6], 8192
    $region101: #{sound_classifier_forward.1} parent=1 // pred_fallthru
      _
    // Predicated region
    $region102: #{sound_classifier_forward.1} parent=1 // pred_check
      _
    $region103: #{sound_classifier_forward.1} parent=1 // pred_check_branch
      %125 = sbr.rel (0) target = $region105
    $region104: #{sound_classifier_forward.1} parent=1 // pred_region
      %126 = dma.done [#allocation6], 32768
    $region105: #{sound_classifier_forward.1} parent=1 // pred_fallthru
      _
    // Predicated region
    $region106: #{sound_classifier_forward.1} parent=1 // pred_check
      _
    $region107: #{sound_classifier_forward.1} parent=1 // pred_check_branch
      %128 = sbr.rel (0) target = $region109
    $region108: #{sound_classifier_forward.1} parent=1 // pred_region
      %129 = dma.done [#allocation9], 1024
    $region109: #{sound_classifier_forward.1} parent=1 // pred_fallthru
      _
    %v130 = vld [vmem:[#allocation2] sm:$0xff]
    %v131 = vld [vmem:[#allocation2 + $0x8] sm:$0xff]
    %v132 = vld [vmem:[#allocation2 + $0x10] sm:$0xff]
    %v133 = vld [vmem:[#allocation2 + $0x18] sm:$0xff]
    %v134 = vld [vmem:[#allocation2 + $0x20] sm:$0xff]
    %v135 = vld [vmem:[#allocation2 + $0x28] sm:$0xff]
    %v136 = vld [vmem:[#allocation2 + $0x30] sm:$0xff]
    %v137 = vld [vmem:[#allocation2 + $0x38] sm:$0xff]
    %v138 = vld [vmem:[%s1] sm:$0xff]
    %v139 = vld [vmem:[%s1 + $0x8] sm:$0xff]
    %v140 = vld [vmem:[%s1 + $0x10] sm:$0xff]
    %v141 = vld [vmem:[%s1 + $0x18] sm:$0xff]
    %v142 = vld [vmem:[%s1 + $0x20] sm:$0xff]
    %v143 = vld [vmem:[%s1 + $0x28] sm:$0xff]
    %v144 = vld [vmem:[%s1 + $0x30] sm:$0xff]
    %v145 = vld [vmem:[%s1 + $0x38] sm:$0xff]
    %v146 = vld [vmem:[%s1 + $0x40] sm:$0xff]
    %v147 = vld [vmem:[%s1 + $0x48] sm:$0xff]
    %v148 = vld [vmem:[%s1 + $0x50] sm:$0xff]
    %v149 = vld [vmem:[%s1 + $0x58] sm:$0xff]
    %v150 = vld [vmem:[%s1 + $0x60] sm:$0xff]
    %v151 = vld [vmem:[%s1 + $0x68] sm:$0xff]
    %v152 = vld [vmem:[%s1 + $0x70] sm:$0xff]
    %v153 = vld [vmem:[%s1 + $0x78] sm:$0xff]
    %154 = vmatprep.subr.mxu0 0.0
    %155 = vmatpush1.msra.mxu0 %v138
    %156 = vmatprep.subr.mxu0 0.0
    %157 = vmatpush1.msra.mxu0 %v139
    %158 = vmatprep.subr.mxu0 0.0
    %159 = vmatpush1.msra.mxu0 %v140
    %160 = vmatprep.subr.mxu0 0.0
    %161 = vmatpush1.msra.mxu0 %v141
    %162 = vmatprep.subr.mxu0 0.0
    %163 = vmatpush1.msra.mxu0 %v142
    %164 = vmatprep.subr.mxu0 0.0
    %165 = vmatpush1.msra.mxu0 %v143
    %166 = vmatprep.subr.mxu0 0.0
    %167 = vmatpush1.msra.mxu0 %v144
    %168 = vmatprep.subr.mxu0 0.0
    %169 = vmatpush1.msra.mxu0 %v145
    %170 = vmatprep.subr.mxu0 0.0
    %171 = vmatpush1.msra.mxu0 %v146
    %172 = vmatprep.subr.mxu0 0.0
    %173 = vmatpush1.msra.mxu0 %v147
    %174 = vmatprep.subr.mxu0 0.0
    %175 = vmatpush1.msra.mxu0 %v148
    %176 = vmatprep.subr.mxu0 0.0
    %177 = vmatpush1.msra.mxu0 %v149
    %178 = vmatprep.subr.mxu0 0.0
    %179 = vmatpush1.msra.mxu0 %v150
    %180 = vmatprep.subr.mxu0 0.0
    %181 = vmatpush1.msra.mxu0 %v151
    %182 = vmatprep.subr.mxu0 0.0
    %183 = vmatpush1.msra.mxu0 %v152
    %184 = vmatprep.subr.mxu0 0.0
    %185 = vmatpush1.msra.mxu0 %v153
    %186 = vmatprep.subr.mxu0 0.0
    %187 = vmatpush1.msra.mxu0 0.0
    %188 = vmatprep.subr.mxu0 0.0
    %189 = vmatpush1.msra.mxu0 0.0
    %190 = vmatprep.subr.mxu0 0.0
    %191 = vmatpush1.msra.mxu0 0.0
    %192 = vmatprep.subr.mxu0 0.0
    %193 = vmatpush1.msra.mxu0 0.0
    %194 = vmatprep.subr.mxu0 0.0
    %195 = vmatpush1.msra.mxu0 0.0
    %196 = vmatprep.subr.mxu0 0.0
    %197 = vmatpush1.msra.mxu0 0.0
    %198 = vmatprep.subr.mxu0 0.0
    %199 = vmatpush1.msra.mxu0 0.0
    %200 = vmatprep.subr.mxu0 0.0
    %201 = vmatpush1.msra.mxu0 0.0
    %202 = vmatprep.subr.mxu0 0.0
    %203 = vmatpush1.msra.mxu0 0.0
    %204 = vmatprep.subr.mxu0 0.0
    %205 = vmatpush1.msra.mxu0 0.0
    %206 = vmatprep.subr.mxu0 0.0
    %207 = vmatpush1.msra.mxu0 0.0
    %208 = vmatprep.subr.mxu0 0.0
    %209 = vmatpush1.msra.mxu0 0.0
    %210 = vmatprep.subr.mxu0 0.0
    %211 = vmatpush1.msra.mxu0 0.0
    %212 = vmatprep.subr.mxu0 0.0
    %213 = vmatpush1.msra.mxu0 0.0
    %214 = vmatprep.subr.mxu0 0.0
    %215 = vmatpush1.msra.mxu0 0.0
    %216 = vmatprep.subr.mxu0 0.0
    %217 = vmatpush1.msra.mxu0 0.0
    %218 = vmatprep.mubr.f32.mxu0 0.0
    %219 = vmatmul.mubr.f32.gmra.mrb[0].mxu0 %v130
    %v220 = vpop.f32.mrb[0].mxu0
    %v221 = vadd.f32 0.0, %v220
    %v222 = vpop.f32.mrb[0].mxu0
    %223 = vmatprep.mubr.f32.mxu0 0.0
    %224 = vmatmul.mubr.f32.gmra.mrb[0].mxu0 %v131
    %v225 = vpop.f32.mrb[0].mxu0
    %v226 = vadd.f32 0.0, %v225
    %v227 = vpop.f32.mrb[0].mxu0
    %228 = vmatprep.mubr.f32.mxu0 0.0
    %229 = vmatmul.mubr.f32.gmra.mrb[0].mxu0 %v132
    %v230 = vpop.f32.mrb[0].mxu0
    %v231 = vadd.f32 0.0, %v230
    %v232 = vpop.f32.mrb[0].mxu0
    %233 = vmatprep.mubr.f32.mxu0 0.0
    %234 = vmatmul.mubr.f32.gmra.mrb[0].mxu0 %v133
    %v235 = vpop.f32.mrb[0].mxu0
    %v236 = vadd.f32 0.0, %v235
    %v237 = vpop.f32.mrb[0].mxu0
    %238 = vmatprep.mubr.f32.mxu0 0.0
    %239 = vmatmul.mubr.f32.gmra.mrb[0].mxu0 %v134
    %v240 = vpop.f32.mrb[0].mxu0
    %v241 = vadd.f32 0.0, %v240
    %v242 = vpop.f32.mrb[0].mxu0
    %243 = vmatprep.mubr.f32.mxu0 0.0
    %244 = vmatmul.mubr.f32.gmra.mrb[0].mxu0 %v135
    %v245 = vpop.f32.mrb[0].mxu0
    %v246 = vadd.f32 0.0, %v245
    %v247 = vpop.f32.mrb[0].mxu0
    %248 = vmatprep.mubr.f32.mxu0 0.0
    %249 = vmatmul.mubr.f32.gmra.mrb[0].mxu0 %v136
    %v250 = vpop.f32.mrb[0].mxu0
    %v251 = vadd.f32 0.0, %v250
    %v252 = vpop.f32.mrb[0].mxu0
    %253 = vmatprep.mubr.f32.mxu0 0.0
    %254 = vmatmul.mubr.f32.gmra.mrb[0].mxu0 %v137
    %v255 = vpop.f32.mrb[0].mxu0
    %v256 = vadd.f32 0.0, %v255
    %v257 = vpop.f32.mrb[0].mxu0
    %258 = vdwg.mxu0
    %v259 = vld [vmem:[%s2] sm:$0x1]
    %v260 = vld [vmem:[%s3] sm:$0x1]
    %v261 = vadd.f32 %v221, %v226
    %v262 = vadd.f32 %v261, %v231
    %v263 = vadd.f32 %v262, %v236
    %v264 = vadd.f32 %v263, %v241
    %v265 = vadd.f32 %v264, %v246
    %v266 = vadd.f32 %v265, %v251
    %v267 = vadd.f32 %v266, %v256
    %v268 = vrot.slane %v267, 4
    %v269 = vadd.f32 %v267, %v268
    %v270 = vrot.slane %v269, 2
    %v271 = vadd.f32 %v269, %v270
    %v272 = vrot.slane %v271, 1
    %v273 = vadd.f32 %v271, %v272
    %v274 = vrcp.pop 64.0
    %v275 = vmul.f32 %v273, %v274
    %v276 = vsub.f32 %v221, %v275
    %v277 = vsub.f32 %v226, %v275
    %v278 = vsub.f32 %v231, %v275
    %v279 = vsub.f32 %v236, %v275
    %v280 = vsub.f32 %v241, %v275
    %v281 = vsub.f32 %v246, %v275
    %v282 = vsub.f32 %v251, %v275
    %v283 = vsub.f32 %v256, %v275
    %v284 = vmul.f32 %v276, %v276
    %v285 = vmul.f32 %v277, %v277
    %v286 = vmul.f32 %v278, %v278
    %v287 = vmul.f32 %v279, %v279
    %v288 = vmul.f32 %v280, %v280
    %v289 = vmul.f32 %v281, %v281
    %v290 = vmul.f32 %v282, %v282
    %v291 = vmul.f32 %v283, %v283
    %v292 = vadd.f32 %v284, %v285
    %v293 = vadd.f32 %v292, %v286
    %v294 = vadd.f32 %v293, %v287
    %v295 = vadd.f32 %v294, %v288
    %v296 = vadd.f32 %v295, %v289
    %v297 = vadd.f32 %v296, %v290
    %v298 = vadd.f32 %v297, %v291
    %v299 = vrot.slane %v298, 4
    %v300 = vadd.f32 %v298, %v299
    %v301 = vrot.slane %v300, 2
    %v302 = vadd.f32 %v300, %v301
    %v303 = vrot.slane %v302, 1
    %v304 = vadd.f32 %v302, %v303
    %v305 = vmul.f32 %v304, %v274
    %v306 = vadd.f32 %v305, 1e-05
    %v307 = vrsqrt.pop %v306
    %v308 = vmul.f32 %v259, %v307
    %v309 = vmul.f32 %v275, %v308
    %v310 = vsub.f32 %v260, %v309
    %v312 = vlaneseq
    %v313 = vshrl.u32 %v312, 7
    %v314 = vsub.s32 0, %v313
    %v315 = vrot.slane %v308, %v314
    %v317 = vmul.f32 %v221, %v315
    %v318 = vmul.f32 %v226, %v315
    %v319 = vmul.f32 %v231, %v315
    %v320 = vmul.f32 %v236, %v315
    %v321 = vmul.f32 %v241, %v315
    %v322 = vmul.f32 %v246, %v315
    %v323 = vmul.f32 %v251, %v315
    %v324 = vmul.f32 %v256, %v315
    %v326 = vlaneseq
    %v327 = vshrl.u32 %v326, 7
    %v328 = vsub.s32 0, %v327
    %v329 = vrot.slane %v310, %v328
    %v331 = vadd.f32 %v317, %v329
    %v332 = vadd.f32 %v318, %v329
    %v333 = vadd.f32 %v319, %v329
    %v334 = vadd.f32 %v320, %v329
    %v335 = vadd.f32 %v321, %v329
    %v336 = vadd.f32 %v322, %v329
    %v337 = vadd.f32 %v323, %v329
    %v338 = vadd.f32 %v324, %v329
    %v339 = vmax.f32 %v331, 0.0
    %v340 = vmax.f32 %v332, 0.0
    %v341 = vmax.f32 %v333, 0.0
    %v342 = vmax.f32 %v334, 0.0
    %v343 = vmax.f32 %v335, 0.0
    %v344 = vmax.f32 %v336, 0.0
    %v345 = vmax.f32 %v337, 0.0
    %v346 = vmax.f32 %v338, 0.0
    %v347 = vld [vmem:[%s4] sm:$0xff]
    %v348 = vld [vmem:[%s4 + $0x8] sm:$0xff]
    %v349 = vld [vmem:[%s4 + $0x10] sm:$0xff]
    %v350 = vld [vmem:[%s4 + $0x18] sm:$0xff]
    %vm351 = vcmask 523264
    %v353 = vsel %vm351, %v347, 0
    %v356 = vsel %vm351, %v348, 0
    %v359 = vsel %vm351, %v349, 0
    %v362 = vsel %vm351, %v350, 0
    %364 = vmatprep.subr.mxu0 0.0
    %365 = vmatpush1.msra.mxu0 %v339
    %366 = vmatprep.subr.mxu0 0.0
    %367 = vmatpush1.msra.mxu0 %v340
    %368 = vmatprep.subr.mxu0 0.0
    %369 = vmatpush1.msra.mxu0 %v341
    %370 = vmatprep.subr.mxu0 0.0
    %371 = vmatpush1.msra.mxu0 %v342
    %372 = vmatprep.subr.mxu0 0.0
    %373 = vmatpush1.msra.mxu0 %v343
    %374 = vmatprep.subr.mxu0 0.0
    %375 = vmatpush1.msra.mxu0 %v344
    %376 = vmatprep.subr.mxu0 0.0
    %377 = vmatpush1.msra.mxu0 %v345
    %378 = vmatprep.subr.mxu0 0.0
    %379 = vmatpush1.msra.mxu0 %v346
    %380 = vmatprep.subr.mxu0 0.0
    %381 = vmatpush1.msra.mxu0 0.0
    %382 = vmatprep.subr.mxu0 0.0
    %383 = vmatpush1.msra.mxu0 0.0
    %384 = vmatprep.subr.mxu0 0.0
    %385 = vmatpush1.msra.mxu0 0.0
    %386 = vmatprep.subr.mxu0 0.0
    %387 = vmatpush1.msra.mxu0 0.0
    %388 = vmatprep.subr.mxu0 0.0
    %389 = vmatpush1.msra.mxu0 0.0
    %390 = vmatprep.subr.mxu0 0.0
    %391 = vmatpush1.msra.mxu0 0.0
    %392 = vmatprep.subr.mxu0 0.0
    %393 = vmatpush1.msra.mxu0 0.0
    %394 = vmatprep.subr.mxu0 0.0
    %395 = vmatpush1.msra.mxu0 0.0
    %396 = vmatprep.subr.mxu0 0.0
    %397 = vmatpush1.msra.mxu0 0.0
    %398 = vmatprep.subr.mxu0 0.0
    %399 = vmatpush1.msra.mxu0 0.0
    %400 = vmatprep.subr.mxu0 0.0
    %401 = vmatpush1.msra.mxu0 0.0
    %402 = vmatprep.subr.mxu0 0.0
    %403 = vmatpush1.msra.mxu0 0.0
    %404 = vmatprep.subr.mxu0 0.0
    %405 = vmatpush1.msra.mxu0 0.0
    %406 = vmatprep.subr.mxu0 0.0
    %407 = vmatpush1.msra.mxu0 0.0
    %408 = vmatprep.subr.mxu0 0.0
    %409 = vmatpush1.msra.mxu0 0.0
    %410 = vmatprep.subr.mxu0 0.0
    %411 = vmatpush1.msra.mxu0 0.0
    %412 = vmatprep.subr.mxu0 0.0
    %413 = vmatpush1.msra.mxu0 0.0
    %414 = vmatprep.subr.mxu0 0.0
    %415 = vmatpush1.msra.mxu0 0.0
    %416 = vmatprep.subr.mxu0 0.0
    %417 = vmatpush1.msra.mxu0 0.0
    %418 = vmatprep.subr.mxu0 0.0
    %419 = vmatpush1.msra.mxu0 0.0
    %420 = vmatprep.subr.mxu0 0.0
    %421 = vmatpush1.msra.mxu0 0.0
    %422 = vmatprep.subr.mxu0 0.0
    %423 = vmatpush1.msra.mxu0 0.0
    %424 = vmatprep.subr.mxu0 0.0
    %425 = vmatpush1.msra.mxu0 0.0
    %426 = vmatprep.subr.mxu0 0.0
    %427 = vmatpush1.msra.mxu0 0.0
    %428 = vmatprep.mubr.f32.mxu0 0.0
    %429 = vmatmul.mubr.f32.gmra.mrb[0].mxu0 %v353
    %v430 = vpop.f32.mrb[0].mxu0
    %v431 = vadd.f32 0.0, %v430
    %v432 = vpop.f32.mrb[0].mxu0
    %433 = vmatprep.mubr.f32.mxu0 0.0
    %434 = vmatmul.mubr.f32.gmra.mrb[0].mxu0 %v356
    %v435 = vpop.f32.mrb[0].mxu0
    %v436 = vadd.f32 0.0, %v435
    %v437 = vpop.f32.mrb[0].mxu0
    %438 = vmatprep.mubr.f32.mxu0 0.0
    %439 = vmatmul.mubr.f32.gmra.mrb[0].mxu0 %v359
    %v440 = vpop.f32.mrb[0].mxu0
    %v441 = vadd.f32 0.0, %v440
    %v442 = vpop.f32.mrb[0].mxu0
    %443 = vmatprep.mubr.f32.mxu0 0.0
    %444 = vmatmul.mubr.f32.gmra.mrb[0].mxu0 %v362
    %v445 = vpop.f32.mrb[0].mxu0
    %v446 = vadd.f32 0.0, %v445
    %v447 = vpop.f32.mrb[0].mxu0
    %448 = vdwg.mxu0
    %v449 = vld [vmem:[#allocation5] sm:$0xff]
    %v450 = vld [vmem:[#allocation5 + $0x8] sm:$0xff]
    %v451 = vld [vmem:[#allocation5 + $0x10] sm:$0xff]
    %v452 = vld [vmem:[#allocation5 + $0x18] sm:$0xff]
    %v453 = vld [vmem:[#allocation5 + $0x20] sm:$0xff]
    %v454 = vld [vmem:[#allocation5 + $0x28] sm:$0xff]
    %v455 = vld [vmem:[#allocation5 + $0x30] sm:$0xff]
    %v456 = vld [vmem:[#allocation5 + $0x38] sm:$0xff]
    %v457 = vld [vmem:[#allocation5 + $0x40] sm:$0xff]
    %v458 = vld [vmem:[#allocation5 + $0x48] sm:$0xff]
    %v459 = vld [vmem:[#allocation5 + $0x50] sm:$0xff]
    %v460 = vld [vmem:[#allocation5 + $0x58] sm:$0xff]
    %v461 = vld [vmem:[#allocation5 + $0x60] sm:$0xff]
    %v462 = vld [vmem:[#allocation5 + $0x68] sm:$0xff]
    %v463 = vld [vmem:[#allocation5 + $0x70] sm:$0xff]
    %v464 = vld [vmem:[#allocation5 + $0x78] sm:$0xff]
    %s465 = scalar_lea.vmem %s4, 32
    %v466 = vld [vmem:[%s465] sm:$0xff]
    %v467 = vld [vmem:[%s465 + $0x8] sm:$0xff]
    %v468 = vld [vmem:[%s465 + $0x10] sm:$0xff]
    %v469 = vld [vmem:[%s465 + $0x18] sm:$0xff]
    %v471 = vsel %vm351, %v466, 0
    %v474 = vsel %vm351, %v467, 0
    %v477 = vsel %vm351, %v468, 0
    %v480 = vsel %vm351, %v469, 0
    %482 = vmatprep.subr.mxu0 0.0
    %483 = vmatpush1.msra.mxu0 %v339
    %484 = vmatprep.subr.mxu0 0.0
    %485 = vmatpush1.msra.mxu0 %v340
    %486 = vmatprep.subr.mxu0 0.0
    %487 = vmatpush1.msra.mxu0 %v341
    %488 = vmatprep.subr.mxu0 0.0
    %489 = vmatpush1.msra.mxu0 %v342
    %490 = vmatprep.subr.mxu0 0.0
    %491 = vmatpush1.msra.mxu0 %v343
    %492 = vmatprep.subr.mxu0 0.0
    %493 = vmatpush1.msra.mxu0 %v344
    %494 = vmatprep.subr.mxu0 0.0
    %495 = vmatpush1.msra.mxu0 %v345
    %496 = vmatprep.subr.mxu0 0.0
    %497 = vmatpush1.msra.mxu0 %v346
    %498 = vmatprep.subr.mxu0 0.0
    %499 = vmatpush1.msra.mxu0 0.0
    %500 = vmatprep.subr.mxu0 0.0
    %501 = vmatpush1.msra.mxu0 0.0
    %502 = vmatprep.subr.mxu0 0.0
    %503 = vmatpush1.msra.mxu0 0.0
    %504 = vmatprep.subr.mxu0 0.0
    %505 = vmatpush1.msra.mxu0 0.0
    %506 = vmatprep.subr.mxu0 0.0
    %507 = vmatpush1.msra.mxu0 0.0
    %508 = vmatprep.subr.mxu0 0.0
    %509 = vmatpush1.msra.mxu0 0.0
    %510 = vmatprep.subr.mxu0 0.0
    %511 = vmatpush1.msra.mxu0 0.0
    %512 = vmatprep.subr.mxu0 0.0
    %513 = vmatpush1.msra.mxu0 0.0
    %514 = vmatprep.subr.mxu0 0.0
    %515 = vmatpush1.msra.mxu0 0.0
    %516 = vmatprep.subr.mxu0 0.0
    %517 = vmatpush1.msra.mxu0 0.0
    %518 = vmatprep.subr.mxu0 0.0
    %519 = vmatpush1.msra.mxu0 0.0
    %520 = vmatprep.subr.mxu0 0.0
    %521 = vmatpush1.msra.mxu0 0.0
    %522 = vmatprep.subr.mxu0 0.0
    %523 = vmatpush1.msra.mxu0 0.0
    %524 = vmatprep.subr.mxu0 0.0
    %525 = vmatpush1.msra.mxu0 0.0
    %526 = vmatprep.subr.mxu0 0.0
    %527 = vmatpush1.msra.mxu0 0.0
    %528 = vmatprep.subr.mxu0 0.0
    %529 = vmatpush1.msra.mxu0 0.0
    %530 = vmatprep.subr.mxu0 0.0
    %531 = vmatpush1.msra.mxu0 0.0
    %532 = vmatprep.subr.mxu0 0.0
    %533 = vmatpush1.msra.mxu0 0.0
    %534 = vmatprep.subr.mxu0 0.0
    %535 = vmatpush1.msra.mxu0 0.0
    %536 = vmatprep.subr.mxu0 0.0
    %537 = vmatpush1.msra.mxu0 0.0
    %538 = vmatprep.subr.mxu0 0.0
    %539 = vmatpush1.msra.mxu0 0.0
    %540 = vmatprep.subr.mxu0 0.0
    %541 = vmatpush1.msra.mxu0 0.0
    %542 = vmatprep.subr.mxu0 0.0
    %543 = vmatpush1.msra.mxu0 0.0
    %544 = vmatprep.subr.mxu0 0.0
    %545 = vmatpush1.msra.mxu0 0.0
    %546 = vmatprep.mubr.f32.mxu0 0.0
    %547 = vmatmul.mubr.f32.gmra.mrb[0].mxu0 %v471
    %v548 = vpop.f32.mrb[0].mxu0
    %v549 = vadd.f32 0.0, %v548
    %v550 = vpop.f32.mrb[0].mxu0
    %551 = vmatprep.mubr.f32.mxu0 0.0
    %552 = vmatmul.mubr.f32.gmra.mrb[0].mxu0 %v474
    %v553 = vpop.f32.mrb[0].mxu0
    %v554 = vadd.f32 0.0, %v553
    %v555 = vpop.f32.mrb[0].mxu0
    %556 = vmatprep.mubr.f32.mxu0 0.0
    %557 = vmatmul.mubr.f32.gmra.mrb[0].mxu0 %v477
    %v558 = vpop.f32.mrb[0].mxu0
    %v559 = vadd.f32 0.0, %v558
    %v560 = vpop.f32.mrb[0].mxu0
    %561 = vmatprep.mubr.f32.mxu0 0.0
    %562 = vmatmul.mubr.f32.gmra.mrb[0].mxu0 %v480
    %v563 = vpop.f32.mrb[0].mxu0
    %v564 = vadd.f32 0.0, %v563
    %v565 = vpop.f32.mrb[0].mxu0
    %566 = vdwg.mxu0
    %s567 = scalar_lea.vmem [#allocation5], 128
    %v568 = vld [vmem:[%s567] sm:$0xff]
    %v569 = vld [vmem:[%s567 + $0x8] sm:$0xff]
    %v570 = vld [vmem:[%s567 + $0x10] sm:$0xff]
    %v571 = vld [vmem:[%s567 + $0x18] sm:$0xff]
    %v572 = vld [vmem:[%s567 + $0x20] sm:$0xff]
    %v573 = vld [vmem:[%s567 + $0x28] sm:$0xff]
    %v574 = vld [vmem:[%s567 + $0x30] sm:$0xff]
    %v575 = vld [vmem:[%s567 + $0x38] sm:$0xff]
    %v576 = vld [vmem:[%s567 + $0x40] sm:$0xff]
    %v577 = vld [vmem:[%s567 + $0x48] sm:$0xff]
    %v578 = vld [vmem:[%s567 + $0x50] sm:$0xff]
    %v579 = vld [vmem:[%s567 + $0x58] sm:$0xff]
    %v580 = vld [vmem:[%s567 + $0x60] sm:$0xff]
    %v581 = vld [vmem:[%s567 + $0x68] sm:$0xff]
    %v582 = vld [vmem:[%s567 + $0x70] sm:$0xff]
    %v583 = vld [vmem:[%s567 + $0x78] sm:$0xff]
    %584 = vmatprep.subr.mxu0 0.0
    %585 = vmatpush1.msra.mxu0 %v568
    %586 = vmatprep.subr.mxu0 0.0
    %587 = vmatpush1.msra.mxu0 %v569
    %588 = vmatprep.subr.mxu0 0.0
    %589 = vmatpush1.msra.mxu0 %v570
    %590 = vmatprep.subr.mxu0 0.0
    %591 = vmatpush1.msra.mxu0 %v571
    %592 = vmatprep.subr.mxu0 0.0
    %593 = vmatpush1.msra.mxu0 %v572
    %594 = vmatprep.subr.mxu0 0.0
    %595 = vmatpush1.msra.mxu0 %v573
    %596 = vmatprep.subr.mxu0 0.0
    %597 = vmatpush1.msra.mxu0 %v574
    %598 = vmatprep.subr.mxu0 0.0
    %599 = vmatpush1.msra.mxu0 %v575
    %600 = vmatprep.subr.mxu0 0.0
    %601 = vmatpush1.msra.mxu0 %v576
    %602 = vmatprep.subr.mxu0 0.0
    %603 = vmatpush1.msra.mxu0 %v577
    %604 = vmatprep.subr.mxu0 0.0
    %605 = vmatpush1.msra.mxu0 %v578
    %606 = vmatprep.subr.mxu0 0.0
    %607 = vmatpush1.msra.mxu0 %v579
    %608 = vmatprep.subr.mxu0 0.0
    %609 = vmatpush1.msra.mxu0 %v580
    %610 = vmatprep.subr.mxu0 0.0
    %611 = vmatpush1.msra.mxu0 %v581
    %612 = vmatprep.subr.mxu0 0.0
    %613 = vmatpush1.msra.mxu0 %v582
    %614 = vmatprep.subr.mxu0 0.0
    %615 = vmatpush1.msra.mxu0 %v583
    %616 = vmatprep.subr.mxu0 0.0
    %617 = vmatpush1.msra.mxu0 0.0
    %618 = vmatprep.subr.mxu0 0.0
    %619 = vmatpush1.msra.mxu0 0.0
    %620 = vmatprep.subr.mxu0 0.0
    %621 = vmatpush1.msra.mxu0 0.0
    %622 = vmatprep.subr.mxu0 0.0
    %623 = vmatpush1.msra.mxu0 0.0
    %624 = vmatprep.subr.mxu0 0.0
    %625 = vmatpush1.msra.mxu0 0.0
    %626 = vmatprep.subr.mxu0 0.0
    %627 = vmatpush1.msra.mxu0 0.0
    %628 = vmatprep.subr.mxu0 0.0
    %629 = vmatpush1.msra.mxu0 0.0
    %630 = vmatprep.subr.mxu0 0.0
    %631 = vmatpush1.msra.mxu0 0.0
    %632 = vmatprep.subr.mxu0 0.0
    %633 = vmatpush1.msra.mxu0 0.0
    %634 = vmatprep.subr.mxu0 0.0
    %635 = vmatpush1.msra.mxu0 0.0
    %636 = vmatprep.subr.mxu0 0.0
    %637 = vmatpush1.msra.mxu0 0.0
    %638 = vmatprep.subr.mxu0 0.0
    %639 = vmatpush1.msra.mxu0 0.0
    %640 = vmatprep.subr.mxu0 0.0
    %641 = vmatpush1.msra.mxu0 0.0
    %642 = vmatprep.subr.mxu0 0.0
    %643 = vmatpush1.msra.mxu0 0.0
    %644 = vmatprep.subr.mxu0 0.0
    %645 = vmatpush1.msra.mxu0 0.0
    %646 = vmatprep.subr.mxu0 0.0
    %647 = vmatpush1.msra.mxu0 0.0
    %648 = vmatprep.mubr.f32.mxu0 0.0
    %649 = vmatmul.mubr.f32.gmra.mrb[0].mxu0 %v549
    %v650 = vpop.f32.mrb[0].mxu0
    %v651 = vadd.f32 0.0, %v650
    %v652 = vpop.f32.mrb[0].mxu0
    %653 = vmatprep.mubr.f32.mxu0 0.0
    %654 = vmatmul.mubr.f32.gmra.mrb[0].mxu0 %v554
    %v655 = vpop.f32.mrb[0].mxu0
    %v656 = vadd.f32 0.0, %v655
    %v657 = vpop.f32.mrb[0].mxu0
    %658 = vmatprep.mubr.f32.mxu0 0.0
    %659 = vmatmul.mubr.f32.gmra.mrb[0].mxu0 %v559
    %v660 = vpop.f32.mrb[0].mxu0
    %v661 = vadd.f32 0.0, %v660
    %v662 = vpop.f32.mrb[0].mxu0
    %663 = vmatprep.mubr.f32.mxu0 0.0
    %664 = vmatmul.mubr.f32.gmra.mrb[0].mxu0 %v564
    %v665 = vpop.f32.mrb[0].mxu0
    %v666 = vadd.f32 0.0, %v665
    %v667 = vpop.f32.mrb[0].mxu0
    %668 = vdwg.mxu0
    %669 = vmatprep.subr.mxu0 0.0
    %670 = vmatpush1.msra.mxu0 %v449
    %671 = vmatprep.subr.mxu0 0.0
    %672 = vmatpush1.msra.mxu0 %v450
    %673 = vmatprep.subr.mxu0 0.0
    %674 = vmatpush1.msra.mxu0 %v451
    %675 = vmatprep.subr.mxu0 0.0
    %676 = vmatpush1.msra.mxu0 %v452
    %677 = vmatprep.subr.mxu0 0.0
    %678 = vmatpush1.msra.mxu0 %v453
    %679 = vmatprep.subr.mxu0 0.0
    %680 = vmatpush1.msra.mxu0 %v454
    %681 = vmatprep.subr.mxu0 0.0
    %682 = vmatpush1.msra.mxu0 %v455
    %683 = vmatprep.subr.mxu0 0.0
    %684 = vmatpush1.msra.mxu0 %v456
    %685 = vmatprep.subr.mxu0 0.0
    %686 = vmatpush1.msra.mxu0 %v457
    %687 = vmatprep.subr.mxu0 0.0
    %688 = vmatpush1.msra.mxu0 %v458
    %689 = vmatprep.subr.mxu0 0.0
    %690 = vmatpush1.msra.mxu0 %v459
    %691 = vmatprep.subr.mxu0 0.0
    %692 = vmatpush1.msra.mxu0 %v460
    %693 = vmatprep.subr.mxu0 0.0
    %694 = vmatpush1.msra.mxu0 %v461
    %695 = vmatprep.subr.mxu0 0.0
    %696 = vmatpush1.msra.mxu0 %v462
    %697 = vmatprep.subr.mxu0 0.0
    %698 = vmatpush1.msra.mxu0 %v463
    %699 = vmatprep.subr.mxu0 0.0
    %700 = vmatpush1.msra.mxu0 %v464
    %701 = vmatprep.subr.mxu0 0.0
    %702 = vmatpush1.msra.mxu0 0.0
    %703 = vmatprep.subr.mxu0 0.0
    %704 = vmatpush1.msra.mxu0 0.0
    %705 = vmatprep.subr.mxu0 0.0
    %706 = vmatpush1.msra.mxu0 0.0
    %707 = vmatprep.subr.mxu0 0.0
    %708 = vmatpush1.msra.mxu0 0.0
    %709 = vmatprep.subr.mxu0 0.0
    %710 = vmatpush1.msra.mxu0 0.0
    %711 = vmatprep.subr.mxu0 0.0
    %712 = vmatpush1.msra.mxu0 0.0
    %713 = vmatprep.subr.mxu0 0.0
    %714 = vmatpush1.msra.mxu0 0.0
    %715 = vmatprep.subr.mxu0 0.0
    %716 = vmatpush1.msra.mxu0 0.0
    %717 = vmatprep.subr.mxu0 0.0
    %718 = vmatpush1.msra.mxu0 0.0
    %719 = vmatprep.subr.mxu0 0.0
    %720 = vmatpush1.msra.mxu0 0.0
    %721 = vmatprep.subr.mxu0 0.0
    %722 = vmatpush1.msra.mxu0 0.0
    %723 = vmatprep.subr.mxu0 0.0
    %724 = vmatpush1.msra.mxu0 0.0
    %725 = vmatprep.subr.mxu0 0.0
    %726 = vmatpush1.msra.mxu0 0.0
    %727 = vmatprep.subr.mxu0 0.0
    %728 = vmatpush1.msra.mxu0 0.0
    %729 = vmatprep.subr.mxu0 0.0
    %730 = vmatpush1.msra.mxu0 0.0
    %731 = vmatprep.subr.mxu0 0.0
    %732 = vmatpush1.msra.mxu0 0.0
    %733 = vmatprep.mubr.f32.mxu0 0.0
    %734 = vmatmul.mubr.f32.gmra.mrb[0].mxu0 %v431
    %v735 = vpop.f32.mrb[0].mxu0
    %v736 = vadd.f32 %v651, %v735
    %v737 = vpop.f32.mrb[0].mxu0
    %738 = vmatprep.mubr.f32.mxu0 0.0
    %739 = vmatmul.mubr.f32.gmra.mrb[0].mxu0 %v436
    %v740 = vpop.f32.mrb[0].mxu0
    %v741 = vadd.f32 %v656, %v740
    %v742 = vpop.f32.mrb[0].mxu0
    %743 = vmatprep.mubr.f32.mxu0 0.0
    %744 = vmatmul.mubr.f32.gmra.mrb[0].mxu0 %v441
    %v745 = vpop.f32.mrb[0].mxu0
    %v746 = vadd.f32 %v661, %v745
    %v747 = vpop.f32.mrb[0].mxu0
    %748 = vmatprep.mubr.f32.mxu0 0.0
    %749 = vmatmul.mubr.f32.gmra.mrb[0].mxu0 %v446
    %v750 = vpop.f32.mrb[0].mxu0
    %v751 = vadd.f32 %v666, %v750
    %v752 = vpop.f32.mrb[0].mxu0
    %753 = vdwg.mxu0
    %s754 = scalar_lea.vmem %s4, 64
    %v755 = vld [vmem:[%s754] sm:$0xff]
    %v756 = vld [vmem:[%s754 + $0x8] sm:$0xff]
    %v757 = vld [vmem:[%s754 + $0x10] sm:$0xff]
    %v758 = vld [vmem:[%s754 + $0x18] sm:$0xff]
    %v760 = vsel %vm351, %v755, 0
    %v763 = vsel %vm351, %v756, 0
    %v766 = vsel %vm351, %v757, 0
    %v769 = vsel %vm351, %v758, 0
    %771 = vmatprep.subr.mxu0 0.0
    %772 = vmatpush1.msra.mxu0 %v339
    %773 = vmatprep.subr.mxu0 0.0
    %774 = vmatpush1.msra.mxu0 %v340
    %775 = vmatprep.subr.mxu0 0.0
    %776 = vmatpush1.msra.mxu0 %v341
    %777 = vmatprep.subr.mxu0 0.0
    %778 = vmatpush1.msra.mxu0 %v342
    %779 = vmatprep.subr.mxu0 0.0
    %780 = vmatpush1.msra.mxu0 %v343
    %781 = vmatprep.subr.mxu0 0.0
    %782 = vmatpush1.msra.mxu0 %v344
    %783 = vmatprep.subr.mxu0 0.0
    %784 = vmatpush1.msra.mxu0 %v345
    %785 = vmatprep.subr.mxu0 0.0
    %786 = vmatpush1.msra.mxu0 %v346
    %787 = vmatprep.subr.mxu0 0.0
    %788 = vmatpush1.msra.mxu0 0.0
    %789 = vmatprep.subr.mxu0 0.0
    %790 = vmatpush1.msra.mxu0 0.0
    %791 = vmatprep.subr.mxu0 0.0
    %792 = vmatpush1.msra.mxu0 0.0
    %793 = vmatprep.subr.mxu0 0.0
    %794 = vmatpush1.msra.mxu0 0.0
    %795 = vmatprep.subr.mxu0 0.0
    %796 = vmatpush1.msra.mxu0 0.0
    %797 = vmatprep.subr.mxu0 0.0
    %798 = vmatpush1.msra.mxu0 0.0
    %799 = vmatprep.subr.mxu0 0.0
    %800 = vmatpush1.msra.mxu0 0.0
    %801 = vmatprep.subr.mxu0 0.0
    %802 = vmatpush1.msra.mxu0 0.0
    %803 = vmatprep.subr.mxu0 0.0
    %804 = vmatpush1.msra.mxu0 0.0
    %805 = vmatprep.subr.mxu0 0.0
    %806 = vmatpush1.msra.mxu0 0.0
    %807 = vmatprep.subr.mxu0 0.0
    %808 = vmatpush1.msra.mxu0 0.0
    %809 = vmatprep.subr.mxu0 0.0
    %810 = vmatpush1.msra.mxu0 0.0
    %811 = vmatprep.subr.mxu0 0.0
    %812 = vmatpush1.msra.mxu0 0.0
    %813 = vmatprep.subr.mxu0 0.0
    %814 = vmatpush1.msra.mxu0 0.0
    %815 = vmatprep.subr.mxu0 0.0
    %816 = vmatpush1.msra.mxu0 0.0
    %817 = vmatprep.subr.mxu0 0.0
    %818 = vmatpush1.msra.mxu0 0.0
    %819 = vmatprep.subr.mxu0 0.0
    %820 = vmatpush1.msra.mxu0 0.0
    %821 = vmatprep.subr.mxu0 0.0
    %822 = vmatpush1.msra.mxu0 0.0
    %823 = vmatprep.subr.mxu0 0.0
    %824 = vmatpush1.msra.mxu0 0.0
    %825 = vmatprep.subr.mxu0 0.0
    %826 = vmatpush1.msra.mxu0 0.0
    %827 = vmatprep.subr.mxu0 0.0
    %828 = vmatpush1.msra.mxu0 0.0
    %829 = vmatprep.subr.mxu0 0.0
    %830 = vmatpush1.msra.mxu0 0.0
    %831 = vmatprep.subr.mxu0 0.0
    %832 = vmatpush1.msra.mxu0 0.0
    %833 = vmatprep.subr.mxu0 0.0
    %834 = vmatpush1.msra.mxu0 0.0
    %835 = vmatprep.mubr.f32.mxu0 0.0
    %836 = vmatmul.mubr.f32.gmra.mrb[0].mxu0 %v760
    %v837 = vpop.f32.mrb[0].mxu0
    %v838 = vadd.f32 0.0, %v837
    %v839 = vpop.f32.mrb[0].mxu0
    %840 = vmatprep.mubr.f32.mxu0 0.0
    %841 = vmatmul.mubr.f32.gmra.mrb[0].mxu0 %v763
    %v842 = vpop.f32.mrb[0].mxu0
    %v843 = vadd.f32 0.0, %v842
    %v844 = vpop.f32.mrb[0].mxu0
    %845 = vmatprep.mubr.f32.mxu0 0.0
    %846 = vmatmul.mubr.f32.gmra.mrb[0].mxu0 %v766
    %v847 = vpop.f32.mrb[0].mxu0
    %v848 = vadd.f32 0.0, %v847
    %v849 = vpop.f32.mrb[0].mxu0
    %850 = vmatprep.mubr.f32.mxu0 0.0
    %851 = vmatmul.mubr.f32.gmra.mrb[0].mxu0 %v769
    %v852 = vpop.f32.mrb[0].mxu0
    %v853 = vadd.f32 0.0, %v852
    %v854 = vpop.f32.mrb[0].mxu0
    %855 = vdwg.mxu0
    %s856 = scalar_lea.vmem [#allocation5], 256
    %v857 = vld [vmem:[%s856] sm:$0xff]
    %v858 = vld [vmem:[%s856 + $0x8] sm:$0xff]
    %v859 = vld [vmem:[%s856 + $0x10] sm:$0xff]
    %v860 = vld [vmem:[%s856 + $0x18] sm:$0xff]
    %v861 = vld [vmem:[%s856 + $0x20] sm:$0xff]
    %v862 = vld [vmem:[%s856 + $0x28] sm:$0xff]
    %v863 = vld [vmem:[%s856 + $0x30] sm:$0xff]
    %v864 = vld [vmem:[%s856 + $0x38] sm:$0xff]
    %v865 = vld [vmem:[%s856 + $0x40] sm:$0xff]
    %v866 = vld [vmem:[%s856 + $0x48] sm:$0xff]
    %v867 = vld [vmem:[%s856 + $0x50] sm:$0xff]
    %v868 = vld [vmem:[%s856 + $0x58] sm:$0xff]
    %v869 = vld [vmem:[%s856 + $0x60] sm:$0xff]
    %v870 = vld [vmem:[%s856 + $0x68] sm:$0xff]
    %v871 = vld [vmem:[%s856 + $0x70] sm:$0xff]
    %v872 = vld [vmem:[%s856 + $0x78] sm:$0xff]
    %873 = vmatprep.subr.mxu0 0.0
    %874 = vmatpush1.msra.mxu0 %v857
    %875 = vmatprep.subr.mxu0 0.0
    %876 = vmatpush1.msra.mxu0 %v858
    %877 = vmatprep.subr.mxu0 0.0
    %878 = vmatpush1.msra.mxu0 %v859
    %879 = vmatprep.subr.mxu0 0.0
    %880 = vmatpush1.msra.mxu0 %v860
    %881 = vmatprep.subr.mxu0 0.0
    %882 = vmatpush1.msra.mxu0 %v861
    %883 = vmatprep.subr.mxu0 0.0
    %884 = vmatpush1.msra.mxu0 %v862
    %885 = vmatprep.subr.mxu0 0.0
    %886 = vmatpush1.msra.mxu0 %v863
    %887 = vmatprep.subr.mxu0 0.0
    %888 = vmatpush1.msra.mxu0 %v864
    %889 = vmatprep.subr.mxu0 0.0
    %890 = vmatpush1.msra.mxu0 %v865
    %891 = vmatprep.subr.mxu0 0.0
    %892 = vmatpush1.msra.mxu0 %v866
    %893 = vmatprep.subr.mxu0 0.0
    %894 = vmatpush1.msra.mxu0 %v867
    %895 = vmatprep.subr.mxu0 0.0
    %896 = vmatpush1.msra.mxu0 %v868
    %897 = vmatprep.subr.mxu0 0.0
    %898 = vmatpush1.msra.mxu0 %v869
    %899 = vmatprep.subr.mxu0 0.0
    %900 = vmatpush1.msra.mxu0 %v870
    %901 = vmatprep.subr.mxu0 0.0
    %902 = vmatpush1.msra.mxu0 %v871
    %903 = vmatprep.subr.mxu0 0.0
    %904 = vmatpush1.msra.mxu0 %v872
    %905 = vmatprep.subr.mxu0 0.0
    %906 = vmatpush1.msra.mxu0 0.0
    %907 = vmatprep.subr.mxu0 0.0
    %908 = vmatpush1.msra.mxu0 0.0
    %909 = vmatprep.subr.mxu0 0.0
    %910 = vmatpush1.msra.mxu0 0.0
    %911 = vmatprep.subr.mxu0 0.0
    %912 = vmatpush1.msra.mxu0 0.0
    %913 = vmatprep.subr.mxu0 0.0
    %914 = vmatpush1.msra.mxu0 0.0
    %915 = vmatprep.subr.mxu0 0.0
    %916 = vmatpush1.msra.mxu0 0.0
    %917 = vmatprep.subr.mxu0 0.0
    %918 = vmatpush1.msra.mxu0 0.0
    %919 = vmatprep.subr.mxu0 0.0
    %920 = vmatpush1.msra.mxu0 0.0
    %921 = vmatprep.subr.mxu0 0.0
    %922 = vmatpush1.msra.mxu0 0.0
    %923 = vmatprep.subr.mxu0 0.0
    %924 = vmatpush1.msra.mxu0 0.0
    %925 = vmatprep.subr.mxu0 0.0
    %926 = vmatpush1.msra.mxu0 0.0
    %927 = vmatprep.subr.mxu0 0.0
    %928 = vmatpush1.msra.mxu0 0.0
    %929 = vmatprep.subr.mxu0 0.0
    %930 = vmatpush1.msra.mxu0 0.0
    %931 = vmatprep.subr.mxu0 0.0
    %932 = vmatpush1.msra.mxu0 0.0
    %933 = vmatprep.subr.mxu0 0.0
    %934 = vmatpush1.msra.mxu0 0.0
    %935 = vmatprep.subr.mxu0 0.0
    %936 = vmatpush1.msra.mxu0 0.0
    %937 = vmatprep.mubr.f32.mxu0 0.0
    %938 = vmatmul.mubr.f32.gmra.mrb[0].mxu0 %v838
    %v939 = vpop.f32.mrb[0].mxu0
    %v940 = vadd.f32 0.0, %v939
    %v941 = vpop.f32.mrb[0].mxu0
    %942 = vmatprep.mubr.f32.mxu0 0.0
    %943 = vmatmul.mubr.f32.gmra.mrb[0].mxu0 %v843
    %v944 = vpop.f32.mrb[0].mxu0
    %v945 = vadd.f32 0.0, %v944
    %v946 = vpop.f32.mrb[0].mxu0
    %947 = vmatprep.mubr.f32.mxu0 0.0
    %948 = vmatmul.mubr.f32.gmra.mrb[0].mxu0 %v848
    %v949 = vpop.f32.mrb[0].mxu0
    %v950 = vadd.f32 0.0, %v949
    %v951 = vpop.f32.mrb[0].mxu0
    %952 = vmatprep.mubr.f32.mxu0 0.0
    %953 = vmatmul.mubr.f32.gmra.mrb[0].mxu0 %v853
    %v954 = vpop.f32.mrb[0].mxu0
    %v955 = vadd.f32 0.0, %v954
    %v956 = vpop.f32.mrb[0].mxu0
    %957 = vdwg.mxu0
    %v958 = vadd.f32 %v736, %v940
    %v959 = vadd.f32 %v741, %v945
    %v960 = vadd.f32 %v746, %v950
    %v961 = vadd.f32 %v751, %v955
    %s962 = scalar_lea.vmem %s4, 96
    %v963 = vld [vmem:[%s962] sm:$0xff]
    %v964 = vld [vmem:[%s962 + $0x8] sm:$0xff]
    %v965 = vld [vmem:[%s962 + $0x10] sm:$0xff]
    %v966 = vld [vmem:[%s962 + $0x18] sm:$0xff]
    %v968 = vsel %vm351, %v963, 0
    %v971 = vsel %vm351, %v964, 0
    %v974 = vsel %vm351, %v965, 0
    %v977 = vsel %vm351, %v966, 0
    %979 = vmatprep.subr.mxu0 0.0
    %980 = vmatpush1.msra.mxu0 %v339
    %981 = vmatprep.subr.mxu0 0.0
    %982 = vmatpush1.msra.mxu0 %v340
    %983 = vmatprep.subr.mxu0 0.0
    %984 = vmatpush1.msra.mxu0 %v341
    %985 = vmatprep.subr.mxu0 0.0
    %986 = vmatpush1.msra.mxu0 %v342
    %987 = vmatprep.subr.mxu0 0.0
    %988 = vmatpush1.msra.mxu0 %v343
    %989 = vmatprep.subr.mxu0 0.0
    %990 = vmatpush1.msra.mxu0 %v344
    %991 = vmatprep.subr.mxu0 0.0
    %992 = vmatpush1.msra.mxu0 %v345
    %993 = vmatprep.subr.mxu0 0.0
    %994 = vmatpush1.msra.mxu0 %v346
    %995 = vmatprep.subr.mxu0 0.0
    %996 = vmatpush1.msra.mxu0 0.0
    %997 = vmatprep.subr.mxu0 0.0
    %998 = vmatpush1.msra.mxu0 0.0
    %999 = vmatprep.subr.mxu0 0.0
    %1000 = vmatpush1.msra.mxu0 0.0
    %1001 = vmatprep.subr.mxu0 0.0
    %1002 = vmatpush1.msra.mxu0 0.0
    %1003 = vmatprep.subr.mxu0 0.0
    %1004 = vmatpush1.msra.mxu0 0.0
    %1005 = vmatprep.subr.mxu0 0.0
    %1006 = vmatpush1.msra.mxu0 0.0
    %1007 = vmatprep.subr.mxu0 0.0
    %1008 = vmatpush1.msra.mxu0 0.0
    %1009 = vmatprep.subr.mxu0 0.0
    %1010 = vmatpush1.msra.mxu0 0.0
    %1011 = vmatprep.subr.mxu0 0.0
    %1012 = vmatpush1.msra.mxu0 0.0
    %1013 = vmatprep.subr.mxu0 0.0
    %1014 = vmatpush1.msra.mxu0 0.0
    %1015 = vmatprep.subr.mxu0 0.0
    %1016 = vmatpush1.msra.mxu0 0.0
    %1017 = vmatprep.subr.mxu0 0.0
    %1018 = vmatpush1.msra.mxu0 0.0
    %1019 = vmatprep.subr.mxu0 0.0
    %1020 = vmatpush1.msra.mxu0 0.0
    %1021 = vmatprep.subr.mxu0 0.0
    %1022 = vmatpush1.msra.mxu0 0.0
    %1023 = vmatprep.subr.mxu0 0.0
    %1024 = vmatpush1.msra.mxu0 0.0
    %1025 = vmatprep.subr.mxu0 0.0
    %1026 = vmatpush1.msra.mxu0 0.0
    %1027 = vmatprep.subr.mxu0 0.0
    %1028 = vmatpush1.msra.mxu0 0.0
    %1029 = vmatprep.subr.mxu0 0.0
    %1030 = vmatpush1.msra.mxu0 0.0
    %1031 = vmatprep.subr.mxu0 0.0
    %1032 = vmatpush1.msra.mxu0 0.0
    %1033 = vmatprep.subr.mxu0 0.0
    %1034 = vmatpush1.msra.mxu0 0.0
    %1035 = vmatprep.subr.mxu0 0.0
    %1036 = vmatpush1.msra.mxu0 0.0
    %1037 = vmatprep.subr.mxu0 0.0
    %1038 = vmatpush1.msra.mxu0 0.0
    %1039 = vmatprep.subr.mxu0 0.0
    %1040 = vmatpush1.msra.mxu0 0.0
    %1041 = vmatprep.subr.mxu0 0.0
    %1042 = vmatpush1.msra.mxu0 0.0
    %1043 = vmatprep.mubr.f32.mxu0 0.0
    %1044 = vmatmul.mubr.f32.gmra.mrb[0].mxu0 %v968
    %v1045 = vpop.f32.mrb[0].mxu0
    %v1046 = vadd.f32 0.0, %v1045
    %v1047 = vpop.f32.mrb[0].mxu0
    %1048 = vmatprep.mubr.f32.mxu0 0.0
    %1049 = vmatmul.mubr.f32.gmra.mrb[0].mxu0 %v971
    %v1050 = vpop.f32.mrb[0].mxu0
    %v1051 = vadd.f32 0.0, %v1050
    %v1052 = vpop.f32.mrb[0].mxu0
    %1053 = vmatprep.mubr.f32.mxu0 0.0
    %1054 = vmatmul.mubr.f32.gmra.mrb[0].mxu0 %v974
    %v1055 = vpop.f32.mrb[0].mxu0
    %v1056 = vadd.f32 0.0, %v1055
    %v1057 = vpop.f32.mrb[0].mxu0
    %1058 = vmatprep.mubr.f32.mxu0 0.0
    %1059 = vmatmul.mubr.f32.gmra.mrb[0].mxu0 %v977
    %v1060 = vpop.f32.mrb[0].mxu0
    %v1061 = vadd.f32 0.0, %v1060
    %v1062 = vpop.f32.mrb[0].mxu0
    %1063 = vdwg.mxu0
    %s1064 = scalar_lea.vmem [#allocation5], 384
    %v1065 = vld [vmem:[%s1064] sm:$0xff]
    %v1066 = vld [vmem:[%s1064 + $0x8] sm:$0xff]
    %v1067 = vld [vmem:[%s1064 + $0x10] sm:$0xff]
    %v1068 = vld [vmem:[%s1064 + $0x18] sm:$0xff]
    %v1069 = vld [vmem:[%s1064 + $0x20] sm:$0xff]
    %v1070 = vld [vmem:[%s1064 + $0x28] sm:$0xff]
    %v1071 = vld [vmem:[%s1064 + $0x30] sm:$0xff]
    %v1072 = vld [vmem:[%s1064 + $0x38] sm:$0xff]
    %v1073 = vld [vmem:[%s1064 + $0x40] sm:$0xff]
    %v1074 = vld [vmem:[%s1064 + $0x48] sm:$0xff]
    %v1075 = vld [vmem:[%s1064 + $0x50] sm:$0xff]
    %v1076 = vld [vmem:[%s1064 + $0x58] sm:$0xff]
    %v1077 = vld [vmem:[%s1064 + $0x60] sm:$0xff]
    %v1078 = vld [vmem:[%s1064 + $0x68] sm:$0xff]
    %v1079 = vld [vmem:[%s1064 + $0x70] sm:$0xff]
    %v1080 = vld [vmem:[%s1064 + $0x78] sm:$0xff]
    %1081 = vmatprep.subr.mxu0 0.0
    %1082 = vmatpush1.msra.mxu0 %v1065
    %1083 = vmatprep.subr.mxu0 0.0
    %1084 = vmatpush1.msra.mxu0 %v1066
    %1085 = vmatprep.subr.mxu0 0.0
    %1086 = vmatpush1.msra.mxu0 %v1067
    %1087 = vmatprep.subr.mxu0 0.0
    %1088 = vmatpush1.msra.mxu0 %v1068
    %1089 = vmatprep.subr.mxu0 0.0
    %1090 = vmatpush1.msra.mxu0 %v1069
    %1091 = vmatprep.subr.mxu0 0.0
    %1092 = vmatpush1.msra.mxu0 %v1070
    %1093 = vmatprep.subr.mxu0 0.0
    %1094 = vmatpush1.msra.mxu0 %v1071
    %1095 = vmatprep.subr.mxu0 0.0
    %1096 = vmatpush1.msra.mxu0 %v1072
    %1097 = vmatprep.subr.mxu0 0.0
    %1098 = vmatpush1.msra.mxu0 %v1073
    %1099 = vmatprep.subr.mxu0 0.0
    %1100 = vmatpush1.msra.mxu0 %v1074
    %1101 = vmatprep.subr.mxu0 0.0
    %1102 = vmatpush1.msra.mxu0 %v1075
    %1103 = vmatprep.subr.mxu0 0.0
    %1104 = vmatpush1.msra.mxu0 %v1076
    %1105 = vmatprep.subr.mxu0 0.0
    %1106 = vmatpush1.msra.mxu0 %v1077
    %1107 = vmatprep.subr.mxu0 0.0
    %1108 = vmatpush1.msra.mxu0 %v1078
    %1109 = vmatprep.subr.mxu0 0.0
    %1110 = vmatpush1.msra.mxu0 %v1079
    %1111 = vmatprep.subr.mxu0 0.0
    %1112 = vmatpush1.msra.mxu0 %v1080
    %1113 = vmatprep.subr.mxu0 0.0
    %1114 = vmatpush1.msra.mxu0 0.0
    %1115 = vmatprep.subr.mxu0 0.0
    %1116 = vmatpush1.msra.mxu0 0.0
    %1117 = vmatprep.subr.mxu0 0.0
    %1118 = vmatpush1.msra.mxu0 0.0
    %1119 = vmatprep.subr.mxu0 0.0
    %1120 = vmatpush1.msra.mxu0 0.0
    %1121 = vmatprep.subr.mxu0 0.0
    %1122 = vmatpush1.msra.mxu0 0.0
    %1123 = vmatprep.subr.mxu0 0.0
    %1124 = vmatpush1.msra.mxu0 0.0
    %1125 = vmatprep.subr.mxu0 0.0
    %1126 = vmatpush1.msra.mxu0 0.0
    %1127 = vmatprep.subr.mxu0 0.0
    %1128 = vmatpush1.msra.mxu0 0.0
    %1129 = vmatprep.subr.mxu0 0.0
    %1130 = vmatpush1.msra.mxu0 0.0
    %1131 = vmatprep.subr.mxu0 0.0
    %1132 = vmatpush1.msra.mxu0 0.0
    %1133 = vmatprep.subr.mxu0 0.0
    %1134 = vmatpush1.msra.mxu0 0.0
    %1135 = vmatprep.subr.mxu0 0.0
    %1136 = vmatpush1.msra.mxu0 0.0
    %1137 = vmatprep.subr.mxu0 0.0
    %1138 = vmatpush1.msra.mxu0 0.0
    %1139 = vmatprep.subr.mxu0 0.0
    %1140 = vmatpush1.msra.mxu0 0.0
    %1141 = vmatprep.subr.mxu0 0.0
    %1142 = vmatpush1.msra.mxu0 0.0
    %1143 = vmatprep.subr.mxu0 0.0
    %1144 = vmatpush1.msra.mxu0 0.0
    %1145 = vmatprep.mubr.f32.mxu0 0.0
    %1146 = vmatmul.mubr.f32.gmra.mrb[0].mxu0 %v1046
    %v1147 = vpop.f32.mrb[0].mxu0
    %v1148 = vadd.f32 0.0, %v1147
    %v1149 = vpop.f32.mrb[0].mxu0
    %1150 = vmatprep.mubr.f32.mxu0 0.0
    %1151 = vmatmul.mubr.f32.gmra.mrb[0].mxu0 %v1051
    %v1152 = vpop.f32.mrb[0].mxu0
    %v1153 = vadd.f32 0.0, %v1152
    %v1154 = vpop.f32.mrb[0].mxu0
    %1155 = vmatprep.mubr.f32.mxu0 0.0
    %1156 = vmatmul.mubr.f32.gmra.mrb[0].mxu0 %v1056
    %v1157 = vpop.f32.mrb[0].mxu0
    %v1158 = vadd.f32 0.0, %v1157
    %v1159 = vpop.f32.mrb[0].mxu0
    %1160 = vmatprep.mubr.f32.mxu0 0.0
    %1161 = vmatmul.mubr.f32.gmra.mrb[0].mxu0 %v1061
    %v1162 = vpop.f32.mrb[0].mxu0
    %v1163 = vadd.f32 0.0, %v1162
    %v1164 = vpop.f32.mrb[0].mxu0
    %1165 = vdwg.mxu0
    %v1166 = vadd.f32 %v958, %v1148
    %v1167 = vadd.f32 %v959, %v1153
    %v1168 = vadd.f32 %v960, %v1158
    %v1169 = vadd.f32 %v961, %v1163
    %v1170 = vld [vmem:[%s6] sm:$0x1]
    %v1171 = vld [vmem:[%s7] sm:$0x1]
    %v1172 = vadd.f32 %v1166, %v1167
    %v1173 = vadd.f32 %v1172, %v1168
    %v1174 = vadd.f32 %v1173, %v1169
    %v1175 = vrot.slane %v1174, 4
    %v1176 = vadd.f32 %v1174, %v1175
    %v1177 = vrot.slane %v1176, 2
    %v1178 = vadd.f32 %v1176, %v1177
    %v1179 = vrot.slane %v1178, 1
    %v1180 = vadd.f32 %v1178, %v1179
    %v1181 = vrcp.pop 32.0
    %v1182 = vmul.f32 %v1180, %v1181
    %v1183 = vsub.f32 %v1166, %v1182
    %v1184 = vsub.f32 %v1167, %v1182
    %v1185 = vsub.f32 %v1168, %v1182
    %v1186 = vsub.f32 %v1169, %v1182
    %v1187 = vmul.f32 %v1183, %v1183
    %v1188 = vmul.f32 %v1184, %v1184
    %v1189 = vmul.f32 %v1185, %v1185
    %v1190 = vmul.f32 %v1186, %v1186
    %v1191 = vadd.f32 %v1187, %v1188
    %v1192 = vadd.f32 %v1191, %v1189
    %v1193 = vadd.f32 %v1192, %v1190
    %v1194 = vrot.slane %v1193, 4
    %v1195 = vadd.f32 %v1193, %v1194
    %v1196 = vrot.slane %v1195, 2
    %v1197 = vadd.f32 %v1195, %v1196
    %v1198 = vrot.slane %v1197, 1
    %v1199 = vadd.f32 %v1197, %v1198
    %v1200 = vmul.f32 %v1199, %v1181
    %v1201 = vadd.f32 %v1200, 1e-05
    %v1202 = vrsqrt.pop %v1201
    %v1203 = vmul.f32 %v1170, %v1202
    %v1204 = vmul.f32 %v1182, %v1203
    %v1205 = vsub.f32 %v1171, %v1204
    %v1207 = vlaneseq
    %v1208 = vshrl.u32 %v1207, 7
    %v1209 = vsub.s32 0, %v1208
    %v1210 = vrot.slane %v1203, %v1209
    %v1212 = vmul.f32 %v1166, %v1210
    %v1213 = vmul.f32 %v1167, %v1210
    %v1214 = vmul.f32 %v1168, %v1210
    %v1215 = vmul.f32 %v1169, %v1210
    %v1217 = vlaneseq
    %v1218 = vshrl.u32 %v1217, 7
    %v1219 = vsub.s32 0, %v1218
    %v1220 = vrot.slane %v1205, %v1219
    %v1222 = vadd.f32 %v1212, %v1220
    %v1223 = vadd.f32 %v1213, %v1220
    %v1224 = vadd.f32 %v1214, %v1220
    %v1225 = vadd.f32 %v1215, %v1220
    %v1226 = vmax.f32 %v1222, 0.0
    %v1227 = vmax.f32 %v1223, 0.0
    %v1228 = vmax.f32 %v1224, 0.0
    %v1229 = vmax.f32 %v1225, 0.0
    %v1230 = vld [vmem:[%s8] sm:$0xff]
    %v1231 = vld [vmem:[%s8 + $0x8] sm:$0xff]
    %vm1232 = vcmask 261120
    %v1234 = vsel %vm1232, %v1230, 0
    %v1237 = vsel %vm1232, %v1231, 0
    %1239 = vmatprep.subr.mxu0 0.0
    %1240 = vmatpush1.msra.mxu0 %v1226
    %1241 = vmatprep.subr.mxu0 0.0
    %1242 = vmatpush1.msra.mxu0 %v1227
    %1243 = vmatprep.subr.mxu0 0.0
    %1244 = vmatpush1.msra.mxu0 %v1228
    %1245 = vmatprep.subr.mxu0 0.0
    %1246 = vmatpush1.msra.mxu0 %v1229
    %1247 = vmatprep.subr.mxu0 0.0
    %1248 = vmatpush1.msra.mxu0 0.0
    %1249 = vmatprep.subr.mxu0 0.0
    %1250 = vmatpush1.msra.mxu0 0.0
    %1251 = vmatprep.subr.mxu0 0.0
    %1252 = vmatpush1.msra.mxu0 0.0
    %1253 = vmatprep.subr.mxu0 0.0
    %1254 = vmatpush1.msra.mxu0 0.0
    %1255 = vmatprep.subr.mxu0 0.0
    %1256 = vmatpush1.msra.mxu0 0.0
    %1257 = vmatprep.subr.mxu0 0.0
    %1258 = vmatpush1.msra.mxu0 0.0
    %1259 = vmatprep.subr.mxu0 0.0
    %1260 = vmatpush1.msra.mxu0 0.0
    %1261 = vmatprep.subr.mxu0 0.0
    %1262 = vmatpush1.msra.mxu0 0.0
    %1263 = vmatprep.subr.mxu0 0.0
    %1264 = vmatpush1.msra.mxu0 0.0
    %1265 = vmatprep.subr.mxu0 0.0
    %1266 = vmatpush1.msra.mxu0 0.0
    %1267 = vmatprep.subr.mxu0 0.0
    %1268 = vmatpush1.msra.mxu0 0.0
    %1269 = vmatprep.subr.mxu0 0.0
    %1270 = vmatpush1.msra.mxu0 0.0
    %1271 = vmatprep.subr.mxu0 0.0
    %1272 = vmatpush1.msra.mxu0 0.0
    %1273 = vmatprep.subr.mxu0 0.0
    %1274 = vmatpush1.msra.mxu0 0.0
    %1275 = vmatprep.subr.mxu0 0.0
    %1276 = vmatpush1.msra.mxu0 0.0
    %1277 = vmatprep.subr.mxu0 0.0
    %1278 = vmatpush1.msra.mxu0 0.0
    %1279 = vmatprep.subr.mxu0 0.0
    %1280 = vmatpush1.msra.mxu0 0.0
    %1281 = vmatprep.subr.mxu0 0.0
    %1282 = vmatpush1.msra.mxu0 0.0
    %1283 = vmatprep.subr.mxu0 0.0
    %1284 = vmatpush1.msra.mxu0 0.0
    %1285 = vmatprep.subr.mxu0 0.0
    %1286 = vmatpush1.msra.mxu0 0.0
    %1287 = vmatprep.subr.mxu0 0.0
    %1288 = vmatpush1.msra.mxu0 0.0
    %1289 = vmatprep.subr.mxu0 0.0
    %1290 = vmatpush1.msra.mxu0 0.0
    %1291 = vmatprep.subr.mxu0 0.0
    %1292 = vmatpush1.msra.mxu0 0.0
    %1293 = vmatprep.subr.mxu0 0.0
    %1294 = vmatpush1.msra.mxu0 0.0
    %1295 = vmatprep.subr.mxu0 0.0
    %1296 = vmatpush1.msra.mxu0 0.0
    %1297 = vmatprep.subr.mxu0 0.0
    %1298 = vmatpush1.msra.mxu0 0.0
    %1299 = vmatprep.subr.mxu0 0.0
    %1300 = vmatpush1.msra.mxu0 0.0
    %1301 = vmatprep.subr.mxu0 0.0
    %1302 = vmatpush1.msra.mxu0 0.0
    %1303 = vmatprep.mubr.f32.mxu0 0.0
    %1304 = vmatmul.mubr.f32.gmra.mrb[0].mxu0 %v1234
    %v1305 = vpop.f32.mrb[0].mxu0
    %v1306 = vadd.f32 0.0, %v1305
    %v1307 = vpop.f32.mrb[0].mxu0
    %1308 = vmatprep.mubr.f32.mxu0 0.0
    %1309 = vmatmul.mubr.f32.gmra.mrb[0].mxu0 %v1237
    %v1310 = vpop.f32.mrb[0].mxu0
    %v1311 = vadd.f32 0.0, %v1310
    %v1312 = vpop.f32.mrb[0].mxu0
    %1313 = vdwg.mxu0
    %v1314 = vld [vmem:[%s9] sm:$0xff]
    %v1315 = vld [vmem:[%s9 + $0x8] sm:$0xff]
    %v1316 = vld [vmem:[%s9 + $0x10] sm:$0xff]
    %v1317 = vld [vmem:[%s9 + $0x18] sm:$0xff]
    %v1318 = vld [vmem:[%s9 + $0x20] sm:$0xff]
    %v1319 = vld [vmem:[%s9 + $0x28] sm:$0xff]
    %v1320 = vld [vmem:[%s9 + $0x30] sm:$0xff]
    %v1321 = vld [vmem:[%s9 + $0x38] sm:$0xff]
    %v1322 = vld [vmem:[%s9 + $0x40] sm:$0xff]
    %v1323 = vld [vmem:[%s9 + $0x48] sm:$0xff]
    %v1324 = vld [vmem:[%s9 + $0x50] sm:$0xff]
    %v1325 = vld [vmem:[%s9 + $0x58] sm:$0xff]
    %v1326 = vld [vmem:[%s9 + $0x60] sm:$0xff]
    %v1327 = vld [vmem:[%s9 + $0x68] sm:$0xff]
    %v1328 = vld [vmem:[%s9 + $0x70] sm:$0xff]
    %v1329 = vld [vmem:[%s9 + $0x78] sm:$0xff]
    %v1330 = vld [vmem:[%s9 + $0x80] sm:$0xff]
    %v1331 = vld [vmem:[%s9 + $0x88] sm:$0xff]
    %v1332 = vld [vmem:[%s9 + $0x90] sm:$0xff]
    %v1333 = vld [vmem:[%s9 + $0x98] sm:$0xff]
    %v1334 = vld [vmem:[%s9 + $0xa0] sm:$0xff]
    %v1335 = vld [vmem:[%s9 + $0xa8] sm:$0xff]
    %v1336 = vld [vmem:[%s9 + $0xb0] sm:$0xff]
    %v1337 = vld [vmem:[%s9 + $0xb8] sm:$0xff]
    %v1338 = vld [vmem:[%s9 + $0xc0] sm:$0xff]
    %v1339 = vld [vmem:[%s9 + $0xc8] sm:$0xff]
    %v1340 = vld [vmem:[%s9 + $0xd0] sm:$0xff]
    %v1341 = vld [vmem:[%s9 + $0xd8] sm:$0xff]
    %v1342 = vld [vmem:[%s9 + $0xe0] sm:$0xff]
    %v1343 = vld [vmem:[%s9 + $0xe8] sm:$0xff]
    %v1344 = vld [vmem:[%s9 + $0xf0] sm:$0xff]
    %v1345 = vld [vmem:[%s9 + $0xf8] sm:$0xff]
    %s1346 = scalar_lea.vmem %s8, 16
    %v1347 = vld [vmem:[%s1346] sm:$0xff]
    %v1348 = vld [vmem:[%s1346 + $0x8] sm:$0xff]
    %v1350 = vsel %vm1232, %v1347, 0
    %v1353 = vsel %vm1232, %v1348, 0
    %1355 = vmatprep.subr.mxu0 0.0
    %1356 = vmatpush1.msra.mxu0 %v1226
    %1357 = vmatprep.subr.mxu0 0.0
    %1358 = vmatpush1.msra.mxu0 %v1227
    %1359 = vmatprep.subr.mxu0 0.0
    %1360 = vmatpush1.msra.mxu0 %v1228
    %1361 = vmatprep.subr.mxu0 0.0
    %1362 = vmatpush1.msra.mxu0 %v1229
    %1363 = vmatprep.subr.mxu0 0.0
    %1364 = vmatpush1.msra.mxu0 0.0
    %1365 = vmatprep.subr.mxu0 0.0
    %1366 = vmatpush1.msra.mxu0 0.0
    %1367 = vmatprep.subr.mxu0 0.0
    %1368 = vmatpush1.msra.mxu0 0.0
    %1369 = vmatprep.subr.mxu0 0.0
    %1370 = vmatpush1.msra.mxu0 0.0
    %1371 = vmatprep.subr.mxu0 0.0
    %1372 = vmatpush1.msra.mxu0 0.0
    %1373 = vmatprep.subr.mxu0 0.0
    %1374 = vmatpush1.msra.mxu0 0.0
    %1375 = vmatprep.subr.mxu0 0.0
    %1376 = vmatpush1.msra.mxu0 0.0
    %1377 = vmatprep.subr.mxu0 0.0
    %1378 = vmatpush1.msra.mxu0 0.0
    %1379 = vmatprep.subr.mxu0 0.0
    %1380 = vmatpush1.msra.mxu0 0.0
    %1381 = vmatprep.subr.mxu0 0.0
    %1382 = vmatpush1.msra.mxu0 0.0
    %1383 = vmatprep.subr.mxu0 0.0
    %1384 = vmatpush1.msra.mxu0 0.0
    %1385 = vmatprep.subr.mxu0 0.0
    %1386 = vmatpush1.msra.mxu0 0.0
    %1387 = vmatprep.subr.mxu0 0.0
    %1388 = vmatpush1.msra.mxu0 0.0
    %1389 = vmatprep.subr.mxu0 0.0
    %1390 = vmatpush1.msra.mxu0 0.0
    %1391 = vmatprep.subr.mxu0 0.0
    %1392 = vmatpush1.msra.mxu0 0.0
    %1393 = vmatprep.subr.mxu0 0.0
    %1394 = vmatpush1.msra.mxu0 0.0
    %1395 = vmatprep.subr.mxu0 0.0
    %1396 = vmatpush1.msra.mxu0 0.0
    %1397 = vmatprep.subr.mxu0 0.0
    %1398 = vmatpush1.msra.mxu0 0.0
    %1399 = vmatprep.subr.mxu0 0.0
    %1400 = vmatpush1.msra.mxu0 0.0
    %1401 = vmatprep.subr.mxu0 0.0
    %1402 = vmatpush1.msra.mxu0 0.0
    %1403 = vmatprep.subr.mxu0 0.0
    %1404 = vmatpush1.msra.mxu0 0.0
    %1405 = vmatprep.subr.mxu0 0.0
    %1406 = vmatpush1.msra.mxu0 0.0
    %1407 = vmatprep.subr.mxu0 0.0
    %1408 = vmatpush1.msra.mxu0 0.0
    %1409 = vmatprep.subr.mxu0 0.0
    %1410 = vmatpush1.msra.mxu0 0.0
    %1411 = vmatprep.subr.mxu0 0.0
    %1412 = vmatpush1.msra.mxu0 0.0
    %1413 = vmatprep.subr.mxu0 0.0
    %1414 = vmatpush1.msra.mxu0 0.0
    %1415 = vmatprep.subr.mxu0 0.0
    %1416 = vmatpush1.msra.mxu0 0.0
    %1417 = vmatprep.subr.mxu0 0.0
    %1418 = vmatpush1.msra.mxu0 0.0
    %1419 = vmatprep.mubr.f32.mxu0 0.0
    %1420 = vmatmul.mubr.f32.gmra.mrb[0].mxu0 %v1350
    %v1421 = vpop.f32.mrb[0].mxu0
    %v1422 = vadd.f32 0.0, %v1421
    %v1423 = vpop.f32.mrb[0].mxu0
    %1424 = vmatprep.mubr.f32.mxu0 0.0
    %1425 = vmatmul.mubr.f32.gmra.mrb[0].mxu0 %v1353
    %v1426 = vpop.f32.mrb[0].mxu0
    %v1427 = vadd.f32 0.0, %v1426
    %v1428 = vpop.f32.mrb[0].mxu0
    %1429 = vdwg.mxu0
    %s1430 = scalar_lea.vmem %s9, 256
    %v1431 = vld [vmem:[%s1430] sm:$0xff]
    %v1432 = vld [vmem:[%s1430 + $0x8] sm:$0xff]
    %v1433 = vld [vmem:[%s1430 + $0x10] sm:$0xff]
    %v1434 = vld [vmem:[%s1430 + $0x18] sm:$0xff]
    %v1435 = vld [vmem:[%s1430 + $0x20] sm:$0xff]
    %v1436 = vld [vmem:[%s1430 + $0x28] sm:$0xff]
    %v1437 = vld [vmem:[%s1430 + $0x30] sm:$0xff]
    %v1438 = vld [vmem:[%s1430 + $0x38] sm:$0xff]
    %v1439 = vld [vmem:[%s1430 + $0x40] sm:$0xff]
    %v1440 = vld [vmem:[%s1430 + $0x48] sm:$0xff]
    %v1441 = vld [vmem:[%s1430 + $0x50] sm:$0xff]
    %v1442 = vld [vmem:[%s1430 + $0x58] sm:$0xff]
    %v1443 = vld [vmem:[%s1430 + $0x60] sm:$0xff]
    %v1444 = vld [vmem:[%s1430 + $0x68] sm:$0xff]
    %v1445 = vld [vmem:[%s1430 + $0x70] sm:$0xff]
    %v1446 = vld [vmem:[%s1430 + $0x78] sm:$0xff]
    %v1447 = vld [vmem:[%s1430 + $0x80] sm:$0xff]
    %v1448 = vld [vmem:[%s1430 + $0x88] sm:$0xff]
    %v1449 = vld [vmem:[%s1430 + $0x90] sm:$0xff]
    %v1450 = vld [vmem:[%s1430 + $0x98] sm:$0xff]
    %v1451 = vld [vmem:[%s1430 + $0xa0] sm:$0xff]
    %v1452 = vld [vmem:[%s1430 + $0xa8] sm:$0xff]
    %v1453 = vld [vmem:[%s1430 + $0xb0] sm:$0xff]
    %v1454 = vld [vmem:[%s1430 + $0xb8] sm:$0xff]
    %v1455 = vld [vmem:[%s1430 + $0xc0] sm:$0xff]
    %v1456 = vld [vmem:[%s1430 + $0xc8] sm:$0xff]
    %v1457 = vld [vmem:[%s1430 + $0xd0] sm:$0xff]
    %v1458 = vld [vmem:[%s1430 + $0xd8] sm:$0xff]
    %v1459 = vld [vmem:[%s1430 + $0xe0] sm:$0xff]
    %v1460 = vld [vmem:[%s1430 + $0xe8] sm:$0xff]
    %v1461 = vld [vmem:[%s1430 + $0xf0] sm:$0xff]
    %v1462 = vld [vmem:[%s1430 + $0xf8] sm:$0xff]
    %1463 = vmatprep.subr.mxu0 %v1432
    %1464 = vmatpush1.msra.mxu0 %v1431
    %1465 = vmatprep.subr.mxu0 %v1434
    %1466 = vmatpush1.msra.mxu0 %v1433
    %1467 = vmatprep.subr.mxu0 %v1436
    %1468 = vmatpush1.msra.mxu0 %v1435
    %1469 = vmatprep.subr.mxu0 %v1438
    %1470 = vmatpush1.msra.mxu0 %v1437
    %1471 = vmatprep.subr.mxu0 %v1440
    %1472 = vmatpush1.msra.mxu0 %v1439
    %1473 = vmatprep.subr.mxu0 %v1442
    %1474 = vmatpush1.msra.mxu0 %v1441
    %1475 = vmatprep.subr.mxu0 %v1444
    %1476 = vmatpush1.msra.mxu0 %v1443
    %1477 = vmatprep.subr.mxu0 %v1446
    %1478 = vmatpush1.msra.mxu0 %v1445
    %1479 = vmatprep.subr.mxu0 %v1448
    %1480 = vmatpush1.msra.mxu0 %v1447
    %1481 = vmatprep.subr.mxu0 %v1450
    %1482 = vmatpush1.msra.mxu0 %v1449
    %1483 = vmatprep.subr.mxu0 %v1452
    %1484 = vmatpush1.msra.mxu0 %v1451
    %1485 = vmatprep.subr.mxu0 %v1454
    %1486 = vmatpush1.msra.mxu0 %v1453
    %1487 = vmatprep.subr.mxu0 %v1456
    %1488 = vmatpush1.msra.mxu0 %v1455
    %1489 = vmatprep.subr.mxu0 %v1458
    %1490 = vmatpush1.msra.mxu0 %v1457
    %1491 = vmatprep.subr.mxu0 %v1460
    %1492 = vmatpush1.msra.mxu0 %v1459
    %1493 = vmatprep.subr.mxu0 %v1462
    %1494 = vmatpush1.msra.mxu0 %v1461
    %1495 = vmatprep.subr.mxu0 0.0
    %1496 = vmatpush1.msra.mxu0 0.0
    %1497 = vmatprep.subr.mxu0 0.0
    %1498 = vmatpush1.msra.mxu0 0.0
    %1499 = vmatprep.subr.mxu0 0.0
    %1500 = vmatpush1.msra.mxu0 0.0
    %1501 = vmatprep.subr.mxu0 0.0
    %1502 = vmatpush1.msra.mxu0 0.0
    %1503 = vmatprep.subr.mxu0 0.0
    %1504 = vmatpush1.msra.mxu0 0.0
    %1505 = vmatprep.subr.mxu0 0.0
    %1506 = vmatpush1.msra.mxu0 0.0
    %1507 = vmatprep.subr.mxu0 0.0
    %1508 = vmatpush1.msra.mxu0 0.0
    %1509 = vmatprep.subr.mxu0 0.0
    %1510 = vmatpush1.msra.mxu0 0.0
    %1511 = vmatprep.subr.mxu0 0.0
    %1512 = vmatpush1.msra.mxu0 0.0
    %1513 = vmatprep.subr.mxu0 0.0
    %1514 = vmatpush1.msra.mxu0 0.0
    %1515 = vmatprep.subr.mxu0 0.0
    %1516 = vmatpush1.msra.mxu0 0.0
    %1517 = vmatprep.subr.mxu0 0.0
    %1518 = vmatpush1.msra.mxu0 0.0
    %1519 = vmatprep.subr.mxu0 0.0
    %1520 = vmatpush1.msra.mxu0 0.0
    %1521 = vmatprep.subr.mxu0 0.0
    %1522 = vmatpush1.msra.mxu0 0.0
    %1523 = vmatprep.subr.mxu0 0.0
    %1524 = vmatpush1.msra.mxu0 0.0
    %1525 = vmatprep.subr.mxu0 0.0
    %1526 = vmatpush1.msra.mxu0 0.0
    %1527 = vmatprep.mubr.f32.mxu0 0.0
    %1528 = vmatmul.mubr.f32.gmra.mrb[0].mxu0 %v1422
    %v1529 = vpop.f32.mrb[0].mxu0
    %v1530 = vadd.f32 0.0, %v1529
    %v1531 = vpop.f32.mrb[0].mxu0
    %v1532 = vadd.f32 0.0, %v1531
    %1533 = vmatprep.mubr.f32.mxu0 0.0
    %1534 = vmatmul.mubr.f32.gmra.mrb[0].mxu0 %v1427
    %v1535 = vpop.f32.mrb[0].mxu0
    %v1536 = vadd.f32 0.0, %v1535
    %v1537 = vpop.f32.mrb[0].mxu0
    %v1538 = vadd.f32 0.0, %v1537
    %1539 = vdwg.mxu0
    %1540 = vmatprep.subr.mxu0 %v1315
    %1541 = vmatpush1.msra.mxu0 %v1314
    %1542 = vmatprep.subr.mxu0 %v1317
    %1543 = vmatpush1.msra.mxu0 %v1316
    %1544 = vmatprep.subr.mxu0 %v1319
    %1545 = vmatpush1.msra.mxu0 %v1318
    %1546 = vmatprep.subr.mxu0 %v1321
    %1547 = vmatpush1.msra.mxu0 %v1320
    %1548 = vmatprep.subr.mxu0 %v1323
    %1549 = vmatpush1.msra.mxu0 %v1322
    %1550 = vmatprep.subr.mxu0 %v1325
    %1551 = vmatpush1.msra.mxu0 %v1324
    %1552 = vmatprep.subr.mxu0 %v1327
    %1553 = vmatpush1.msra.mxu0 %v1326
    %1554 = vmatprep.subr.mxu0 %v1329
    %1555 = vmatpush1.msra.mxu0 %v1328
    %1556 = vmatprep.subr.mxu0 %v1331
    %1557 = vmatpush1.msra.mxu0 %v1330
    %1558 = vmatprep.subr.mxu0 %v1333
    %1559 = vmatpush1.msra.mxu0 %v1332
    %1560 = vmatprep.subr.mxu0 %v1335
    %1561 = vmatpush1.msra.mxu0 %v1334
    %1562 = vmatprep.subr.mxu0 %v1337
    %1563 = vmatpush1.msra.mxu0 %v1336
    %1564 = vmatprep.subr.mxu0 %v1339
    %1565 = vmatpush1.msra.mxu0 %v1338
    %1566 = vmatprep.subr.mxu0 %v1341
    %1567 = vmatpush1.msra.mxu0 %v1340
    %1568 = vmatprep.subr.mxu0 %v1343
    %1569 = vmatpush1.msra.mxu0 %v1342
    %1570 = vmatprep.subr.mxu0 %v1345
    %1571 = vmatpush1.msra.mxu0 %v1344
    %1572 = vmatprep.subr.mxu0 0.0
    %1573 = vmatpush1.msra.mxu0 0.0
    %1574 = vmatprep.subr.mxu0 0.0
    %1575 = vmatpush1.msra.mxu0 0.0
    %1576 = vmatprep.subr.mxu0 0.0
    %1577 = vmatpush1.msra.mxu0 0.0
    %1578 = vmatprep.subr.mxu0 0.0
    %1579 = vmatpush1.msra.mxu0 0.0
    %1580 = vmatprep.subr.mxu0 0.0
    %1581 = vmatpush1.msra.mxu0 0.0
    %1582 = vmatprep.subr.mxu0 0.0
    %1583 = vmatpush1.msra.mxu0 0.0
    %1584 = vmatprep.subr.mxu0 0.0
    %1585 = vmatpush1.msra.mxu0 0.0
    %1586 = vmatprep.subr.mxu0 0.0
    %1587 = vmatpush1.msra.mxu0 0.0
    %1588 = vmatprep.subr.mxu0 0.0
    %1589 = vmatpush1.msra.mxu0 0.0
    %1590 = vmatprep.subr.mxu0 0.0
    %1591 = vmatpush1.msra.mxu0 0.0
    %1592 = vmatprep.subr.mxu0 0.0
    %1593 = vmatpush1.msra.mxu0 0.0
    %1594 = vmatprep.subr.mxu0 0.0
    %1595 = vmatpush1.msra.mxu0 0.0
    %1596 = vmatprep.subr.mxu0 0.0
    %1597 = vmatpush1.msra.mxu0 0.0
    %1598 = vmatprep.subr.mxu0 0.0
    %1599 = vmatpush1.msra.mxu0 0.0
    %1600 = vmatprep.subr.mxu0 0.0
    %1601 = vmatpush1.msra.mxu0 0.0
    %1602 = vmatprep.subr.mxu0 0.0
    %1603 = vmatpush1.msra.mxu0 0.0
    %1604 = vmatprep.mubr.f32.mxu0 0.0
    %1605 = vmatmul.mubr.f32.gmra.mrb[0].mxu0 %v1306
    %v1606 = vpop.f32.mrb[0].mxu0
    %v1607 = vadd.f32 %v1530, %v1606
    %v1608 = vpop.f32.mrb[0].mxu0
    %v1609 = vadd.f32 %v1532, %v1608
    %1610 = vmatprep.mubr.f32.mxu0 0.0
    %1611 = vmatmul.mubr.f32.gmra.mrb[0].mxu0 %v1311
    %v1612 = vpop.f32.mrb[0].mxu0
    %v1613 = vadd.f32 %v1536, %v1612
    %v1614 = vpop.f32.mrb[0].mxu0
    %v1615 = vadd.f32 %v1538, %v1614
    %1616 = vdwg.mxu0
    %s1617 = scalar_lea.vmem %s8, 32
    %v1618 = vld [vmem:[%s1617] sm:$0xff]
    %v1619 = vld [vmem:[%s1617 + $0x8] sm:$0xff]
    %v1621 = vsel %vm1232, %v1618, 0
    %v1624 = vsel %vm1232, %v1619, 0
    %1626 = vmatprep.subr.mxu0 0.0
    %1627 = vmatpush1.msra.mxu0 %v1226
    %1628 = vmatprep.subr.mxu0 0.0
    %1629 = vmatpush1.msra.mxu0 %v1227
    %1630 = vmatprep.subr.mxu0 0.0
    %1631 = vmatpush1.msra.mxu0 %v1228
    %1632 = vmatprep.subr.mxu0 0.0
    %1633 = vmatpush1.msra.mxu0 %v1229
    %1634 = vmatprep.subr.mxu0 0.0
    %1635 = vmatpush1.msra.mxu0 0.0
    %1636 = vmatprep.subr.mxu0 0.0
    %1637 = vmatpush1.msra.mxu0 0.0
    %1638 = vmatprep.subr.mxu0 0.0
    %1639 = vmatpush1.msra.mxu0 0.0
    %1640 = vmatprep.subr.mxu0 0.0
    %1641 = vmatpush1.msra.mxu0 0.0
    %1642 = vmatprep.subr.mxu0 0.0
    %1643 = vmatpush1.msra.mxu0 0.0
    %1644 = vmatprep.subr.mxu0 0.0
    %1645 = vmatpush1.msra.mxu0 0.0
    %1646 = vmatprep.subr.mxu0 0.0
    %1647 = vmatpush1.msra.mxu0 0.0
    %1648 = vmatprep.subr.mxu0 0.0
    %1649 = vmatpush1.msra.mxu0 0.0
    %1650 = vmatprep.subr.mxu0 0.0
    %1651 = vmatpush1.msra.mxu0 0.0
    %1652 = vmatprep.subr.mxu0 0.0
    %1653 = vmatpush1.msra.mxu0 0.0
    %1654 = vmatprep.subr.mxu0 0.0
    %1655 = vmatpush1.msra.mxu0 0.0
    %1656 = vmatprep.subr.mxu0 0.0
    %1657 = vmatpush1.msra.mxu0 0.0
    %1658 = vmatprep.subr.mxu0 0.0
    %1659 = vmatpush1.msra.mxu0 0.0
    %1660 = vmatprep.subr.mxu0 0.0
    %1661 = vmatpush1.msra.mxu0 0.0
    %1662 = vmatprep.subr.mxu0 0.0
    %1663 = vmatpush1.msra.mxu0 0.0
    %1664 = vmatprep.subr.mxu0 0.0
    %1665 = vmatpush1.msra.mxu0 0.0
    %1666 = vmatprep.subr.mxu0 0.0
    %1667 = vmatpush1.msra.mxu0 0.0
    %1668 = vmatprep.subr.mxu0 0.0
    %1669 = vmatpush1.msra.mxu0 0.0
    %1670 = vmatprep.subr.mxu0 0.0
    %1671 = vmatpush1.msra.mxu0 0.0
    %1672 = vmatprep.subr.mxu0 0.0
    %1673 = vmatpush1.msra.mxu0 0.0
    %1674 = vmatprep.subr.mxu0 0.0
    %1675 = vmatpush1.msra.mxu0 0.0
    %1676 = vmatprep.subr.mxu0 0.0
    %1677 = vmatpush1.msra.mxu0 0.0
    %1678 = vmatprep.subr.mxu0 0.0
    %1679 = vmatpush1.msra.mxu0 0.0
    %1680 = vmatprep.subr.mxu0 0.0
    %1681 = vmatpush1.msra.mxu0 0.0
    %1682 = vmatprep.subr.mxu0 0.0
    %1683 = vmatpush1.msra.mxu0 0.0
    %1684 = vmatprep.subr.mxu0 0.0
    %1685 = vmatpush1.msra.mxu0 0.0
    %1686 = vmatprep.subr.mxu0 0.0
    %1687 = vmatpush1.msra.mxu0 0.0
    %1688 = vmatprep.subr.mxu0 0.0
    %1689 = vmatpush1.msra.mxu0 0.0
    %1690 = vmatprep.mubr.f32.mxu0 0.0
    %1691 = vmatmul.mubr.f32.gmra.mrb[0].mxu0 %v1621
    %v1692 = vpop.f32.mrb[0].mxu0
    %v1693 = vadd.f32 0.0, %v1692
    %v1694 = vpop.f32.mrb[0].mxu0
    %1695 = vmatprep.mubr.f32.mxu0 0.0
    %1696 = vmatmul.mubr.f32.gmra.mrb[0].mxu0 %v1624
    %v1697 = vpop.f32.mrb[0].mxu0
    %v1698 = vadd.f32 0.0, %v1697
    %v1699 = vpop.f32.mrb[0].mxu0
    %1700 = vdwg.mxu0
    %s1701 = scalar_lea.vmem %s9, 512
    %v1702 = vld [vmem:[%s1701] sm:$0xff]
    %v1703 = vld [vmem:[%s1701 + $0x8] sm:$0xff]
    %v1704 = vld [vmem:[%s1701 + $0x10] sm:$0xff]
    %v1705 = vld [vmem:[%s1701 + $0x18] sm:$0xff]
    %v1706 = vld [vmem:[%s1701 + $0x20] sm:$0xff]
    %v1707 = vld [vmem:[%s1701 + $0x28] sm:$0xff]
    %v1708 = vld [vmem:[%s1701 + $0x30] sm:$0xff]
    %v1709 = vld [vmem:[%s1701 + $0x38] sm:$0xff]
    %v1710 = vld [vmem:[%s1701 + $0x40] sm:$0xff]
    %v1711 = vld [vmem:[%s1701 + $0x48] sm:$0xff]
    %v1712 = vld [vmem:[%s1701 + $0x50] sm:$0xff]
    %v1713 = vld [vmem:[%s1701 + $0x58] sm:$0xff]
    %v1714 = vld [vmem:[%s1701 + $0x60] sm:$0xff]
    %v1715 = vld [vmem:[%s1701 + $0x68] sm:$0xff]
    %v1716 = vld [vmem:[%s1701 + $0x70] sm:$0xff]
    %v1717 = vld [vmem:[%s1701 + $0x78] sm:$0xff]
    %v1718 = vld [vmem:[%s1701 + $0x80] sm:$0xff]
    %v1719 = vld [vmem:[%s1701 + $0x88] sm:$0xff]
    %v1720 = vld [vmem:[%s1701 + $0x90] sm:$0xff]
    %v1721 = vld [vmem:[%s1701 + $0x98] sm:$0xff]
    %v1722 = vld [vmem:[%s1701 + $0xa0] sm:$0xff]
    %v1723 = vld [vmem:[%s1701 + $0xa8] sm:$0xff]
    %v1724 = vld [vmem:[%s1701 + $0xb0] sm:$0xff]
    %v1725 = vld [vmem:[%s1701 + $0xb8] sm:$0xff]
    %v1726 = vld [vmem:[%s1701 + $0xc0] sm:$0xff]
    %v1727 = vld [vmem:[%s1701 + $0xc8] sm:$0xff]
    %v1728 = vld [vmem:[%s1701 + $0xd0] sm:$0xff]
    %v1729 = vld [vmem:[%s1701 + $0xd8] sm:$0xff]
    %v1730 = vld [vmem:[%s1701 + $0xe0] sm:$0xff]
    %v1731 = vld [vmem:[%s1701 + $0xe8] sm:$0xff]
    %v1732 = vld [vmem:[%s1701 + $0xf0] sm:$0xff]
    %v1733 = vld [vmem:[%s1701 + $0xf8] sm:$0xff]
    %1734 = vmatprep.subr.mxu0 %v1703
    %1735 = vmatpush1.msra.mxu0 %v1702
    %1736 = vmatprep.subr.mxu0 %v1705
    %1737 = vmatpush1.msra.mxu0 %v1704
    %1738 = vmatprep.subr.mxu0 %v1707
    %1739 = vmatpush1.msra.mxu0 %v1706
    %1740 = vmatprep.subr.mxu0 %v1709
    %1741 = vmatpush1.msra.mxu0 %v1708
    %1742 = vmatprep.subr.mxu0 %v1711
    %1743 = vmatpush1.msra.mxu0 %v1710
    %1744 = vmatprep.subr.mxu0 %v1713
    %1745 = vmatpush1.msra.mxu0 %v1712
    %1746 = vmatprep.subr.mxu0 %v1715
    %1747 = vmatpush1.msra.mxu0 %v1714
    %1748 = vmatprep.subr.mxu0 %v1717
    %1749 = vmatpush1.msra.mxu0 %v1716
    %1750 = vmatprep.subr.mxu0 %v1719
    %1751 = vmatpush1.msra.mxu0 %v1718
    %1752 = vmatprep.subr.mxu0 %v1721
    %1753 = vmatpush1.msra.mxu0 %v1720
    %1754 = vmatprep.subr.mxu0 %v1723
    %1755 = vmatpush1.msra.mxu0 %v1722
    %1756 = vmatprep.subr.mxu0 %v1725
    %1757 = vmatpush1.msra.mxu0 %v1724
    %1758 = vmatprep.subr.mxu0 %v1727
    %1759 = vmatpush1.msra.mxu0 %v1726
    %1760 = vmatprep.subr.mxu0 %v1729
    %1761 = vmatpush1.msra.mxu0 %v1728
    %1762 = vmatprep.subr.mxu0 %v1731
    %1763 = vmatpush1.msra.mxu0 %v1730
    %1764 = vmatprep.subr.mxu0 %v1733
    %1765 = vmatpush1.msra.mxu0 %v1732
    %1766 = vmatprep.subr.mxu0 0.0
    %1767 = vmatpush1.msra.mxu0 0.0
    %1768 = vmatprep.subr.mxu0 0.0
    %1769 = vmatpush1.msra.mxu0 0.0
    %1770 = vmatprep.subr.mxu0 0.0
    %1771 = vmatpush1.msra.mxu0 0.0
    %1772 = vmatprep.subr.mxu0 0.0
    %1773 = vmatpush1.msra.mxu0 0.0
    %1774 = vmatprep.subr.mxu0 0.0
    %1775 = vmatpush1.msra.mxu0 0.0
    %1776 = vmatprep.subr.mxu0 0.0
    %1777 = vmatpush1.msra.mxu0 0.0
    %1778 = vmatprep.subr.mxu0 0.0
    %1779 = vmatpush1.msra.mxu0 0.0
    %1780 = vmatprep.subr.mxu0 0.0
    %1781 = vmatpush1.msra.mxu0 0.0
    %1782 = vmatprep.subr.mxu0 0.0
    %1783 = vmatpush1.msra.mxu0 0.0
    %1784 = vmatprep.subr.mxu0 0.0
    %1785 = vmatpush1.msra.mxu0 0.0
    %1786 = vmatprep.subr.mxu0 0.0
    %1787 = vmatpush1.msra.mxu0 0.0
    %1788 = vmatprep.subr.mxu0 0.0
    %1789 = vmatpush1.msra.mxu0 0.0
    %1790 = vmatprep.subr.mxu0 0.0
    %1791 = vmatpush1.msra.mxu0 0.0
    %1792 = vmatprep.subr.mxu0 0.0
    %1793 = vmatpush1.msra.mxu0 0.0
    %1794 = vmatprep.subr.mxu0 0.0
    %1795 = vmatpush1.msra.mxu0 0.0
    %1796 = vmatprep.subr.mxu0 0.0
    %1797 = vmatpush1.msra.mxu0 0.0
    %1798 = vmatprep.mubr.f32.mxu0 0.0
    %1799 = vmatmul.mubr.f32.gmra.mrb[0].mxu0 %v1693
    %v1800 = vpop.f32.mrb[0].mxu0
    %v1801 = vadd.f32 0.0, %v1800
    %v1802 = vpop.f32.mrb[0].mxu0
    %v1803 = vadd.f32 0.0, %v1802
    %1804 = vmatprep.mubr.f32.mxu0 0.0
    %1805 = vmatmul.mubr.f32.gmra.mrb[0].mxu0 %v1698
    %v1806 = vpop.f32.mrb[0].mxu0
    %v1807 = vadd.f32 0.0, %v1806
    %v1808 = vpop.f32.mrb[0].mxu0
    %v1809 = vadd.f32 0.0, %v1808
    %1810 = vdwg.mxu0
    %v1811 = vadd.f32 %v1607, %v1801
    %v1812 = vadd.f32 %v1609, %v1803
    %v1813 = vadd.f32 %v1613, %v1807
    %v1814 = vadd.f32 %v1615, %v1809
    %s1815 = scalar_lea.vmem %s8, 48
    %v1816 = vld [vmem:[%s1815] sm:$0xff]
    %v1817 = vld [vmem:[%s1815 + $0x8] sm:$0xff]
    %v1819 = vsel %vm1232, %v1816, 0
    %v1822 = vsel %vm1232, %v1817, 0
    %1824 = vmatprep.subr.mxu0 0.0
    %1825 = vmatpush1.msra.mxu0 %v1226
    %1826 = vmatprep.subr.mxu0 0.0
    %1827 = vmatpush1.msra.mxu0 %v1227
    %1828 = vmatprep.subr.mxu0 0.0
    %1829 = vmatpush1.msra.mxu0 %v1228
    %1830 = vmatprep.subr.mxu0 0.0
    %1831 = vmatpush1.msra.mxu0 %v1229
    %1832 = vmatprep.subr.mxu0 0.0
    %1833 = vmatpush1.msra.mxu0 0.0
    %1834 = vmatprep.subr.mxu0 0.0
    %1835 = vmatpush1.msra.mxu0 0.0
    %1836 = vmatprep.subr.mxu0 0.0
    %1837 = vmatpush1.msra.mxu0 0.0
    %1838 = vmatprep.subr.mxu0 0.0
    %1839 = vmatpush1.msra.mxu0 0.0
    %1840 = vmatprep.subr.mxu0 0.0
    %1841 = vmatpush1.msra.mxu0 0.0
    %1842 = vmatprep.subr.mxu0 0.0
    %1843 = vmatpush1.msra.mxu0 0.0
    %1844 = vmatprep.subr.mxu0 0.0
    %1845 = vmatpush1.msra.mxu0 0.0
    %1846 = vmatprep.subr.mxu0 0.0
    %1847 = vmatpush1.msra.mxu0 0.0
    %1848 = vmatprep.subr.mxu0 0.0
    %1849 = vmatpush1.msra.mxu0 0.0
    %1850 = vmatprep.subr.mxu0 0.0
    %1851 = vmatpush1.msra.mxu0 0.0
    %1852 = vmatprep.subr.mxu0 0.0
    %1853 = vmatpush1.msra.mxu0 0.0
    %1854 = vmatprep.subr.mxu0 0.0
    %1855 = vmatpush1.msra.mxu0 0.0
    %1856 = vmatprep.subr.mxu0 0.0
    %1857 = vmatpush1.msra.mxu0 0.0
    %1858 = vmatprep.subr.mxu0 0.0
    %1859 = vmatpush1.msra.mxu0 0.0
    %1860 = vmatprep.subr.mxu0 0.0
    %1861 = vmatpush1.msra.mxu0 0.0
    %1862 = vmatprep.subr.mxu0 0.0
    %1863 = vmatpush1.msra.mxu0 0.0
    %1864 = vmatprep.subr.mxu0 0.0
    %1865 = vmatpush1.msra.mxu0 0.0
    %1866 = vmatprep.subr.mxu0 0.0
    %1867 = vmatpush1.msra.mxu0 0.0
    %1868 = vmatprep.subr.mxu0 0.0
    %1869 = vmatpush1.msra.mxu0 0.0
    %1870 = vmatprep.subr.mxu0 0.0
    %1871 = vmatpush1.msra.mxu0 0.0
    %1872 = vmatprep.subr.mxu0 0.0
    %1873 = vmatpush1.msra.mxu0 0.0
    %1874 = vmatprep.subr.mxu0 0.0
    %1875 = vmatpush1.msra.mxu0 0.0
    %1876 = vmatprep.subr.mxu0 0.0
    %1877 = vmatpush1.msra.mxu0 0.0
    %1878 = vmatprep.subr.mxu0 0.0
    %1879 = vmatpush1.msra.mxu0 0.0
    %1880 = vmatprep.subr.mxu0 0.0
    %1881 = vmatpush1.msra.mxu0 0.0
    %1882 = vmatprep.subr.mxu0 0.0
    %1883 = vmatpush1.msra.mxu0 0.0
    %1884 = vmatprep.subr.mxu0 0.0
    %1885 = vmatpush1.msra.mxu0 0.0
    %1886 = vmatprep.subr.mxu0 0.0
    %1887 = vmatpush1.msra.mxu0 0.0
    %1888 = vmatprep.mubr.f32.mxu0 0.0
    %1889 = vmatmul.mubr.f32.gmra.mrb[0].mxu0 %v1819
    %v1890 = vpop.f32.mrb[0].mxu0
    %v1891 = vadd.f32 0.0, %v1890
    %v1892 = vpop.f32.mrb[0].mxu0
    %1893 = vmatprep.mubr.f32.mxu0 0.0
    %1894 = vmatmul.mubr.f32.gmra.mrb[0].mxu0 %v1822
    %v1895 = vpop.f32.mrb[0].mxu0
    %v1896 = vadd.f32 0.0, %v1895
    %v1897 = vpop.f32.mrb[0].mxu0
    %1898 = vdwg.mxu0
    %s1899 = scalar_lea.vmem %s9, 768
    %v1900 = vld [vmem:[%s1899] sm:$0xff]
    %v1901 = vld [vmem:[%s1899 + $0x8] sm:$0xff]
    %v1902 = vld [vmem:[%s1899 + $0x10] sm:$0xff]
    %v1903 = vld [vmem:[%s1899 + $0x18] sm:$0xff]
    %v1904 = vld [vmem:[%s1899 + $0x20] sm:$0xff]
    %v1905 = vld [vmem:[%s1899 + $0x28] sm:$0xff]
    %v1906 = vld [vmem:[%s1899 + $0x30] sm:$0xff]
    %v1907 = vld [vmem:[%s1899 + $0x38] sm:$0xff]
    %v1908 = vld [vmem:[%s1899 + $0x40] sm:$0xff]
    %v1909 = vld [vmem:[%s1899 + $0x48] sm:$0xff]
    %v1910 = vld [vmem:[%s1899 + $0x50] sm:$0xff]
    %v1911 = vld [vmem:[%s1899 + $0x58] sm:$0xff]
    %v1912 = vld [vmem:[%s1899 + $0x60] sm:$0xff]
    %v1913 = vld [vmem:[%s1899 + $0x68] sm:$0xff]
    %v1914 = vld [vmem:[%s1899 + $0x70] sm:$0xff]
    %v1915 = vld [vmem:[%s1899 + $0x78] sm:$0xff]
    %v1916 = vld [vmem:[%s1899 + $0x80] sm:$0xff]
    %v1917 = vld [vmem:[%s1899 + $0x88] sm:$0xff]
    %v1918 = vld [vmem:[%s1899 + $0x90] sm:$0xff]
    %v1919 = vld [vmem:[%s1899 + $0x98] sm:$0xff]
    %v1920 = vld [vmem:[%s1899 + $0xa0] sm:$0xff]
    %v1921 = vld [vmem:[%s1899 + $0xa8] sm:$0xff]
    %v1922 = vld [vmem:[%s1899 + $0xb0] sm:$0xff]
    %v1923 = vld [vmem:[%s1899 + $0xb8] sm:$0xff]
    %v1924 = vld [vmem:[%s1899 + $0xc0] sm:$0xff]
    %v1925 = vld [vmem:[%s1899 + $0xc8] sm:$0xff]
    %v1926 = vld [vmem:[%s1899 + $0xd0] sm:$0xff]
    %v1927 = vld [vmem:[%s1899 + $0xd8] sm:$0xff]
    %v1928 = vld [vmem:[%s1899 + $0xe0] sm:$0xff]
    %v1929 = vld [vmem:[%s1899 + $0xe8] sm:$0xff]
    %v1930 = vld [vmem:[%s1899 + $0xf0] sm:$0xff]
    %v1931 = vld [vmem:[%s1899 + $0xf8] sm:$0xff]
    %1932 = vmatprep.subr.mxu0 %v1901
    %1933 = vmatpush1.msra.mxu0 %v1900
    %1934 = vmatprep.subr.mxu0 %v1903
    %1935 = vmatpush1.msra.mxu0 %v1902
    %1936 = vmatprep.subr.mxu0 %v1905
    %1937 = vmatpush1.msra.mxu0 %v1904
    %1938 = vmatprep.subr.mxu0 %v1907
    %1939 = vmatpush1.msra.mxu0 %v1906
    %1940 = vmatprep.subr.mxu0 %v1909
    %1941 = vmatpush1.msra.mxu0 %v1908
    %1942 = vmatprep.subr.mxu0 %v1911
    %1943 = vmatpush1.msra.mxu0 %v1910
    %1944 = vmatprep.subr.mxu0 %v1913
    %1945 = vmatpush1.msra.mxu0 %v1912
    %1946 = vmatprep.subr.mxu0 %v1915
    %1947 = vmatpush1.msra.mxu0 %v1914
    %1948 = vmatprep.subr.mxu0 %v1917
    %1949 = vmatpush1.msra.mxu0 %v1916
    %1950 = vmatprep.subr.mxu0 %v1919
    %1951 = vmatpush1.msra.mxu0 %v1918
    %1952 = vmatprep.subr.mxu0 %v1921
    %1953 = vmatpush1.msra.mxu0 %v1920
    %1954 = vmatprep.subr.mxu0 %v1923
    %1955 = vmatpush1.msra.mxu0 %v1922
    %1956 = vmatprep.subr.mxu0 %v1925
    %1957 = vmatpush1.msra.mxu0 %v1924
    %1958 = vmatprep.subr.mxu0 %v1927
    %1959 = vmatpush1.msra.mxu0 %v1926
    %1960 = vmatprep.subr.mxu0 %v1929
    %1961 = vmatpush1.msra.mxu0 %v1928
    %1962 = vmatprep.subr.mxu0 %v1931
    %1963 = vmatpush1.msra.mxu0 %v1930
    %1964 = vmatprep.subr.mxu0 0.0
    %1965 = vmatpush1.msra.mxu0 0.0
    %1966 = vmatprep.subr.mxu0 0.0
    %1967 = vmatpush1.msra.mxu0 0.0
    %1968 = vmatprep.subr.mxu0 0.0
    %1969 = vmatpush1.msra.mxu0 0.0
    %1970 = vmatprep.subr.mxu0 0.0
    %1971 = vmatpush1.msra.mxu0 0.0
    %1972 = vmatprep.subr.mxu0 0.0
    %1973 = vmatpush1.msra.mxu0 0.0
    %1974 = vmatprep.subr.mxu0 0.0
    %1975 = vmatpush1.msra.mxu0 0.0
    %1976 = vmatprep.subr.mxu0 0.0
    %1977 = vmatpush1.msra.mxu0 0.0
    %1978 = vmatprep.subr.mxu0 0.0
    %1979 = vmatpush1.msra.mxu0 0.0
    %1980 = vmatprep.subr.mxu0 0.0
    %1981 = vmatpush1.msra.mxu0 0.0
    %1982 = vmatprep.subr.mxu0 0.0
    %1983 = vmatpush1.msra.mxu0 0.0
    %1984 = vmatprep.subr.mxu0 0.0
    %1985 = vmatpush1.msra.mxu0 0.0
    %1986 = vmatprep.subr.mxu0 0.0
    %1987 = vmatpush1.msra.mxu0 0.0
    %1988 = vmatprep.subr.mxu0 0.0
    %1989 = vmatpush1.msra.mxu0 0.0
    %1990 = vmatprep.subr.mxu0 0.0
    %1991 = vmatpush1.msra.mxu0 0.0
    %1992 = vmatprep.subr.mxu0 0.0
    %1993 = vmatpush1.msra.mxu0 0.0
    %1994 = vmatprep.subr.mxu0 0.0
    %1995 = vmatpush1.msra.mxu0 0.0
    %1996 = vmatprep.mubr.f32.mxu0 0.0
    %1997 = vmatmul.mubr.f32.gmra.mrb[0].mxu0 %v1891
    %v1998 = vpop.f32.mrb[0].mxu0
    %v1999 = vadd.f32 0.0, %v1998
    %v2000 = vpop.f32.mrb[0].mxu0
    %v2001 = vadd.f32 0.0, %v2000
    %2002 = vmatprep.mubr.f32.mxu0 0.0
    %2003 = vmatmul.mubr.f32.gmra.mrb[0].mxu0 %v1896
    %v2004 = vpop.f32.mrb[0].mxu0
    %v2005 = vadd.f32 0.0, %v2004
    %v2006 = vpop.f32.mrb[0].mxu0
    %v2007 = vadd.f32 0.0, %v2006
    %2008 = vdwg.mxu0
    %v2009 = vadd.f32 %v1811, %v1999
    %v2010 = vadd.f32 %v1812, %v2001
    %v2011 = vadd.f32 %v1813, %v2005
    %v2012 = vadd.f32 %v1814, %v2007
    %v2013 = vld [vmem:[%s10] sm:$0x3]
    %v2014 = vld [vmem:[%s11] sm:$0x3]
    %v2015 = vadd.f32 %v2009, %v2011
    %v2016 = vrot.slane %v2015, 4
    %v2017 = vadd.f32 %v2015, %v2016
    %v2018 = vrot.slane %v2017, 2
    %v2019 = vadd.f32 %v2017, %v2018
    %v2020 = vrot.slane %v2019, 1
    %v2021 = vadd.f32 %v2019, %v2020
    %v2022 = vadd.f32 %v2010, %v2012
    %v2023 = vrot.slane %v2022, 4
    %v2024 = vadd.f32 %v2022, %v2023
    %v2025 = vrot.slane %v2024, 2
    %v2026 = vadd.f32 %v2024, %v2025
    %v2027 = vrot.slane %v2026, 1
    %v2028 = vadd.f32 %v2026, %v2027
    %v2029 = vrcp.pop 16.0
    %v2030 = vmul.f32 %v2021, %v2029
    %v2031 = vmul.f32 %v2028, %v2029
    %v2032 = vsub.f32 %v2009, %v2030
    %v2033 = vsub.f32 %v2010, %v2031
    %v2034 = vsub.f32 %v2011, %v2030
    %v2035 = vsub.f32 %v2012, %v2031
    %v2036 = vmul.f32 %v2032, %v2032
    %v2037 = vmul.f32 %v2033, %v2033
    %v2038 = vmul.f32 %v2034, %v2034
    %v2039 = vmul.f32 %v2035, %v2035
    %v2040 = vadd.f32 %v2036, %v2038
    %v2041 = vrot.slane %v2040, 4
    %v2042 = vadd.f32 %v2040, %v2041
    %v2043 = vrot.slane %v2042, 2
    %v2044 = vadd.f32 %v2042, %v2043
    %v2045 = vrot.slane %v2044, 1
    %v2046 = vadd.f32 %v2044, %v2045
    %v2047 = vadd.f32 %v2037, %v2039
    %v2048 = vrot.slane %v2047, 4
    %v2049 = vadd.f32 %v2047, %v2048
    %v2050 = vrot.slane %v2049, 2
    %v2051 = vadd.f32 %v2049, %v2050
    %v2052 = vrot.slane %v2051, 1
    %v2053 = vadd.f32 %v2051, %v2052
    %v2054 = vmul.f32 %v2046, %v2029
    %v2055 = vmul.f32 %v2053, %v2029
    %v2056 = vadd.f32 %v2054, 1e-05
    %v2057 = vadd.f32 %v2055, 1e-05
    %v2058 = vrsqrt.pop %v2056
    %v2059 = vrsqrt.pop %v2057
    %v2062 = vcombine.low %v2058, %v2059
    %v2064 = vunpack.c.l.s4 1966171168
    %v2065 = vunpack.c.0.s8 %v2064
    %v2066 = vlaneseq
    %v2067 = vshrl.u32 %v2066, 7
    %v2068 = vsub.s32 %v2065, %v2067
    %v2069 = vrot.slane %v2062, %v2068
    %v2071 = vunpack.c.l.s4 1966171168
    %v2072 = vunpack.c.0.s8 %v2071
    %v2073 = vlaneseq
    %v2074 = vshrl.u32 %v2073, 7
    %v2075 = vsub.s32 %v2072, %v2074
    %v2076 = vrot.slane %v2069, %v2075
    %v2078 = vmul.f32 %v2013, %v2076
    %v2080 = vlaneseq
    %v2081 = vshrl.u32 %v2080, 7
    %v2082 = vsub.s32 0, %v2081
    %v2083 = vrot.slane %v2078, %v2082
    %v2084 = vlaneseq
    %v2085 = vshrl.u32 %v2084, 7
    %v2086 = vsub.s32 1, %v2085
    %v2087 = vrot.slane %v2078, %v2086
    %v2090 = vmul.f32 %v2030, %v2083
    %v2091 = vmul.f32 %v2031, %v2087
    %v2094 = vcombine.low %v2090, %v2091
    %v2096 = vunpack.c.l.s4 1966171168
    %v2097 = vunpack.c.0.s8 %v2096
    %v2098 = vlaneseq
    %v2099 = vshrl.u32 %v2098, 7
    %v2100 = vsub.s32 %v2097, %v2099
    %v2101 = vrot.slane %v2094, %v2100
    %v2103 = vunpack.c.l.s4 1966171168
    %v2104 = vunpack.c.0.s8 %v2103
    %v2105 = vlaneseq
    %v2106 = vshrl.u32 %v2105, 7
    %v2107 = vsub.s32 %v2104, %v2106
    %v2108 = vrot.slane %v2101, %v2107
    %v2110 = vsub.f32 %v2014, %v2108
    %v2111 = vmul.f32 %v2009, %v2083
    %v2112 = vmul.f32 %v2010, %v2087
    %v2113 = vmul.f32 %v2011, %v2083
    %v2114 = vmul.f32 %v2012, %v2087
    %v2116 = vlaneseq
    %v2117 = vshrl.u32 %v2116, 7
    %v2118 = vsub.s32 0, %v2117
    %v2119 = vrot.slane %v2110, %v2118
    %v2120 = vlaneseq
    %v2121 = vshrl.u32 %v2120, 7
    %v2122 = vsub.s32 1, %v2121
    %v2123 = vrot.slane %v2110, %v2122
    %v2126 = vadd.f32 %v2111, %v2119
    %v2127 = vadd.f32 %v2112, %v2123
    %v2128 = vadd.f32 %v2113, %v2119
    %v2129 = vadd.f32 %v2114, %v2123
    %v2130 = vmax.f32 %v2126, 0.0
    %v2131 = vmax.f32 %v2127, 0.0
    %v2132 = vmax.f32 %v2128, 0.0
    %v2133 = vmax.f32 %v2129, 0.0
    %v2134 = vld [vmem:[%s12] sm:$0x3]
    %vm2135 = vcmask 130048
    %v2137 = vsel %vm2135, %v2134, 0
    %2139 = vmatprep.subr.mxu0 %v2131
    %2140 = vmatpush1.msra.mxu0 %v2130
    %2141 = vmatprep.subr.mxu0 %v2133
    %2142 = vmatpush1.msra.mxu0 %v2132
    %2143 = vmatprep.subr.mxu0 0.0
    %2144 = vmatpush1.msra.mxu0 0.0
    %2145 = vmatprep.subr.mxu0 0.0
    %2146 = vmatpush1.msra.mxu0 0.0
    %2147 = vmatprep.subr.mxu0 0.0
    %2148 = vmatpush1.msra.mxu0 0.0
    %2149 = vmatprep.subr.mxu0 0.0
    %2150 = vmatpush1.msra.mxu0 0.0
    %2151 = vmatprep.subr.mxu0 0.0
    %2152 = vmatpush1.msra.mxu0 0.0
    %2153 = vmatprep.subr.mxu0 0.0
    %2154 = vmatpush1.msra.mxu0 0.0
    %2155 = vmatprep.subr.mxu0 0.0
    %2156 = vmatpush1.msra.mxu0 0.0
    %2157 = vmatprep.subr.mxu0 0.0
    %2158 = vmatpush1.msra.mxu0 0.0
    %2159 = vmatprep.subr.mxu0 0.0
    %2160 = vmatpush1.msra.mxu0 0.0
    %2161 = vmatprep.subr.mxu0 0.0
    %2162 = vmatpush1.msra.mxu0 0.0
    %2163 = vmatprep.subr.mxu0 0.0
    %2164 = vmatpush1.msra.mxu0 0.0
    %2165 = vmatprep.subr.mxu0 0.0
    %2166 = vmatpush1.msra.mxu0 0.0
    %2167 = vmatprep.subr.mxu0 0.0
    %2168 = vmatpush1.msra.mxu0 0.0
    %2169 = vmatprep.subr.mxu0 0.0
    %2170 = vmatpush1.msra.mxu0 0.0
    %2171 = vmatprep.subr.mxu0 0.0
    %2172 = vmatpush1.msra.mxu0 0.0
    %2173 = vmatprep.subr.mxu0 0.0
    %2174 = vmatpush1.msra.mxu0 0.0
    %2175 = vmatprep.subr.mxu0 0.0
    %2176 = vmatpush1.msra.mxu0 0.0
    %2177 = vmatprep.subr.mxu0 0.0
    %2178 = vmatpush1.msra.mxu0 0.0
    %2179 = vmatprep.subr.mxu0 0.0
    %2180 = vmatpush1.msra.mxu0 0.0
    %2181 = vmatprep.subr.mxu0 0.0
    %2182 = vmatpush1.msra.mxu0 0.0
    %2183 = vmatprep.subr.mxu0 0.0
    %2184 = vmatpush1.msra.mxu0 0.0
    %2185 = vmatprep.subr.mxu0 0.0
    %2186 = vmatpush1.msra.mxu0 0.0
    %2187 = vmatprep.subr.mxu0 0.0
    %2188 = vmatpush1.msra.mxu0 0.0
    %2189 = vmatprep.subr.mxu0 0.0
    %2190 = vmatpush1.msra.mxu0 0.0
    %2191 = vmatprep.subr.mxu0 0.0
    %2192 = vmatpush1.msra.mxu0 0.0
    %2193 = vmatprep.subr.mxu0 0.0
    %2194 = vmatpush1.msra.mxu0 0.0
    %2195 = vmatprep.subr.mxu0 0.0
    %2196 = vmatpush1.msra.mxu0 0.0
    %2197 = vmatprep.subr.mxu0 0.0
    %2198 = vmatpush1.msra.mxu0 0.0
    %2199 = vmatprep.subr.mxu0 0.0
    %2200 = vmatpush1.msra.mxu0 0.0
    %2201 = vmatprep.subr.mxu0 0.0
    %2202 = vmatpush1.msra.mxu0 0.0
    %2203 = vmatprep.mubr.f32.mxu0 0.0
    %2204 = vmatmul.mubr.f32.gmra.mrb[0].mxu0 %v2137
    %v2205 = vpop.f32.mrb[0].mxu0
    %v2206 = vadd.f32 0.0, %v2205
    %v2207 = vpop.f32.mrb[0].mxu0
    %v2208 = vadd.f32 0.0, %v2207
    %2209 = vdwg.mxu0
    %v2210 = vld [vmem:[#allocation7] sm:$0xff]
    %v2211 = vld [vmem:[#allocation7 + $0x8] sm:$0xff]
    %v2212 = vld [vmem:[#allocation7 + $0x10] sm:$0xff]
    %v2213 = vld [vmem:[#allocation7 + $0x18] sm:$0xff]
    %v2214 = vld [vmem:[#allocation7 + $0x20] sm:$0xff]
    %v2215 = vld [vmem:[#allocation7 + $0x28] sm:$0xff]
    %v2216 = vld [vmem:[#allocation7 + $0x30] sm:$0xff]
    %v2217 = vld [vmem:[#allocation7 + $0x38] sm:$0xff]
    %v2218 = vld [vmem:[#allocation7 + $0x40] sm:$0xff]
    %v2219 = vld [vmem:[#allocation7 + $0x48] sm:$0xff]
    %v2220 = vld [vmem:[#allocation7 + $0x50] sm:$0xff]
    %v2221 = vld [vmem:[#allocation7 + $0x58] sm:$0xff]
    %v2222 = vld [vmem:[#allocation7 + $0x60] sm:$0xff]
    %v2223 = vld [vmem:[#allocation7 + $0x68] sm:$0xff]
    %v2224 = vld [vmem:[#allocation7 + $0x70] sm:$0xff]
    %v2225 = vld [vmem:[#allocation7 + $0x78] sm:$0xff]
    %v2226 = vld [vmem:[#allocation7 + $0x80] sm:$0xff]
    %v2227 = vld [vmem:[#allocation7 + $0x88] sm:$0xff]
    %v2228 = vld [vmem:[#allocation7 + $0x90] sm:$0xff]
    %v2229 = vld [vmem:[#allocation7 + $0x98] sm:$0xff]
    %v2230 = vld [vmem:[#allocation7 + $0xa0] sm:$0xff]
    %v2231 = vld [vmem:[#allocation7 + $0xa8] sm:$0xff]
    %v2232 = vld [vmem:[#allocation7 + $0xb0] sm:$0xff]
    %v2233 = vld [vmem:[#allocation7 + $0xb8] sm:$0xff]
    %v2234 = vld [vmem:[#allocation7 + $0xc0] sm:$0xff]
    %v2235 = vld [vmem:[#allocation7 + $0xc8] sm:$0xff]
    %v2236 = vld [vmem:[#allocation7 + $0xd0] sm:$0xff]
    %v2237 = vld [vmem:[#allocation7 + $0xd8] sm:$0xff]
    %v2238 = vld [vmem:[#allocation7 + $0xe0] sm:$0xff]
    %v2239 = vld [vmem:[#allocation7 + $0xe8] sm:$0xff]
    %v2240 = vld [vmem:[#allocation7 + $0xf0] sm:$0xff]
    %v2241 = vld [vmem:[#allocation7 + $0xf8] sm:$0xff]
    %s2242 = scalar_lea.vmem %s12, 2
    %v2243 = vld [vmem:[%s2242] sm:$0x3]
    %v2245 = vsel %vm2135, %v2243, 0
    %2247 = vmatprep.subr.mxu0 %v2131
    %2248 = vmatpush1.msra.mxu0 %v2130
    %2249 = vmatprep.subr.mxu0 %v2133
    %2250 = vmatpush1.msra.mxu0 %v2132
    %2251 = vmatprep.subr.mxu0 0.0
    %2252 = vmatpush1.msra.mxu0 0.0
    %2253 = vmatprep.subr.mxu0 0.0
    %2254 = vmatpush1.msra.mxu0 0.0
    %2255 = vmatprep.subr.mxu0 0.0
    %2256 = vmatpush1.msra.mxu0 0.0
    %2257 = vmatprep.subr.mxu0 0.0
    %2258 = vmatpush1.msra.mxu0 0.0
    %2259 = vmatprep.subr.mxu0 0.0
    %2260 = vmatpush1.msra.mxu0 0.0
    %2261 = vmatprep.subr.mxu0 0.0
    %2262 = vmatpush1.msra.mxu0 0.0
    %2263 = vmatprep.subr.mxu0 0.0
    %2264 = vmatpush1.msra.mxu0 0.0
    %2265 = vmatprep.subr.mxu0 0.0
    %2266 = vmatpush1.msra.mxu0 0.0
    %2267 = vmatprep.subr.mxu0 0.0
    %2268 = vmatpush1.msra.mxu0 0.0
    %2269 = vmatprep.subr.mxu0 0.0
    %2270 = vmatpush1.msra.mxu0 0.0
    %2271 = vmatprep.subr.mxu0 0.0
    %2272 = vmatpush1.msra.mxu0 0.0
    %2273 = vmatprep.subr.mxu0 0.0
    %2274 = vmatpush1.msra.mxu0 0.0
    %2275 = vmatprep.subr.mxu0 0.0
    %2276 = vmatpush1.msra.mxu0 0.0
    %2277 = vmatprep.subr.mxu0 0.0
    %2278 = vmatpush1.msra.mxu0 0.0
    %2279 = vmatprep.subr.mxu0 0.0
    %2280 = vmatpush1.msra.mxu0 0.0
    %2281 = vmatprep.subr.mxu0 0.0
    %2282 = vmatpush1.msra.mxu0 0.0
    %2283 = vmatprep.subr.mxu0 0.0
    %2284 = vmatpush1.msra.mxu0 0.0
    %2285 = vmatprep.subr.mxu0 0.0
    %2286 = vmatpush1.msra.mxu0 0.0
    %2287 = vmatprep.subr.mxu0 0.0
    %2288 = vmatpush1.msra.mxu0 0.0
    %2289 = vmatprep.subr.mxu0 0.0
    %2290 = vmatpush1.msra.mxu0 0.0
    %2291 = vmatprep.subr.mxu0 0.0
    %2292 = vmatpush1.msra.mxu0 0.0
    %2293 = vmatprep.subr.mxu0 0.0
    %2294 = vmatpush1.msra.mxu0 0.0
    %2295 = vmatprep.subr.mxu0 0.0
    %2296 = vmatpush1.msra.mxu0 0.0
    %2297 = vmatprep.subr.mxu0 0.0
    %2298 = vmatpush1.msra.mxu0 0.0
    %2299 = vmatprep.subr.mxu0 0.0
    %2300 = vmatpush1.msra.mxu0 0.0
    %2301 = vmatprep.subr.mxu0 0.0
    %2302 = vmatpush1.msra.mxu0 0.0
    %2303 = vmatprep.subr.mxu0 0.0
    %2304 = vmatpush1.msra.mxu0 0.0
    %2305 = vmatprep.subr.mxu0 0.0
    %2306 = vmatpush1.msra.mxu0 0.0
    %2307 = vmatprep.subr.mxu0 0.0
    %2308 = vmatpush1.msra.mxu0 0.0
    %2309 = vmatprep.subr.mxu0 0.0
    %2310 = vmatpush1.msra.mxu0 0.0
    %2311 = vmatprep.mubr.f32.mxu0 0.0
    %2312 = vmatmul.mubr.f32.gmra.mrb[0].mxu0 %v2245
    %v2313 = vpop.f32.mrb[0].mxu0
    %v2314 = vadd.f32 0.0, %v2313
    %v2315 = vpop.f32.mrb[0].mxu0
    %v2316 = vadd.f32 0.0, %v2315
    %2317 = vdwg.mxu0
    %s2318 = scalar_lea.vmem [#allocation7], 256
    %v2319 = vld [vmem:[%s2318] sm:$0xff]
    %v2320 = vld [vmem:[%s2318 + $0x8] sm:$0xff]
    %v2321 = vld [vmem:[%s2318 + $0x10] sm:$0xff]
    %v2322 = vld [vmem:[%s2318 + $0x18] sm:$0xff]
    %v2323 = vld [vmem:[%s2318 + $0x20] sm:$0xff]
    %v2324 = vld [vmem:[%s2318 + $0x28] sm:$0xff]
    %v2325 = vld [vmem:[%s2318 + $0x30] sm:$0xff]
    %v2326 = vld [vmem:[%s2318 + $0x38] sm:$0xff]
    %v2327 = vld [vmem:[%s2318 + $0x40] sm:$0xff]
    %v2328 = vld [vmem:[%s2318 + $0x48] sm:$0xff]
    %v2329 = vld [vmem:[%s2318 + $0x50] sm:$0xff]
    %v2330 = vld [vmem:[%s2318 + $0x58] sm:$0xff]
    %v2331 = vld [vmem:[%s2318 + $0x60] sm:$0xff]
    %v2332 = vld [vmem:[%s2318 + $0x68] sm:$0xff]
    %v2333 = vld [vmem:[%s2318 + $0x70] sm:$0xff]
    %v2334 = vld [vmem:[%s2318 + $0x78] sm:$0xff]
    %v2335 = vld [vmem:[%s2318 + $0x80] sm:$0xff]
    %v2336 = vld [vmem:[%s2318 + $0x88] sm:$0xff]
    %v2337 = vld [vmem:[%s2318 + $0x90] sm:$0xff]
    %v2338 = vld [vmem:[%s2318 + $0x98] sm:$0xff]
    %v2339 = vld [vmem:[%s2318 + $0xa0] sm:$0xff]
    %v2340 = vld [vmem:[%s2318 + $0xa8] sm:$0xff]
    %v2341 = vld [vmem:[%s2318 + $0xb0] sm:$0xff]
    %v2342 = vld [vmem:[%s2318 + $0xb8] sm:$0xff]
    %v2343 = vld [vmem:[%s2318 + $0xc0] sm:$0xff]
    %v2344 = vld [vmem:[%s2318 + $0xc8] sm:$0xff]
    %v2345 = vld [vmem:[%s2318 + $0xd0] sm:$0xff]
    %v2346 = vld [vmem:[%s2318 + $0xd8] sm:$0xff]
    %v2347 = vld [vmem:[%s2318 + $0xe0] sm:$0xff]
    %v2348 = vld [vmem:[%s2318 + $0xe8] sm:$0xff]
    %v2349 = vld [vmem:[%s2318 + $0xf0] sm:$0xff]
    %v2350 = vld [vmem:[%s2318 + $0xf8] sm:$0xff]
    %2351 = vmatprep.subr.mxu0 0.0
    %2352 = vmatpush1.msra.mxu0 %v2319
    %2353 = vmatprep.subr.mxu0 0.0
    %2354 = vmatpush1.msra.mxu0 %v2320
    %2355 = vmatprep.subr.mxu0 0.0
    %2356 = vmatpush1.msra.mxu0 %v2321
    %2357 = vmatprep.subr.mxu0 0.0
    %2358 = vmatpush1.msra.mxu0 %v2322
    %2359 = vmatprep.subr.mxu0 0.0
    %2360 = vmatpush1.msra.mxu0 %v2323
    %2361 = vmatprep.subr.mxu0 0.0
    %2362 = vmatpush1.msra.mxu0 %v2324
    %2363 = vmatprep.subr.mxu0 0.0
    %2364 = vmatpush1.msra.mxu0 %v2325
    %2365 = vmatprep.subr.mxu0 0.0
    %2366 = vmatpush1.msra.mxu0 %v2326
    %2367 = vmatprep.subr.mxu0 0.0
    %2368 = vmatpush1.msra.mxu0 %v2327
    %2369 = vmatprep.subr.mxu0 0.0
    %2370 = vmatpush1.msra.mxu0 %v2328
    %2371 = vmatprep.subr.mxu0 0.0
    %2372 = vmatpush1.msra.mxu0 %v2329
    %2373 = vmatprep.subr.mxu0 0.0
    %2374 = vmatpush1.msra.mxu0 %v2330
    %2375 = vmatprep.subr.mxu0 0.0
    %2376 = vmatpush1.msra.mxu0 %v2331
    %2377 = vmatprep.subr.mxu0 0.0
    %2378 = vmatpush1.msra.mxu0 %v2332
    %2379 = vmatprep.subr.mxu0 0.0
    %2380 = vmatpush1.msra.mxu0 %v2333
    %2381 = vmatprep.subr.mxu0 0.0
    %2382 = vmatpush1.msra.mxu0 %v2334
    %2383 = vmatprep.subr.mxu0 0.0
    %2384 = vmatpush1.msra.mxu0 %v2335
    %2385 = vmatprep.subr.mxu0 0.0
    %2386 = vmatpush1.msra.mxu0 %v2336
    %2387 = vmatprep.subr.mxu0 0.0
    %2388 = vmatpush1.msra.mxu0 %v2337
    %2389 = vmatprep.subr.mxu0 0.0
    %2390 = vmatpush1.msra.mxu0 %v2338
    %2391 = vmatprep.subr.mxu0 0.0
    %2392 = vmatpush1.msra.mxu0 %v2339
    %2393 = vmatprep.subr.mxu0 0.0
    %2394 = vmatpush1.msra.mxu0 %v2340
    %2395 = vmatprep.subr.mxu0 0.0
    %2396 = vmatpush1.msra.mxu0 %v2341
    %2397 = vmatprep.subr.mxu0 0.0
    %2398 = vmatpush1.msra.mxu0 %v2342
    %2399 = vmatprep.subr.mxu0 0.0
    %2400 = vmatpush1.msra.mxu0 %v2343
    %2401 = vmatprep.subr.mxu0 0.0
    %2402 = vmatpush1.msra.mxu0 %v2344
    %2403 = vmatprep.subr.mxu0 0.0
    %2404 = vmatpush1.msra.mxu0 %v2345
    %2405 = vmatprep.subr.mxu0 0.0
    %2406 = vmatpush1.msra.mxu0 %v2346
    %2407 = vmatprep.subr.mxu0 0.0
    %2408 = vmatpush1.msra.mxu0 %v2347
    %2409 = vmatprep.subr.mxu0 0.0
    %2410 = vmatpush1.msra.mxu0 %v2348
    %2411 = vmatprep.subr.mxu0 0.0
    %2412 = vmatpush1.msra.mxu0 %v2349
    %2413 = vmatprep.subr.mxu0 0.0
    %2414 = vmatpush1.msra.mxu0 %v2350
    %2415 = vmatprep.mubr.f32.mxu0 %v2316
    %2416 = vmatmul.mubr.f32.gmra.mrb[0].mxu0 %v2314
    %v2417 = vpop.f32.mrb[0].mxu0
    %v2418 = vadd.f32 0.0, %v2417
    %v2419 = vpop.f32.mrb[0].mxu0
    %2420 = vdwg.mxu0
    %2421 = vmatprep.subr.mxu0 0.0
    %2422 = vmatpush1.msra.mxu0 %v2210
    %2423 = vmatprep.subr.mxu0 0.0
    %2424 = vmatpush1.msra.mxu0 %v2211
    %2425 = vmatprep.subr.mxu0 0.0
    %2426 = vmatpush1.msra.mxu0 %v2212
    %2427 = vmatprep.subr.mxu0 0.0
    %2428 = vmatpush1.msra.mxu0 %v2213
    %2429 = vmatprep.subr.mxu0 0.0
    %2430 = vmatpush1.msra.mxu0 %v2214
    %2431 = vmatprep.subr.mxu0 0.0
    %2432 = vmatpush1.msra.mxu0 %v2215
    %2433 = vmatprep.subr.mxu0 0.0
    %2434 = vmatpush1.msra.mxu0 %v2216
    %2435 = vmatprep.subr.mxu0 0.0
    %2436 = vmatpush1.msra.mxu0 %v2217
    %2437 = vmatprep.subr.mxu0 0.0
    %2438 = vmatpush1.msra.mxu0 %v2218
    %2439 = vmatprep.subr.mxu0 0.0
    %2440 = vmatpush1.msra.mxu0 %v2219
    %2441 = vmatprep.subr.mxu0 0.0
    %2442 = vmatpush1.msra.mxu0 %v2220
    %2443 = vmatprep.subr.mxu0 0.0
    %2444 = vmatpush1.msra.mxu0 %v2221
    %2445 = vmatprep.subr.mxu0 0.0
    %2446 = vmatpush1.msra.mxu0 %v2222
    %2447 = vmatprep.subr.mxu0 0.0
    %2448 = vmatpush1.msra.mxu0 %v2223
    %2449 = vmatprep.subr.mxu0 0.0
    %2450 = vmatpush1.msra.mxu0 %v2224
    %2451 = vmatprep.subr.mxu0 0.0
    %2452 = vmatpush1.msra.mxu0 %v2225
    %2453 = vmatprep.subr.mxu0 0.0
    %2454 = vmatpush1.msra.mxu0 %v2226
    %2455 = vmatprep.subr.mxu0 0.0
    %2456 = vmatpush1.msra.mxu0 %v2227
    %2457 = vmatprep.subr.mxu0 0.0
    %2458 = vmatpush1.msra.mxu0 %v2228
    %2459 = vmatprep.subr.mxu0 0.0
    %2460 = vmatpush1.msra.mxu0 %v2229
    %2461 = vmatprep.subr.mxu0 0.0
    %2462 = vmatpush1.msra.mxu0 %v2230
    %2463 = vmatprep.subr.mxu0 0.0
    %2464 = vmatpush1.msra.mxu0 %v2231
    %2465 = vmatprep.subr.mxu0 0.0
    %2466 = vmatpush1.msra.mxu0 %v2232
    %2467 = vmatprep.subr.mxu0 0.0
    %2468 = vmatpush1.msra.mxu0 %v2233
    %2469 = vmatprep.subr.mxu0 0.0
    %2470 = vmatpush1.msra.mxu0 %v2234
    %2471 = vmatprep.subr.mxu0 0.0
    %2472 = vmatpush1.msra.mxu0 %v2235
    %2473 = vmatprep.subr.mxu0 0.0
    %2474 = vmatpush1.msra.mxu0 %v2236
    %2475 = vmatprep.subr.mxu0 0.0
    %2476 = vmatpush1.msra.mxu0 %v2237
    %2477 = vmatprep.subr.mxu0 0.0
    %2478 = vmatpush1.msra.mxu0 %v2238
    %2479 = vmatprep.subr.mxu0 0.0
    %2480 = vmatpush1.msra.mxu0 %v2239
    %2481 = vmatprep.subr.mxu0 0.0
    %2482 = vmatpush1.msra.mxu0 %v2240
    %2483 = vmatprep.subr.mxu0 0.0
    %2484 = vmatpush1.msra.mxu0 %v2241
    %2485 = vmatprep.mubr.f32.mxu0 %v2208
    %2486 = vmatmul.mubr.f32.gmra.mrb[0].mxu0 %v2206
    %v2487 = vpop.f32.mrb[0].mxu0
    %v2488 = vadd.f32 %v2418, %v2487
    %v2489 = vpop.f32.mrb[0].mxu0
    %2490 = vdwg.mxu0
    %s2491 = scalar_lea.vmem %s12, 4
    %v2492 = vld [vmem:[%s2491] sm:$0x3]
    %v2494 = vsel %vm2135, %v2492, 0
    %2496 = vmatprep.subr.mxu0 %v2131
    %2497 = vmatpush1.msra.mxu0 %v2130
    %2498 = vmatprep.subr.mxu0 %v2133
    %2499 = vmatpush1.msra.mxu0 %v2132
    %2500 = vmatprep.subr.mxu0 0.0
    %2501 = vmatpush1.msra.mxu0 0.0
    %2502 = vmatprep.subr.mxu0 0.0
    %2503 = vmatpush1.msra.mxu0 0.0
    %2504 = vmatprep.subr.mxu0 0.0
    %2505 = vmatpush1.msra.mxu0 0.0
    %2506 = vmatprep.subr.mxu0 0.0
    %2507 = vmatpush1.msra.mxu0 0.0
    %2508 = vmatprep.subr.mxu0 0.0
    %2509 = vmatpush1.msra.mxu0 0.0
    %2510 = vmatprep.subr.mxu0 0.0
    %2511 = vmatpush1.msra.mxu0 0.0
    %2512 = vmatprep.subr.mxu0 0.0
    %2513 = vmatpush1.msra.mxu0 0.0
    %2514 = vmatprep.subr.mxu0 0.0
    %2515 = vmatpush1.msra.mxu0 0.0
    %2516 = vmatprep.subr.mxu0 0.0
    %2517 = vmatpush1.msra.mxu0 0.0
    %2518 = vmatprep.subr.mxu0 0.0
    %2519 = vmatpush1.msra.mxu0 0.0
    %2520 = vmatprep.subr.mxu0 0.0
    %2521 = vmatpush1.msra.mxu0 0.0
    %2522 = vmatprep.subr.mxu0 0.0
    %2523 = vmatpush1.msra.mxu0 0.0
    %2524 = vmatprep.subr.mxu0 0.0
    %2525 = vmatpush1.msra.mxu0 0.0
    %2526 = vmatprep.subr.mxu0 0.0
    %2527 = vmatpush1.msra.mxu0 0.0
    %2528 = vmatprep.subr.mxu0 0.0
    %2529 = vmatpush1.msra.mxu0 0.0
    %2530 = vmatprep.subr.mxu0 0.0
    %2531 = vmatpush1.msra.mxu0 0.0
    %2532 = vmatprep.subr.mxu0 0.0
    %2533 = vmatpush1.msra.mxu0 0.0
    %2534 = vmatprep.subr.mxu0 0.0
    %2535 = vmatpush1.msra.mxu0 0.0
    %2536 = vmatprep.subr.mxu0 0.0
    %2537 = vmatpush1.msra.mxu0 0.0
    %2538 = vmatprep.subr.mxu0 0.0
    %2539 = vmatpush1.msra.mxu0 0.0
    %2540 = vmatprep.subr.mxu0 0.0
    %2541 = vmatpush1.msra.mxu0 0.0
    %2542 = vmatprep.subr.mxu0 0.0
    %2543 = vmatpush1.msra.mxu0 0.0
    %2544 = vmatprep.subr.mxu0 0.0
    %2545 = vmatpush1.msra.mxu0 0.0
    %2546 = vmatprep.subr.mxu0 0.0
    %2547 = vmatpush1.msra.mxu0 0.0
    %2548 = vmatprep.subr.mxu0 0.0
    %2549 = vmatpush1.msra.mxu0 0.0
    %2550 = vmatprep.subr.mxu0 0.0
    %2551 = vmatpush1.msra.mxu0 0.0
    %2552 = vmatprep.subr.mxu0 0.0
    %2553 = vmatpush1.msra.mxu0 0.0
    %2554 = vmatprep.subr.mxu0 0.0
    %2555 = vmatpush1.msra.mxu0 0.0
    %2556 = vmatprep.subr.mxu0 0.0
    %2557 = vmatpush1.msra.mxu0 0.0
    %2558 = vmatprep.subr.mxu0 0.0
    %2559 = vmatpush1.msra.mxu0 0.0
    %2560 = vmatprep.mubr.f32.mxu0 0.0
    %2561 = vmatmul.mubr.f32.gmra.mrb[0].mxu0 %v2494
    %v2562 = vpop.f32.mrb[0].mxu0
    %v2563 = vadd.f32 0.0, %v2562
    %v2564 = vpop.f32.mrb[0].mxu0
    %v2565 = vadd.f32 0.0, %v2564
    %2566 = vdwg.mxu0
    %s2567 = scalar_lea.vmem [#allocation7], 512
    %v2568 = vld [vmem:[%s2567] sm:$0xff]
    %v2569 = vld [vmem:[%s2567 + $0x8] sm:$0xff]
    %v2570 = vld [vmem:[%s2567 + $0x10] sm:$0xff]
    %v2571 = vld [vmem:[%s2567 + $0x18] sm:$0xff]
    %v2572 = vld [vmem:[%s2567 + $0x20] sm:$0xff]
    %v2573 = vld [vmem:[%s2567 + $0x28] sm:$0xff]
    %v2574 = vld [vmem:[%s2567 + $0x30] sm:$0xff]
    %v2575 = vld [vmem:[%s2567 + $0x38] sm:$0xff]
    %v2576 = vld [vmem:[%s2567 + $0x40] sm:$0xff]
    %v2577 = vld [vmem:[%s2567 + $0x48] sm:$0xff]
    %v2578 = vld [vmem:[%s2567 + $0x50] sm:$0xff]
    %v2579 = vld [vmem:[%s2567 + $0x58] sm:$0xff]
    %v2580 = vld [vmem:[%s2567 + $0x60] sm:$0xff]
    %v2581 = vld [vmem:[%s2567 + $0x68] sm:$0xff]
    %v2582 = vld [vmem:[%s2567 + $0x70] sm:$0xff]
    %v2583 = vld [vmem:[%s2567 + $0x78] sm:$0xff]
    %v2584 = vld [vmem:[%s2567 + $0x80] sm:$0xff]
    %v2585 = vld [vmem:[%s2567 + $0x88] sm:$0xff]
    %v2586 = vld [vmem:[%s2567 + $0x90] sm:$0xff]
    %v2587 = vld [vmem:[%s2567 + $0x98] sm:$0xff]
    %v2588 = vld [vmem:[%s2567 + $0xa0] sm:$0xff]
    %v2589 = vld [vmem:[%s2567 + $0xa8] sm:$0xff]
    %v2590 = vld [vmem:[%s2567 + $0xb0] sm:$0xff]
    %v2591 = vld [vmem:[%s2567 + $0xb8] sm:$0xff]
    %v2592 = vld [vmem:[%s2567 + $0xc0] sm:$0xff]
    %v2593 = vld [vmem:[%s2567 + $0xc8] sm:$0xff]
    %v2594 = vld [vmem:[%s2567 + $0xd0] sm:$0xff]
    %v2595 = vld [vmem:[%s2567 + $0xd8] sm:$0xff]
    %v2596 = vld [vmem:[%s2567 + $0xe0] sm:$0xff]
    %v2597 = vld [vmem:[%s2567 + $0xe8] sm:$0xff]
    %v2598 = vld [vmem:[%s2567 + $0xf0] sm:$0xff]
    %v2599 = vld [vmem:[%s2567 + $0xf8] sm:$0xff]
    %2600 = vmatprep.subr.mxu0 0.0
    %2601 = vmatpush1.msra.mxu0 %v2568
    %2602 = vmatprep.subr.mxu0 0.0
    %2603 = vmatpush1.msra.mxu0 %v2569
    %2604 = vmatprep.subr.mxu0 0.0
    %2605 = vmatpush1.msra.mxu0 %v2570
    %2606 = vmatprep.subr.mxu0 0.0
    %2607 = vmatpush1.msra.mxu0 %v2571
    %2608 = vmatprep.subr.mxu0 0.0
    %2609 = vmatpush1.msra.mxu0 %v2572
    %2610 = vmatprep.subr.mxu0 0.0
    %2611 = vmatpush1.msra.mxu0 %v2573
    %2612 = vmatprep.subr.mxu0 0.0
    %2613 = vmatpush1.msra.mxu0 %v2574
    %2614 = vmatprep.subr.mxu0 0.0
    %2615 = vmatpush1.msra.mxu0 %v2575
    %2616 = vmatprep.subr.mxu0 0.0
    %2617 = vmatpush1.msra.mxu0 %v2576
    %2618 = vmatprep.subr.mxu0 0.0
    %2619 = vmatpush1.msra.mxu0 %v2577
    %2620 = vmatprep.subr.mxu0 0.0
    %2621 = vmatpush1.msra.mxu0 %v2578
    %2622 = vmatprep.subr.mxu0 0.0
    %2623 = vmatpush1.msra.mxu0 %v2579
    %2624 = vmatprep.subr.mxu0 0.0
    %2625 = vmatpush1.msra.mxu0 %v2580
    %2626 = vmatprep.subr.mxu0 0.0
    %2627 = vmatpush1.msra.mxu0 %v2581
    %2628 = vmatprep.subr.mxu0 0.0
    %2629 = vmatpush1.msra.mxu0 %v2582
    %2630 = vmatprep.subr.mxu0 0.0
    %2631 = vmatpush1.msra.mxu0 %v2583
    %2632 = vmatprep.subr.mxu0 0.0
    %2633 = vmatpush1.msra.mxu0 %v2584
    %2634 = vmatprep.subr.mxu0 0.0
    %2635 = vmatpush1.msra.mxu0 %v2585
    %2636 = vmatprep.subr.mxu0 0.0
    %2637 = vmatpush1.msra.mxu0 %v2586
    %2638 = vmatprep.subr.mxu0 0.0
    %2639 = vmatpush1.msra.mxu0 %v2587
    %2640 = vmatprep.subr.mxu0 0.0
    %2641 = vmatpush1.msra.mxu0 %v2588
    %2642 = vmatprep.subr.mxu0 0.0
    %2643 = vmatpush1.msra.mxu0 %v2589
    %2644 = vmatprep.subr.mxu0 0.0
    %2645 = vmatpush1.msra.mxu0 %v2590
    %2646 = vmatprep.subr.mxu0 0.0
    %2647 = vmatpush1.msra.mxu0 %v2591
    %2648 = vmatprep.subr.mxu0 0.0
    %2649 = vmatpush1.msra.mxu0 %v2592
    %2650 = vmatprep.subr.mxu0 0.0
    %2651 = vmatpush1.msra.mxu0 %v2593
    %2652 = vmatprep.subr.mxu0 0.0
    %2653 = vmatpush1.msra.mxu0 %v2594
    %2654 = vmatprep.subr.mxu0 0.0
    %2655 = vmatpush1.msra.mxu0 %v2595
    %2656 = vmatprep.subr.mxu0 0.0
    %2657 = vmatpush1.msra.mxu0 %v2596
    %2658 = vmatprep.subr.mxu0 0.0
    %2659 = vmatpush1.msra.mxu0 %v2597
    %2660 = vmatprep.subr.mxu0 0.0
    %2661 = vmatpush1.msra.mxu0 %v2598
    %2662 = vmatprep.subr.mxu0 0.0
    %2663 = vmatpush1.msra.mxu0 %v2599
    %2664 = vmatprep.mubr.f32.mxu0 %v2565
    %2665 = vmatmul.mubr.f32.gmra.mrb[0].mxu0 %v2563
    %v2666 = vpop.f32.mrb[0].mxu0
    %v2667 = vadd.f32 0.0, %v2666
    %v2668 = vpop.f32.mrb[0].mxu0
    %2669 = vdwg.mxu0
    %v2670 = vadd.f32 %v2488, %v2667
    %s2671 = scalar_lea.vmem %s12, 6
    %v2672 = vld [vmem:[%s2671] sm:$0x3]
    %v2674 = vsel %vm2135, %v2672, 0
    %2676 = vmatprep.subr.mxu0 %v2131
    %2677 = vmatpush1.msra.mxu0 %v2130
    %2678 = vmatprep.subr.mxu0 %v2133
    %2679 = vmatpush1.msra.mxu0 %v2132
    %2680 = vmatprep.subr.mxu0 0.0
    %2681 = vmatpush1.msra.mxu0 0.0
    %2682 = vmatprep.subr.mxu0 0.0
    %2683 = vmatpush1.msra.mxu0 0.0
    %2684 = vmatprep.subr.mxu0 0.0
    %2685 = vmatpush1.msra.mxu0 0.0
    %2686 = vmatprep.subr.mxu0 0.0
    %2687 = vmatpush1.msra.mxu0 0.0
    %2688 = vmatprep.subr.mxu0 0.0
    %2689 = vmatpush1.msra.mxu0 0.0
    %2690 = vmatprep.subr.mxu0 0.0
    %2691 = vmatpush1.msra.mxu0 0.0
    %2692 = vmatprep.subr.mxu0 0.0
    %2693 = vmatpush1.msra.mxu0 0.0
    %2694 = vmatprep.subr.mxu0 0.0
    %2695 = vmatpush1.msra.mxu0 0.0
    %2696 = vmatprep.subr.mxu0 0.0
    %2697 = vmatpush1.msra.mxu0 0.0
    %2698 = vmatprep.subr.mxu0 0.0
    %2699 = vmatpush1.msra.mxu0 0.0
    %2700 = vmatprep.subr.mxu0 0.0
    %2701 = vmatpush1.msra.mxu0 0.0
    %2702 = vmatprep.subr.mxu0 0.0
    %2703 = vmatpush1.msra.mxu0 0.0
    %2704 = vmatprep.subr.mxu0 0.0
    %2705 = vmatpush1.msra.mxu0 0.0
    %2706 = vmatprep.subr.mxu0 0.0
    %2707 = vmatpush1.msra.mxu0 0.0
    %2708 = vmatprep.subr.mxu0 0.0
    %2709 = vmatpush1.msra.mxu0 0.0
    %2710 = vmatprep.subr.mxu0 0.0
    %2711 = vmatpush1.msra.mxu0 0.0
    %2712 = vmatprep.subr.mxu0 0.0
    %2713 = vmatpush1.msra.mxu0 0.0
    %2714 = vmatprep.subr.mxu0 0.0
    %2715 = vmatpush1.msra.mxu0 0.0
    %2716 = vmatprep.subr.mxu0 0.0
    %2717 = vmatpush1.msra.mxu0 0.0
    %2718 = vmatprep.subr.mxu0 0.0
    %2719 = vmatpush1.msra.mxu0 0.0
    %2720 = vmatprep.subr.mxu0 0.0
    %2721 = vmatpush1.msra.mxu0 0.0
    %2722 = vmatprep.subr.mxu0 0.0
    %2723 = vmatpush1.msra.mxu0 0.0
    %2724 = vmatprep.subr.mxu0 0.0
    %2725 = vmatpush1.msra.mxu0 0.0
    %2726 = vmatprep.subr.mxu0 0.0
    %2727 = vmatpush1.msra.mxu0 0.0
    %2728 = vmatprep.subr.mxu0 0.0
    %2729 = vmatpush1.msra.mxu0 0.0
    %2730 = vmatprep.subr.mxu0 0.0
    %2731 = vmatpush1.msra.mxu0 0.0
    %2732 = vmatprep.subr.mxu0 0.0
    %2733 = vmatpush1.msra.mxu0 0.0
    %2734 = vmatprep.subr.mxu0 0.0
    %2735 = vmatpush1.msra.mxu0 0.0
    %2736 = vmatprep.subr.mxu0 0.0
    %2737 = vmatpush1.msra.mxu0 0.0
    %2738 = vmatprep.subr.mxu0 0.0
    %2739 = vmatpush1.msra.mxu0 0.0
    %2740 = vmatprep.mubr.f32.mxu0 0.0
    %2741 = vmatmul.mubr.f32.gmra.mrb[0].mxu0 %v2674
    %v2742 = vpop.f32.mrb[0].mxu0
    %v2743 = vadd.f32 0.0, %v2742
    %v2744 = vpop.f32.mrb[0].mxu0
    %v2745 = vadd.f32 0.0, %v2744
    %2746 = vdwg.mxu0
    %s2747 = scalar_lea.vmem [#allocation7], 768
    %v2748 = vld [vmem:[%s2747] sm:$0xff]
    %v2749 = vld [vmem:[%s2747 + $0x8] sm:$0xff]
    %v2750 = vld [vmem:[%s2747 + $0x10] sm:$0xff]
    %v2751 = vld [vmem:[%s2747 + $0x18] sm:$0xff]
    %v2752 = vld [vmem:[%s2747 + $0x20] sm:$0xff]
    %v2753 = vld [vmem:[%s2747 + $0x28] sm:$0xff]
    %v2754 = vld [vmem:[%s2747 + $0x30] sm:$0xff]
    %v2755 = vld [vmem:[%s2747 + $0x38] sm:$0xff]
    %v2756 = vld [vmem:[%s2747 + $0x40] sm:$0xff]
    %v2757 = vld [vmem:[%s2747 + $0x48] sm:$0xff]
    %v2758 = vld [vmem:[%s2747 + $0x50] sm:$0xff]
    %v2759 = vld [vmem:[%s2747 + $0x58] sm:$0xff]
    %v2760 = vld [vmem:[%s2747 + $0x60] sm:$0xff]
    %v2761 = vld [vmem:[%s2747 + $0x68] sm:$0xff]
    %v2762 = vld [vmem:[%s2747 + $0x70] sm:$0xff]
    %v2763 = vld [vmem:[%s2747 + $0x78] sm:$0xff]
    %v2764 = vld [vmem:[%s2747 + $0x80] sm:$0xff]
    %v2765 = vld [vmem:[%s2747 + $0x88] sm:$0xff]
    %v2766 = vld [vmem:[%s2747 + $0x90] sm:$0xff]
    %v2767 = vld [vmem:[%s2747 + $0x98] sm:$0xff]
    %v2768 = vld [vmem:[%s2747 + $0xa0] sm:$0xff]
    %v2769 = vld [vmem:[%s2747 + $0xa8] sm:$0xff]
    %v2770 = vld [vmem:[%s2747 + $0xb0] sm:$0xff]
    %v2771 = vld [vmem:[%s2747 + $0xb8] sm:$0xff]
    %v2772 = vld [vmem:[%s2747 + $0xc0] sm:$0xff]
    %v2773 = vld [vmem:[%s2747 + $0xc8] sm:$0xff]
    %v2774 = vld [vmem:[%s2747 + $0xd0] sm:$0xff]
    %v2775 = vld [vmem:[%s2747 + $0xd8] sm:$0xff]
    %v2776 = vld [vmem:[%s2747 + $0xe0] sm:$0xff]
    %v2777 = vld [vmem:[%s2747 + $0xe8] sm:$0xff]
    %v2778 = vld [vmem:[%s2747 + $0xf0] sm:$0xff]
    %v2779 = vld [vmem:[%s2747 + $0xf8] sm:$0xff]
    %2780 = vmatprep.subr.mxu0 0.0
    %2781 = vmatpush1.msra.mxu0 %v2748
    %2782 = vmatprep.subr.mxu0 0.0
    %2783 = vmatpush1.msra.mxu0 %v2749
    %2784 = vmatprep.subr.mxu0 0.0
    %2785 = vmatpush1.msra.mxu0 %v2750
    %2786 = vmatprep.subr.mxu0 0.0
    %2787 = vmatpush1.msra.mxu0 %v2751
    %2788 = vmatprep.subr.mxu0 0.0
    %2789 = vmatpush1.msra.mxu0 %v2752
    %2790 = vmatprep.subr.mxu0 0.0
    %2791 = vmatpush1.msra.mxu0 %v2753
    %2792 = vmatprep.subr.mxu0 0.0
    %2793 = vmatpush1.msra.mxu0 %v2754
    %2794 = vmatprep.subr.mxu0 0.0
    %2795 = vmatpush1.msra.mxu0 %v2755
    %2796 = vmatprep.subr.mxu0 0.0
    %2797 = vmatpush1.msra.mxu0 %v2756
    %2798 = vmatprep.subr.mxu0 0.0
    %2799 = vmatpush1.msra.mxu0 %v2757
    %2800 = vmatprep.subr.mxu0 0.0
    %2801 = vmatpush1.msra.mxu0 %v2758
    %2802 = vmatprep.subr.mxu0 0.0
    %2803 = vmatpush1.msra.mxu0 %v2759
    %2804 = vmatprep.subr.mxu0 0.0
    %2805 = vmatpush1.msra.mxu0 %v2760
    %2806 = vmatprep.subr.mxu0 0.0
    %2807 = vmatpush1.msra.mxu0 %v2761
    %2808 = vmatprep.subr.mxu0 0.0
    %2809 = vmatpush1.msra.mxu0 %v2762
    %2810 = vmatprep.subr.mxu0 0.0
    %2811 = vmatpush1.msra.mxu0 %v2763
    %2812 = vmatprep.subr.mxu0 0.0
    %2813 = vmatpush1.msra.mxu0 %v2764
    %2814 = vmatprep.subr.mxu0 0.0
    %2815 = vmatpush1.msra.mxu0 %v2765
    %2816 = vmatprep.subr.mxu0 0.0
    %2817 = vmatpush1.msra.mxu0 %v2766
    %2818 = vmatprep.subr.mxu0 0.0
    %2819 = vmatpush1.msra.mxu0 %v2767
    %2820 = vmatprep.subr.mxu0 0.0
    %2821 = vmatpush1.msra.mxu0 %v2768
    %2822 = vmatprep.subr.mxu0 0.0
    %2823 = vmatpush1.msra.mxu0 %v2769
    %2824 = vmatprep.subr.mxu0 0.0
    %2825 = vmatpush1.msra.mxu0 %v2770
    %2826 = vmatprep.subr.mxu0 0.0
    %2827 = vmatpush1.msra.mxu0 %v2771
    %2828 = vmatprep.subr.mxu0 0.0
    %2829 = vmatpush1.msra.mxu0 %v2772
    %2830 = vmatprep.subr.mxu0 0.0
    %2831 = vmatpush1.msra.mxu0 %v2773
    %2832 = vmatprep.subr.mxu0 0.0
    %2833 = vmatpush1.msra.mxu0 %v2774
    %2834 = vmatprep.subr.mxu0 0.0
    %2835 = vmatpush1.msra.mxu0 %v2775
    %2836 = vmatprep.subr.mxu0 0.0
    %2837 = vmatpush1.msra.mxu0 %v2776
    %2838 = vmatprep.subr.mxu0 0.0
    %2839 = vmatpush1.msra.mxu0 %v2777
    %2840 = vmatprep.subr.mxu0 0.0
    %2841 = vmatpush1.msra.mxu0 %v2778
    %2842 = vmatprep.subr.mxu0 0.0
    %2843 = vmatpush1.msra.mxu0 %v2779
    %2844 = vmatprep.mubr.f32.mxu0 %v2745
    %2845 = vmatmul.mubr.f32.gmra.mrb[0].mxu0 %v2743
    %v2846 = vpop.f32.mrb[0].mxu0
    %v2847 = vadd.f32 0.0, %v2846
    %v2848 = vpop.f32.mrb[0].mxu0
    %2849 = vdwg.mxu0
    %v2850 = vadd.f32 %v2670, %v2847
    %s2851 = scalar_lea.vmem %s12, 8
    %v2852 = vld [vmem:[%s2851] sm:$0x3]
    %v2854 = vsel %vm2135, %v2852, 0
    %2856 = vmatprep.subr.mxu0 %v2131
    %2857 = vmatpush1.msra.mxu0 %v2130
    %2858 = vmatprep.subr.mxu0 %v2133
    %2859 = vmatpush1.msra.mxu0 %v2132
    %2860 = vmatprep.subr.mxu0 0.0
    %2861 = vmatpush1.msra.mxu0 0.0
    %2862 = vmatprep.subr.mxu0 0.0
    %2863 = vmatpush1.msra.mxu0 0.0
    %2864 = vmatprep.subr.mxu0 0.0
    %2865 = vmatpush1.msra.mxu0 0.0
    %2866 = vmatprep.subr.mxu0 0.0
    %2867 = vmatpush1.msra.mxu0 0.0
    %2868 = vmatprep.subr.mxu0 0.0
    %2869 = vmatpush1.msra.mxu0 0.0
    %2870 = vmatprep.subr.mxu0 0.0
    %2871 = vmatpush1.msra.mxu0 0.0
    %2872 = vmatprep.subr.mxu0 0.0
    %2873 = vmatpush1.msra.mxu0 0.0
    %2874 = vmatprep.subr.mxu0 0.0
    %2875 = vmatpush1.msra.mxu0 0.0
    %2876 = vmatprep.subr.mxu0 0.0
    %2877 = vmatpush1.msra.mxu0 0.0
    %2878 = vmatprep.subr.mxu0 0.0
    %2879 = vmatpush1.msra.mxu0 0.0
    %2880 = vmatprep.subr.mxu0 0.0
    %2881 = vmatpush1.msra.mxu0 0.0
    %2882 = vmatprep.subr.mxu0 0.0
    %2883 = vmatpush1.msra.mxu0 0.0
    %2884 = vmatprep.subr.mxu0 0.0
    %2885 = vmatpush1.msra.mxu0 0.0
    %2886 = vmatprep.subr.mxu0 0.0
    %2887 = vmatpush1.msra.mxu0 0.0
    %2888 = vmatprep.subr.mxu0 0.0
    %2889 = vmatpush1.msra.mxu0 0.0
    %2890 = vmatprep.subr.mxu0 0.0
    %2891 = vmatpush1.msra.mxu0 0.0
    %2892 = vmatprep.subr.mxu0 0.0
    %2893 = vmatpush1.msra.mxu0 0.0
    %2894 = vmatprep.subr.mxu0 0.0
    %2895 = vmatpush1.msra.mxu0 0.0
    %2896 = vmatprep.subr.mxu0 0.0
    %2897 = vmatpush1.msra.mxu0 0.0
    %2898 = vmatprep.subr.mxu0 0.0
    %2899 = vmatpush1.msra.mxu0 0.0
    %2900 = vmatprep.subr.mxu0 0.0
    %2901 = vmatpush1.msra.mxu0 0.0
    %2902 = vmatprep.subr.mxu0 0.0
    %2903 = vmatpush1.msra.mxu0 0.0
    %2904 = vmatprep.subr.mxu0 0.0
    %2905 = vmatpush1.msra.mxu0 0.0
    %2906 = vmatprep.subr.mxu0 0.0
    %2907 = vmatpush1.msra.mxu0 0.0
    %2908 = vmatprep.subr.mxu0 0.0
    %2909 = vmatpush1.msra.mxu0 0.0
    %2910 = vmatprep.subr.mxu0 0.0
    %2911 = vmatpush1.msra.mxu0 0.0
    %2912 = vmatprep.subr.mxu0 0.0
    %2913 = vmatpush1.msra.mxu0 0.0
    %2914 = vmatprep.subr.mxu0 0.0
    %2915 = vmatpush1.msra.mxu0 0.0
    %2916 = vmatprep.subr.mxu0 0.0
    %2917 = vmatpush1.msra.mxu0 0.0
    %2918 = vmatprep.subr.mxu0 0.0
    %2919 = vmatpush1.msra.mxu0 0.0
    %2920 = vmatprep.mubr.f32.mxu0 0.0
    %2921 = vmatmul.mubr.f32.gmra.mrb[0].mxu0 %v2854
    %v2922 = vpop.f32.mrb[0].mxu0
    %v2923 = vadd.f32 0.0, %v2922
    %v2924 = vpop.f32.mrb[0].mxu0
    %v2925 = vadd.f32 0.0, %v2924
    %2926 = vdwg.mxu0
    %s2927 = scalar_lea.vmem [#allocation7], 1024
    %v2928 = vld [vmem:[%s2927] sm:$0xff]
    %v2929 = vld [vmem:[%s2927 + $0x8] sm:$0xff]
    %v2930 = vld [vmem:[%s2927 + $0x10] sm:$0xff]
    %v2931 = vld [vmem:[%s2927 + $0x18] sm:$0xff]
    %v2932 = vld [vmem:[%s2927 + $0x20] sm:$0xff]
    %v2933 = vld [vmem:[%s2927 + $0x28] sm:$0xff]
    %v2934 = vld [vmem:[%s2927 + $0x30] sm:$0xff]
    %v2935 = vld [vmem:[%s2927 + $0x38] sm:$0xff]
    %v2936 = vld [vmem:[%s2927 + $0x40] sm:$0xff]
    %v2937 = vld [vmem:[%s2927 + $0x48] sm:$0xff]
    %v2938 = vld [vmem:[%s2927 + $0x50] sm:$0xff]
    %v2939 = vld [vmem:[%s2927 + $0x58] sm:$0xff]
    %v2940 = vld [vmem:[%s2927 + $0x60] sm:$0xff]
    %v2941 = vld [vmem:[%s2927 + $0x68] sm:$0xff]
    %v2942 = vld [vmem:[%s2927 + $0x70] sm:$0xff]
    %v2943 = vld [vmem:[%s2927 + $0x78] sm:$0xff]
    %v2944 = vld [vmem:[%s2927 + $0x80] sm:$0xff]
    %v2945 = vld [vmem:[%s2927 + $0x88] sm:$0xff]
    %v2946 = vld [vmem:[%s2927 + $0x90] sm:$0xff]
    %v2947 = vld [vmem:[%s2927 + $0x98] sm:$0xff]
    %v2948 = vld [vmem:[%s2927 + $0xa0] sm:$0xff]
    %v2949 = vld [vmem:[%s2927 + $0xa8] sm:$0xff]
    %v2950 = vld [vmem:[%s2927 + $0xb0] sm:$0xff]
    %v2951 = vld [vmem:[%s2927 + $0xb8] sm:$0xff]
    %v2952 = vld [vmem:[%s2927 + $0xc0] sm:$0xff]
    %v2953 = vld [vmem:[%s2927 + $0xc8] sm:$0xff]
    %v2954 = vld [vmem:[%s2927 + $0xd0] sm:$0xff]
    %v2955 = vld [vmem:[%s2927 + $0xd8] sm:$0xff]
    %v2956 = vld [vmem:[%s2927 + $0xe0] sm:$0xff]
    %v2957 = vld [vmem:[%s2927 + $0xe8] sm:$0xff]
    %v2958 = vld [vmem:[%s2927 + $0xf0] sm:$0xff]
    %v2959 = vld [vmem:[%s2927 + $0xf8] sm:$0xff]
    %2960 = vmatprep.subr.mxu0 0.0
    %2961 = vmatpush1.msra.mxu0 %v2928
    %2962 = vmatprep.subr.mxu0 0.0
    %2963 = vmatpush1.msra.mxu0 %v2929
    %2964 = vmatprep.subr.mxu0 0.0
    %2965 = vmatpush1.msra.mxu0 %v2930
    %2966 = vmatprep.subr.mxu0 0.0
    %2967 = vmatpush1.msra.mxu0 %v2931
    %2968 = vmatprep.subr.mxu0 0.0
    %2969 = vmatpush1.msra.mxu0 %v2932
    %2970 = vmatprep.subr.mxu0 0.0
    %2971 = vmatpush1.msra.mxu0 %v2933
    %2972 = vmatprep.subr.mxu0 0.0
    %2973 = vmatpush1.msra.mxu0 %v2934
    %2974 = vmatprep.subr.mxu0 0.0
    %2975 = vmatpush1.msra.mxu0 %v2935
    %2976 = vmatprep.subr.mxu0 0.0
    %2977 = vmatpush1.msra.mxu0 %v2936
    %2978 = vmatprep.subr.mxu0 0.0
    %2979 = vmatpush1.msra.mxu0 %v2937
    %2980 = vmatprep.subr.mxu0 0.0
    %2981 = vmatpush1.msra.mxu0 %v2938
    %2982 = vmatprep.subr.mxu0 0.0
    %2983 = vmatpush1.msra.mxu0 %v2939
    %2984 = vmatprep.subr.mxu0 0.0
    %2985 = vmatpush1.msra.mxu0 %v2940
    %2986 = vmatprep.subr.mxu0 0.0
    %2987 = vmatpush1.msra.mxu0 %v2941
    %2988 = vmatprep.subr.mxu0 0.0
    %2989 = vmatpush1.msra.mxu0 %v2942
    %2990 = vmatprep.subr.mxu0 0.0
    %2991 = vmatpush1.msra.mxu0 %v2943
    %2992 = vmatprep.subr.mxu0 0.0
    %2993 = vmatpush1.msra.mxu0 %v2944
    %2994 = vmatprep.subr.mxu0 0.0
    %2995 = vmatpush1.msra.mxu0 %v2945
    %2996 = vmatprep.subr.mxu0 0.0
    %2997 = vmatpush1.msra.mxu0 %v2946
    %2998 = vmatprep.subr.mxu0 0.0
    %2999 = vmatpush1.msra.mxu0 %v2947
    %3000 = vmatprep.subr.mxu0 0.0
    %3001 = vmatpush1.msra.mxu0 %v2948
    %3002 = vmatprep.subr.mxu0 0.0
    %3003 = vmatpush1.msra.mxu0 %v2949
    %3004 = vmatprep.subr.mxu0 0.0
    %3005 = vmatpush1.msra.mxu0 %v2950
    %3006 = vmatprep.subr.mxu0 0.0
    %3007 = vmatpush1.msra.mxu0 %v2951
    %3008 = vmatprep.subr.mxu0 0.0
    %3009 = vmatpush1.msra.mxu0 %v2952
    %3010 = vmatprep.subr.mxu0 0.0
    %3011 = vmatpush1.msra.mxu0 %v2953
    %3012 = vmatprep.subr.mxu0 0.0
    %3013 = vmatpush1.msra.mxu0 %v2954
    %3014 = vmatprep.subr.mxu0 0.0
    %3015 = vmatpush1.msra.mxu0 %v2955
    %3016 = vmatprep.subr.mxu0 0.0
    %3017 = vmatpush1.msra.mxu0 %v2956
    %3018 = vmatprep.subr.mxu0 0.0
    %3019 = vmatpush1.msra.mxu0 %v2957
    %3020 = vmatprep.subr.mxu0 0.0
    %3021 = vmatpush1.msra.mxu0 %v2958
    %3022 = vmatprep.subr.mxu0 0.0
    %3023 = vmatpush1.msra.mxu0 %v2959
    %3024 = vmatprep.mubr.f32.mxu0 %v2925
    %3025 = vmatmul.mubr.f32.gmra.mrb[0].mxu0 %v2923
    %v3026 = vpop.f32.mrb[0].mxu0
    %v3027 = vadd.f32 0.0, %v3026
    %v3028 = vpop.f32.mrb[0].mxu0
    %3029 = vdwg.mxu0
    %v3030 = vadd.f32 %v2850, %v3027
    %s3031 = scalar_lea.vmem %s12, 10
    %v3032 = vld [vmem:[%s3031] sm:$0x3]
    %v3034 = vsel %vm2135, %v3032, 0
    %3036 = vmatprep.subr.mxu0 %v2131
    %3037 = vmatpush1.msra.mxu0 %v2130
    %3038 = vmatprep.subr.mxu0 %v2133
    %3039 = vmatpush1.msra.mxu0 %v2132
    %3040 = vmatprep.subr.mxu0 0.0
    %3041 = vmatpush1.msra.mxu0 0.0
    %3042 = vmatprep.subr.mxu0 0.0
    %3043 = vmatpush1.msra.mxu0 0.0
    %3044 = vmatprep.subr.mxu0 0.0
    %3045 = vmatpush1.msra.mxu0 0.0
    %3046 = vmatprep.subr.mxu0 0.0
    %3047 = vmatpush1.msra.mxu0 0.0
    %3048 = vmatprep.subr.mxu0 0.0
    %3049 = vmatpush1.msra.mxu0 0.0
    %3050 = vmatprep.subr.mxu0 0.0
    %3051 = vmatpush1.msra.mxu0 0.0
    %3052 = vmatprep.subr.mxu0 0.0
    %3053 = vmatpush1.msra.mxu0 0.0
    %3054 = vmatprep.subr.mxu0 0.0
    %3055 = vmatpush1.msra.mxu0 0.0
    %3056 = vmatprep.subr.mxu0 0.0
    %3057 = vmatpush1.msra.mxu0 0.0
    %3058 = vmatprep.subr.mxu0 0.0
    %3059 = vmatpush1.msra.mxu0 0.0
    %3060 = vmatprep.subr.mxu0 0.0
    %3061 = vmatpush1.msra.mxu0 0.0
    %3062 = vmatprep.subr.mxu0 0.0
    %3063 = vmatpush1.msra.mxu0 0.0
    %3064 = vmatprep.subr.mxu0 0.0
    %3065 = vmatpush1.msra.mxu0 0.0
    %3066 = vmatprep.subr.mxu0 0.0
    %3067 = vmatpush1.msra.mxu0 0.0
    %3068 = vmatprep.subr.mxu0 0.0
    %3069 = vmatpush1.msra.mxu0 0.0
    %3070 = vmatprep.subr.mxu0 0.0
    %3071 = vmatpush1.msra.mxu0 0.0
    %3072 = vmatprep.subr.mxu0 0.0
    %3073 = vmatpush1.msra.mxu0 0.0
    %3074 = vmatprep.subr.mxu0 0.0
    %3075 = vmatpush1.msra.mxu0 0.0
    %3076 = vmatprep.subr.mxu0 0.0
    %3077 = vmatpush1.msra.mxu0 0.0
    %3078 = vmatprep.subr.mxu0 0.0
    %3079 = vmatpush1.msra.mxu0 0.0
    %3080 = vmatprep.subr.mxu0 0.0
    %3081 = vmatpush1.msra.mxu0 0.0
    %3082 = vmatprep.subr.mxu0 0.0
    %3083 = vmatpush1.msra.mxu0 0.0
    %3084 = vmatprep.subr.mxu0 0.0
    %3085 = vmatpush1.msra.mxu0 0.0
    %3086 = vmatprep.subr.mxu0 0.0
    %3087 = vmatpush1.msra.mxu0 0.0
    %3088 = vmatprep.subr.mxu0 0.0
    %3089 = vmatpush1.msra.mxu0 0.0
    %3090 = vmatprep.subr.mxu0 0.0
    %3091 = vmatpush1.msra.mxu0 0.0
    %3092 = vmatprep.subr.mxu0 0.0
    %3093 = vmatpush1.msra.mxu0 0.0
    %3094 = vmatprep.subr.mxu0 0.0
    %3095 = vmatpush1.msra.mxu0 0.0
    %3096 = vmatprep.subr.mxu0 0.0
    %3097 = vmatpush1.msra.mxu0 0.0
    %3098 = vmatprep.subr.mxu0 0.0
    %3099 = vmatpush1.msra.mxu0 0.0
    %3100 = vmatprep.mubr.f32.mxu0 0.0
    %3101 = vmatmul.mubr.f32.gmra.mrb[0].mxu0 %v3034
    %v3102 = vpop.f32.mrb[0].mxu0
    %v3103 = vadd.f32 0.0, %v3102
    %v3104 = vpop.f32.mrb[0].mxu0
    %v3105 = vadd.f32 0.0, %v3104
    %3106 = vdwg.mxu0
    %s3107 = scalar_lea.vmem [#allocation7], 1280
    %v3108 = vld [vmem:[%s3107] sm:$0xff]
    %v3109 = vld [vmem:[%s3107 + $0x8] sm:$0xff]
    %v3110 = vld [vmem:[%s3107 + $0x10] sm:$0xff]
    %v3111 = vld [vmem:[%s3107 + $0x18] sm:$0xff]
    %v3112 = vld [vmem:[%s3107 + $0x20] sm:$0xff]
    %v3113 = vld [vmem:[%s3107 + $0x28] sm:$0xff]
    %v3114 = vld [vmem:[%s3107 + $0x30] sm:$0xff]
    %v3115 = vld [vmem:[%s3107 + $0x38] sm:$0xff]
    %v3116 = vld [vmem:[%s3107 + $0x40] sm:$0xff]
    %v3117 = vld [vmem:[%s3107 + $0x48] sm:$0xff]
    %v3118 = vld [vmem:[%s3107 + $0x50] sm:$0xff]
    %v3119 = vld [vmem:[%s3107 + $0x58] sm:$0xff]
    %v3120 = vld [vmem:[%s3107 + $0x60] sm:$0xff]
    %v3121 = vld [vmem:[%s3107 + $0x68] sm:$0xff]
    %v3122 = vld [vmem:[%s3107 + $0x70] sm:$0xff]
    %v3123 = vld [vmem:[%s3107 + $0x78] sm:$0xff]
    %v3124 = vld [vmem:[%s3107 + $0x80] sm:$0xff]
    %v3125 = vld [vmem:[%s3107 + $0x88] sm:$0xff]
    %v3126 = vld [vmem:[%s3107 + $0x90] sm:$0xff]
    %v3127 = vld [vmem:[%s3107 + $0x98] sm:$0xff]
    %v3128 = vld [vmem:[%s3107 + $0xa0] sm:$0xff]
    %v3129 = vld [vmem:[%s3107 + $0xa8] sm:$0xff]
    %v3130 = vld [vmem:[%s3107 + $0xb0] sm:$0xff]
    %v3131 = vld [vmem:[%s3107 + $0xb8] sm:$0xff]
    %v3132 = vld [vmem:[%s3107 + $0xc0] sm:$0xff]
    %v3133 = vld [vmem:[%s3107 + $0xc8] sm:$0xff]
    %v3134 = vld [vmem:[%s3107 + $0xd0] sm:$0xff]
    %v3135 = vld [vmem:[%s3107 + $0xd8] sm:$0xff]
    %v3136 = vld [vmem:[%s3107 + $0xe0] sm:$0xff]
    %v3137 = vld [vmem:[%s3107 + $0xe8] sm:$0xff]
    %v3138 = vld [vmem:[%s3107 + $0xf0] sm:$0xff]
    %v3139 = vld [vmem:[%s3107 + $0xf8] sm:$0xff]
    %3140 = vmatprep.subr.mxu0 0.0
    %3141 = vmatpush1.msra.mxu0 %v3108
    %3142 = vmatprep.subr.mxu0 0.0
    %3143 = vmatpush1.msra.mxu0 %v3109
    %3144 = vmatprep.subr.mxu0 0.0
    %3145 = vmatpush1.msra.mxu0 %v3110
    %3146 = vmatprep.subr.mxu0 0.0
    %3147 = vmatpush1.msra.mxu0 %v3111
    %3148 = vmatprep.subr.mxu0 0.0
    %3149 = vmatpush1.msra.mxu0 %v3112
    %3150 = vmatprep.subr.mxu0 0.0
    %3151 = vmatpush1.msra.mxu0 %v3113
    %3152 = vmatprep.subr.mxu0 0.0
    %3153 = vmatpush1.msra.mxu0 %v3114
    %3154 = vmatprep.subr.mxu0 0.0
    %3155 = vmatpush1.msra.mxu0 %v3115
    %3156 = vmatprep.subr.mxu0 0.0
    %3157 = vmatpush1.msra.mxu0 %v3116
    %3158 = vmatprep.subr.mxu0 0.0
    %3159 = vmatpush1.msra.mxu0 %v3117
    %3160 = vmatprep.subr.mxu0 0.0
    %3161 = vmatpush1.msra.mxu0 %v3118
    %3162 = vmatprep.subr.mxu0 0.0
    %3163 = vmatpush1.msra.mxu0 %v3119
    %3164 = vmatprep.subr.mxu0 0.0
    %3165 = vmatpush1.msra.mxu0 %v3120
    %3166 = vmatprep.subr.mxu0 0.0
    %3167 = vmatpush1.msra.mxu0 %v3121
    %3168 = vmatprep.subr.mxu0 0.0
    %3169 = vmatpush1.msra.mxu0 %v3122
    %3170 = vmatprep.subr.mxu0 0.0
    %3171 = vmatpush1.msra.mxu0 %v3123
    %3172 = vmatprep.subr.mxu0 0.0
    %3173 = vmatpush1.msra.mxu0 %v3124
    %3174 = vmatprep.subr.mxu0 0.0
    %3175 = vmatpush1.msra.mxu0 %v3125
    %3176 = vmatprep.subr.mxu0 0.0
    %3177 = vmatpush1.msra.mxu0 %v3126
    %3178 = vmatprep.subr.mxu0 0.0
    %3179 = vmatpush1.msra.mxu0 %v3127
    %3180 = vmatprep.subr.mxu0 0.0
    %3181 = vmatpush1.msra.mxu0 %v3128
    %3182 = vmatprep.subr.mxu0 0.0
    %3183 = vmatpush1.msra.mxu0 %v3129
    %3184 = vmatprep.subr.mxu0 0.0
    %3185 = vmatpush1.msra.mxu0 %v3130
    %3186 = vmatprep.subr.mxu0 0.0
    %3187 = vmatpush1.msra.mxu0 %v3131
    %3188 = vmatprep.subr.mxu0 0.0
    %3189 = vmatpush1.msra.mxu0 %v3132
    %3190 = vmatprep.subr.mxu0 0.0
    %3191 = vmatpush1.msra.mxu0 %v3133
    %3192 = vmatprep.subr.mxu0 0.0
    %3193 = vmatpush1.msra.mxu0 %v3134
    %3194 = vmatprep.subr.mxu0 0.0
    %3195 = vmatpush1.msra.mxu0 %v3135
    %3196 = vmatprep.subr.mxu0 0.0
    %3197 = vmatpush1.msra.mxu0 %v3136
    %3198 = vmatprep.subr.mxu0 0.0
    %3199 = vmatpush1.msra.mxu0 %v3137
    %3200 = vmatprep.subr.mxu0 0.0
    %3201 = vmatpush1.msra.mxu0 %v3138
    %3202 = vmatprep.subr.mxu0 0.0
    %3203 = vmatpush1.msra.mxu0 %v3139
    %3204 = vmatprep.mubr.f32.mxu0 %v3105
    %3205 = vmatmul.mubr.f32.gmra.mrb[0].mxu0 %v3103
    %v3206 = vpop.f32.mrb[0].mxu0
    %v3207 = vadd.f32 0.0, %v3206
    %v3208 = vpop.f32.mrb[0].mxu0
    %3209 = vdwg.mxu0
    %v3210 = vadd.f32 %v3030, %v3207
    %s3211 = scalar_lea.vmem %s12, 12
    %v3212 = vld [vmem:[%s3211] sm:$0x3]
    %v3214 = vsel %vm2135, %v3212, 0
    %3216 = vmatprep.subr.mxu0 %v2131
    %3217 = vmatpush1.msra.mxu0 %v2130
    %3218 = vmatprep.subr.mxu0 %v2133
    %3219 = vmatpush1.msra.mxu0 %v2132
    %3220 = vmatprep.subr.mxu0 0.0
    %3221 = vmatpush1.msra.mxu0 0.0
    %3222 = vmatprep.subr.mxu0 0.0
    %3223 = vmatpush1.msra.mxu0 0.0
    %3224 = vmatprep.subr.mxu0 0.0
    %3225 = vmatpush1.msra.mxu0 0.0
    %3226 = vmatprep.subr.mxu0 0.0
    %3227 = vmatpush1.msra.mxu0 0.0
    %3228 = vmatprep.subr.mxu0 0.0
    %3229 = vmatpush1.msra.mxu0 0.0
    %3230 = vmatprep.subr.mxu0 0.0
    %3231 = vmatpush1.msra.mxu0 0.0
    %3232 = vmatprep.subr.mxu0 0.0
    %3233 = vmatpush1.msra.mxu0 0.0
    %3234 = vmatprep.subr.mxu0 0.0
    %3235 = vmatpush1.msra.mxu0 0.0
    %3236 = vmatprep.subr.mxu0 0.0
    %3237 = vmatpush1.msra.mxu0 0.0
    %3238 = vmatprep.subr.mxu0 0.0
    %3239 = vmatpush1.msra.mxu0 0.0
    %3240 = vmatprep.subr.mxu0 0.0
    %3241 = vmatpush1.msra.mxu0 0.0
    %3242 = vmatprep.subr.mxu0 0.0
    %3243 = vmatpush1.msra.mxu0 0.0
    %3244 = vmatprep.subr.mxu0 0.0
    %3245 = vmatpush1.msra.mxu0 0.0
    %3246 = vmatprep.subr.mxu0 0.0
    %3247 = vmatpush1.msra.mxu0 0.0
    %3248 = vmatprep.subr.mxu0 0.0
    %3249 = vmatpush1.msra.mxu0 0.0
    %3250 = vmatprep.subr.mxu0 0.0
    %3251 = vmatpush1.msra.mxu0 0.0
    %3252 = vmatprep.subr.mxu0 0.0
    %3253 = vmatpush1.msra.mxu0 0.0
    %3254 = vmatprep.subr.mxu0 0.0
    %3255 = vmatpush1.msra.mxu0 0.0
    %3256 = vmatprep.subr.mxu0 0.0
    %3257 = vmatpush1.msra.mxu0 0.0
    %3258 = vmatprep.subr.mxu0 0.0
    %3259 = vmatpush1.msra.mxu0 0.0
    %3260 = vmatprep.subr.mxu0 0.0
    %3261 = vmatpush1.msra.mxu0 0.0
    %3262 = vmatprep.subr.mxu0 0.0
    %3263 = vmatpush1.msra.mxu0 0.0
    %3264 = vmatprep.subr.mxu0 0.0
    %3265 = vmatpush1.msra.mxu0 0.0
    %3266 = vmatprep.subr.mxu0 0.0
    %3267 = vmatpush1.msra.mxu0 0.0
    %3268 = vmatprep.subr.mxu0 0.0
    %3269 = vmatpush1.msra.mxu0 0.0
    %3270 = vmatprep.subr.mxu0 0.0
    %3271 = vmatpush1.msra.mxu0 0.0
    %3272 = vmatprep.subr.mxu0 0.0
    %3273 = vmatpush1.msra.mxu0 0.0
    %3274 = vmatprep.subr.mxu0 0.0
    %3275 = vmatpush1.msra.mxu0 0.0
    %3276 = vmatprep.subr.mxu0 0.0
    %3277 = vmatpush1.msra.mxu0 0.0
    %3278 = vmatprep.subr.mxu0 0.0
    %3279 = vmatpush1.msra.mxu0 0.0
    %3280 = vmatprep.mubr.f32.mxu0 0.0
    %3281 = vmatmul.mubr.f32.gmra.mrb[0].mxu0 %v3214
    %v3282 = vpop.f32.mrb[0].mxu0
    %v3283 = vadd.f32 0.0, %v3282
    %v3284 = vpop.f32.mrb[0].mxu0
    %v3285 = vadd.f32 0.0, %v3284
    %3286 = vdwg.mxu0
    %s3287 = scalar_lea.vmem [#allocation7], 1536
    %v3288 = vld [vmem:[%s3287] sm:$0xff]
    %v3289 = vld [vmem:[%s3287 + $0x8] sm:$0xff]
    %v3290 = vld [vmem:[%s3287 + $0x10] sm:$0xff]
    %v3291 = vld [vmem:[%s3287 + $0x18] sm:$0xff]
    %v3292 = vld [vmem:[%s3287 + $0x20] sm:$0xff]
    %v3293 = vld [vmem:[%s3287 + $0x28] sm:$0xff]
    %v3294 = vld [vmem:[%s3287 + $0x30] sm:$0xff]
    %v3295 = vld [vmem:[%s3287 + $0x38] sm:$0xff]
    %v3296 = vld [vmem:[%s3287 + $0x40] sm:$0xff]
    %v3297 = vld [vmem:[%s3287 + $0x48] sm:$0xff]
    %v3298 = vld [vmem:[%s3287 + $0x50] sm:$0xff]
    %v3299 = vld [vmem:[%s3287 + $0x58] sm:$0xff]
    %v3300 = vld [vmem:[%s3287 + $0x60] sm:$0xff]
    %v3301 = vld [vmem:[%s3287 + $0x68] sm:$0xff]
    %v3302 = vld [vmem:[%s3287 + $0x70] sm:$0xff]
    %v3303 = vld [vmem:[%s3287 + $0x78] sm:$0xff]
    %v3304 = vld [vmem:[%s3287 + $0x80] sm:$0xff]
    %v3305 = vld [vmem:[%s3287 + $0x88] sm:$0xff]
    %v3306 = vld [vmem:[%s3287 + $0x90] sm:$0xff]
    %v3307 = vld [vmem:[%s3287 + $0x98] sm:$0xff]
    %v3308 = vld [vmem:[%s3287 + $0xa0] sm:$0xff]
    %v3309 = vld [vmem:[%s3287 + $0xa8] sm:$0xff]
    %v3310 = vld [vmem:[%s3287 + $0xb0] sm:$0xff]
    %v3311 = vld [vmem:[%s3287 + $0xb8] sm:$0xff]
    %v3312 = vld [vmem:[%s3287 + $0xc0] sm:$0xff]
    %v3313 = vld [vmem:[%s3287 + $0xc8] sm:$0xff]
    %v3314 = vld [vmem:[%s3287 + $0xd0] sm:$0xff]
    %v3315 = vld [vmem:[%s3287 + $0xd8] sm:$0xff]
    %v3316 = vld [vmem:[%s3287 + $0xe0] sm:$0xff]
    %v3317 = vld [vmem:[%s3287 + $0xe8] sm:$0xff]
    %v3318 = vld [vmem:[%s3287 + $0xf0] sm:$0xff]
    %v3319 = vld [vmem:[%s3287 + $0xf8] sm:$0xff]
    %3320 = vmatprep.subr.mxu0 0.0
    %3321 = vmatpush1.msra.mxu0 %v3288
    %3322 = vmatprep.subr.mxu0 0.0
    %3323 = vmatpush1.msra.mxu0 %v3289
    %3324 = vmatprep.subr.mxu0 0.0
    %3325 = vmatpush1.msra.mxu0 %v3290
    %3326 = vmatprep.subr.mxu0 0.0
    %3327 = vmatpush1.msra.mxu0 %v3291
    %3328 = vmatprep.subr.mxu0 0.0
    %3329 = vmatpush1.msra.mxu0 %v3292
    %3330 = vmatprep.subr.mxu0 0.0
    %3331 = vmatpush1.msra.mxu0 %v3293
    %3332 = vmatprep.subr.mxu0 0.0
    %3333 = vmatpush1.msra.mxu0 %v3294
    %3334 = vmatprep.subr.mxu0 0.0
    %3335 = vmatpush1.msra.mxu0 %v3295
    %3336 = vmatprep.subr.mxu0 0.0
    %3337 = vmatpush1.msra.mxu0 %v3296
    %3338 = vmatprep.subr.mxu0 0.0
    %3339 = vmatpush1.msra.mxu0 %v3297
    %3340 = vmatprep.subr.mxu0 0.0
    %3341 = vmatpush1.msra.mxu0 %v3298
    %3342 = vmatprep.subr.mxu0 0.0
    %3343 = vmatpush1.msra.mxu0 %v3299
    %3344 = vmatprep.subr.mxu0 0.0
    %3345 = vmatpush1.msra.mxu0 %v3300
    %3346 = vmatprep.subr.mxu0 0.0
    %3347 = vmatpush1.msra.mxu0 %v3301
    %3348 = vmatprep.subr.mxu0 0.0
    %3349 = vmatpush1.msra.mxu0 %v3302
    %3350 = vmatprep.subr.mxu0 0.0
    %3351 = vmatpush1.msra.mxu0 %v3303
    %3352 = vmatprep.subr.mxu0 0.0
    %3353 = vmatpush1.msra.mxu0 %v3304
    %3354 = vmatprep.subr.mxu0 0.0
    %3355 = vmatpush1.msra.mxu0 %v3305
    %3356 = vmatprep.subr.mxu0 0.0
    %3357 = vmatpush1.msra.mxu0 %v3306
    %3358 = vmatprep.subr.mxu0 0.0
    %3359 = vmatpush1.msra.mxu0 %v3307
    %3360 = vmatprep.subr.mxu0 0.0
    %3361 = vmatpush1.msra.mxu0 %v3308
    %3362 = vmatprep.subr.mxu0 0.0
    %3363 = vmatpush1.msra.mxu0 %v3309
    %3364 = vmatprep.subr.mxu0 0.0
    %3365 = vmatpush1.msra.mxu0 %v3310
    %3366 = vmatprep.subr.mxu0 0.0
    %3367 = vmatpush1.msra.mxu0 %v3311
    %3368 = vmatprep.subr.mxu0 0.0
    %3369 = vmatpush1.msra.mxu0 %v3312
    %3370 = vmatprep.subr.mxu0 0.0
    %3371 = vmatpush1.msra.mxu0 %v3313
    %3372 = vmatprep.subr.mxu0 0.0
    %3373 = vmatpush1.msra.mxu0 %v3314
    %3374 = vmatprep.subr.mxu0 0.0
    %3375 = vmatpush1.msra.mxu0 %v3315
    %3376 = vmatprep.subr.mxu0 0.0
    %3377 = vmatpush1.msra.mxu0 %v3316
    %3378 = vmatprep.subr.mxu0 0.0
    %3379 = vmatpush1.msra.mxu0 %v3317
    %3380 = vmatprep.subr.mxu0 0.0
    %3381 = vmatpush1.msra.mxu0 %v3318
    %3382 = vmatprep.subr.mxu0 0.0
    %3383 = vmatpush1.msra.mxu0 %v3319
    %3384 = vmatprep.mubr.f32.mxu0 %v3285
    %3385 = vmatmul.mubr.f32.gmra.mrb[0].mxu0 %v3283
    %v3386 = vpop.f32.mrb[0].mxu0
    %v3387 = vadd.f32 0.0, %v3386
    %v3388 = vpop.f32.mrb[0].mxu0
    %3389 = vdwg.mxu0
    %v3390 = vadd.f32 %v3210, %v3387
    %s3391 = scalar_lea.vmem %s12, 14
    %v3392 = vld [vmem:[%s3391] sm:$0x3]
    %v3394 = vsel %vm2135, %v3392, 0
    %3396 = vmatprep.subr.mxu0 %v2131
    %3397 = vmatpush1.msra.mxu0 %v2130
    %3398 = vmatprep.subr.mxu0 %v2133
    %3399 = vmatpush1.msra.mxu0 %v2132
    %3400 = vmatprep.subr.mxu0 0.0
    %3401 = vmatpush1.msra.mxu0 0.0
    %3402 = vmatprep.subr.mxu0 0.0
    %3403 = vmatpush1.msra.mxu0 0.0
    %3404 = vmatprep.subr.mxu0 0.0
    %3405 = vmatpush1.msra.mxu0 0.0
    %3406 = vmatprep.subr.mxu0 0.0
    %3407 = vmatpush1.msra.mxu0 0.0
    %3408 = vmatprep.subr.mxu0 0.0
    %3409 = vmatpush1.msra.mxu0 0.0
    %3410 = vmatprep.subr.mxu0 0.0
    %3411 = vmatpush1.msra.mxu0 0.0
    %3412 = vmatprep.subr.mxu0 0.0
    %3413 = vmatpush1.msra.mxu0 0.0
    %3414 = vmatprep.subr.mxu0 0.0
    %3415 = vmatpush1.msra.mxu0 0.0
    %3416 = vmatprep.subr.mxu0 0.0
    %3417 = vmatpush1.msra.mxu0 0.0
    %3418 = vmatprep.subr.mxu0 0.0
    %3419 = vmatpush1.msra.mxu0 0.0
    %3420 = vmatprep.subr.mxu0 0.0
    %3421 = vmatpush1.msra.mxu0 0.0
    %3422 = vmatprep.subr.mxu0 0.0
    %3423 = vmatpush1.msra.mxu0 0.0
    %3424 = vmatprep.subr.mxu0 0.0
    %3425 = vmatpush1.msra.mxu0 0.0
    %3426 = vmatprep.subr.mxu0 0.0
    %3427 = vmatpush1.msra.mxu0 0.0
    %3428 = vmatprep.subr.mxu0 0.0
    %3429 = vmatpush1.msra.mxu0 0.0
    %3430 = vmatprep.subr.mxu0 0.0
    %3431 = vmatpush1.msra.mxu0 0.0
    %3432 = vmatprep.subr.mxu0 0.0
    %3433 = vmatpush1.msra.mxu0 0.0
    %3434 = vmatprep.subr.mxu0 0.0
    %3435 = vmatpush1.msra.mxu0 0.0
    %3436 = vmatprep.subr.mxu0 0.0
    %3437 = vmatpush1.msra.mxu0 0.0
    %3438 = vmatprep.subr.mxu0 0.0
    %3439 = vmatpush1.msra.mxu0 0.0
    %3440 = vmatprep.subr.mxu0 0.0
    %3441 = vmatpush1.msra.mxu0 0.0
    %3442 = vmatprep.subr.mxu0 0.0
    %3443 = vmatpush1.msra.mxu0 0.0
    %3444 = vmatprep.subr.mxu0 0.0
    %3445 = vmatpush1.msra.mxu0 0.0
    %3446 = vmatprep.subr.mxu0 0.0
    %3447 = vmatpush1.msra.mxu0 0.0
    %3448 = vmatprep.subr.mxu0 0.0
    %3449 = vmatpush1.msra.mxu0 0.0
    %3450 = vmatprep.subr.mxu0 0.0
    %3451 = vmatpush1.msra.mxu0 0.0
    %3452 = vmatprep.subr.mxu0 0.0
    %3453 = vmatpush1.msra.mxu0 0.0
    %3454 = vmatprep.subr.mxu0 0.0
    %3455 = vmatpush1.msra.mxu0 0.0
    %3456 = vmatprep.subr.mxu0 0.0
    %3457 = vmatpush1.msra.mxu0 0.0
    %3458 = vmatprep.subr.mxu0 0.0
    %3459 = vmatpush1.msra.mxu0 0.0
    %3460 = vmatprep.mubr.f32.mxu0 0.0
    %3461 = vmatmul.mubr.f32.gmra.mrb[0].mxu0 %v3394
    %v3462 = vpop.f32.mrb[0].mxu0
    %v3463 = vadd.f32 0.0, %v3462
    %v3464 = vpop.f32.mrb[0].mxu0
    %v3465 = vadd.f32 0.0, %v3464
    %3466 = vdwg.mxu0
    %s3467 = scalar_lea.vmem [#allocation7], 1792
    %v3468 = vld [vmem:[%s3467] sm:$0xff]
    %v3469 = vld [vmem:[%s3467 + $0x8] sm:$0xff]
    %v3470 = vld [vmem:[%s3467 + $0x10] sm:$0xff]
    %v3471 = vld [vmem:[%s3467 + $0x18] sm:$0xff]
    %v3472 = vld [vmem:[%s3467 + $0x20] sm:$0xff]
    %v3473 = vld [vmem:[%s3467 + $0x28] sm:$0xff]
    %v3474 = vld [vmem:[%s3467 + $0x30] sm:$0xff]
    %v3475 = vld [vmem:[%s3467 + $0x38] sm:$0xff]
    %v3476 = vld [vmem:[%s3467 + $0x40] sm:$0xff]
    %v3477 = vld [vmem:[%s3467 + $0x48] sm:$0xff]
    %v3478 = vld [vmem:[%s3467 + $0x50] sm:$0xff]
    %v3479 = vld [vmem:[%s3467 + $0x58] sm:$0xff]
    %v3480 = vld [vmem:[%s3467 + $0x60] sm:$0xff]
    %v3481 = vld [vmem:[%s3467 + $0x68] sm:$0xff]
    %v3482 = vld [vmem:[%s3467 + $0x70] sm:$0xff]
    %v3483 = vld [vmem:[%s3467 + $0x78] sm:$0xff]
    %v3484 = vld [vmem:[%s3467 + $0x80] sm:$0xff]
    %v3485 = vld [vmem:[%s3467 + $0x88] sm:$0xff]
    %v3486 = vld [vmem:[%s3467 + $0x90] sm:$0xff]
    %v3487 = vld [vmem:[%s3467 + $0x98] sm:$0xff]
    %v3488 = vld [vmem:[%s3467 + $0xa0] sm:$0xff]
    %v3489 = vld [vmem:[%s3467 + $0xa8] sm:$0xff]
    %v3490 = vld [vmem:[%s3467 + $0xb0] sm:$0xff]
    %v3491 = vld [vmem:[%s3467 + $0xb8] sm:$0xff]
    %v3492 = vld [vmem:[%s3467 + $0xc0] sm:$0xff]
    %v3493 = vld [vmem:[%s3467 + $0xc8] sm:$0xff]
    %v3494 = vld [vmem:[%s3467 + $0xd0] sm:$0xff]
    %v3495 = vld [vmem:[%s3467 + $0xd8] sm:$0xff]
    %v3496 = vld [vmem:[%s3467 + $0xe0] sm:$0xff]
    %v3497 = vld [vmem:[%s3467 + $0xe8] sm:$0xff]
    %v3498 = vld [vmem:[%s3467 + $0xf0] sm:$0xff]
    %v3499 = vld [vmem:[%s3467 + $0xf8] sm:$0xff]
    %3500 = vmatprep.subr.mxu0 0.0
    %3501 = vmatpush1.msra.mxu0 %v3468
    %3502 = vmatprep.subr.mxu0 0.0
    %3503 = vmatpush1.msra.mxu0 %v3469
    %3504 = vmatprep.subr.mxu0 0.0
    %3505 = vmatpush1.msra.mxu0 %v3470
    %3506 = vmatprep.subr.mxu0 0.0
    %3507 = vmatpush1.msra.mxu0 %v3471
    %3508 = vmatprep.subr.mxu0 0.0
    %3509 = vmatpush1.msra.mxu0 %v3472
    %3510 = vmatprep.subr.mxu0 0.0
    %3511 = vmatpush1.msra.mxu0 %v3473
    %3512 = vmatprep.subr.mxu0 0.0
    %3513 = vmatpush1.msra.mxu0 %v3474
    %3514 = vmatprep.subr.mxu0 0.0
    %3515 = vmatpush1.msra.mxu0 %v3475
    %3516 = vmatprep.subr.mxu0 0.0
    %3517 = vmatpush1.msra.mxu0 %v3476
    %3518 = vmatprep.subr.mxu0 0.0
    %3519 = vmatpush1.msra.mxu0 %v3477
    %3520 = vmatprep.subr.mxu0 0.0
    %3521 = vmatpush1.msra.mxu0 %v3478
    %3522 = vmatprep.subr.mxu0 0.0
    %3523 = vmatpush1.msra.mxu0 %v3479
    %3524 = vmatprep.subr.mxu0 0.0
    %3525 = vmatpush1.msra.mxu0 %v3480
    %3526 = vmatprep.subr.mxu0 0.0
    %3527 = vmatpush1.msra.mxu0 %v3481
    %3528 = vmatprep.subr.mxu0 0.0
    %3529 = vmatpush1.msra.mxu0 %v3482
    %3530 = vmatprep.subr.mxu0 0.0
    %3531 = vmatpush1.msra.mxu0 %v3483
    %3532 = vmatprep.subr.mxu0 0.0
    %3533 = vmatpush1.msra.mxu0 %v3484
    %3534 = vmatprep.subr.mxu0 0.0
    %3535 = vmatpush1.msra.mxu0 %v3485
    %3536 = vmatprep.subr.mxu0 0.0
    %3537 = vmatpush1.msra.mxu0 %v3486
    %3538 = vmatprep.subr.mxu0 0.0
    %3539 = vmatpush1.msra.mxu0 %v3487
    %3540 = vmatprep.subr.mxu0 0.0
    %3541 = vmatpush1.msra.mxu0 %v3488
    %3542 = vmatprep.subr.mxu0 0.0
    %3543 = vmatpush1.msra.mxu0 %v3489
    %3544 = vmatprep.subr.mxu0 0.0
    %3545 = vmatpush1.msra.mxu0 %v3490
    %3546 = vmatprep.subr.mxu0 0.0
    %3547 = vmatpush1.msra.mxu0 %v3491
    %3548 = vmatprep.subr.mxu0 0.0
    %3549 = vmatpush1.msra.mxu0 %v3492
    %3550 = vmatprep.subr.mxu0 0.0
    %3551 = vmatpush1.msra.mxu0 %v3493
    %3552 = vmatprep.subr.mxu0 0.0
    %3553 = vmatpush1.msra.mxu0 %v3494
    %3554 = vmatprep.subr.mxu0 0.0
    %3555 = vmatpush1.msra.mxu0 %v3495
    %3556 = vmatprep.subr.mxu0 0.0
    %3557 = vmatpush1.msra.mxu0 %v3496
    %3558 = vmatprep.subr.mxu0 0.0
    %3559 = vmatpush1.msra.mxu0 %v3497
    %3560 = vmatprep.subr.mxu0 0.0
    %3561 = vmatpush1.msra.mxu0 %v3498
    %3562 = vmatprep.subr.mxu0 0.0
    %3563 = vmatpush1.msra.mxu0 %v3499
    %3564 = vmatprep.mubr.f32.mxu0 %v3465
    %3565 = vmatmul.mubr.f32.gmra.mrb[0].mxu0 %v3463
    %v3566 = vpop.f32.mrb[0].mxu0
    %v3567 = vadd.f32 0.0, %v3566
    %v3568 = vpop.f32.mrb[0].mxu0
    %3569 = vdwg.mxu0
    %v3570 = vadd.f32 %v3390, %v3567
    %v3571 = vld [vmem:[%s14] sm:$0x1]
    %v3573 = vlaneseq
    %v3574 = vshrl.u32 %v3573, 7
    %v3575 = vsub.s32 0, %v3574
    %v3576 = vrot.slane %v3571, %v3575
    %v3578 = vadd.f32 %v3570, %v3576
    %v3579 = vld [vmem:[%s15] sm:$0x1]
    %v3580 = vld [vmem:[%s16] sm:$0x1]
    %vm3581 = vcmask 1041408
    %v3582 = vsel %vm3581, %v3578, 0.0
    %v3583 = vrot.slane %v3582, 4
    %v3584 = vadd.f32 %v3582, %v3583
    %v3585 = vrot.slane %v3584, 2
    %v3586 = vadd.f32 %v3584, %v3585
    %v3587 = vrot.slane %v3586, 1
    %v3588 = vadd.f32 %v3586, %v3587
    %v3589 = vrcp.pop 2.0
    %v3590 = vmul.f32 %v3588, %v3589
    %v3591 = vsub.f32 %v3578, %v3590
    %v3592 = vmul.f32 %v3591, %v3591
    %v3593 = vsel %vm3581, %v3592, 0.0
    %v3594 = vrot.slane %v3593, 4
    %v3595 = vadd.f32 %v3593, %v3594
    %v3596 = vrot.slane %v3595, 2
    %v3597 = vadd.f32 %v3595, %v3596
    %v3598 = vrot.slane %v3597, 1
    %v3599 = vadd.f32 %v3597, %v3598
    %v3600 = vmul.f32 %v3599, %v3589
    %v3601 = vadd.f32 %v3600, 1e-05
    %v3602 = vrsqrt.pop %v3601
    %v3603 = vmul.f32 %v3579, %v3602
    %v3604 = vmul.f32 %v3590, %v3603
    %v3605 = vsub.f32 %v3580, %v3604
    %v3607 = vlaneseq
    %v3608 = vshrl.u32 %v3607, 7
    %v3609 = vsub.s32 0, %v3608
    %v3610 = vrot.slane %v3603, %v3609
    %v3612 = vmul.f32 %v3578, %v3610
    %v3614 = vlaneseq
    %v3615 = vshrl.u32 %v3614, 7
    %v3616 = vsub.s32 0, %v3615
    %v3617 = vrot.slane %v3605, %v3616
    %v3619 = vadd.f32 %v3612, %v3617
    %vm3620 = vcmp.ge.f32.partialorder %v3619, 0.0
    %v3621 = vmul.f32 %v3619, 0.01
    %v3622 = vsel %vm3620, %v3619, %v3621
    %v3623 = vld [vmem:[%s17] sm:$0xff]
    %v3624 = vld [vmem:[%s17 + $0x8] sm:$0xff]
    %v3625 = vld [vmem:[%s17 + $0x10] sm:$0xff]
    %v3626 = vld [vmem:[%s17 + $0x18] sm:$0xff]
    %v3627 = vld [vmem:[%s17 + $0x20] sm:$0xff]
    %v3628 = vld [vmem:[%s17 + $0x28] sm:$0xff]
    %v3629 = vld [vmem:[%s17 + $0x30] sm:$0xff]
    %v3630 = vld [vmem:[%s17 + $0x38] sm:$0xff]
    %v3631 = vld [vmem:[%s17 + $0x40] sm:$0xff]
    %v3632 = vld [vmem:[%s17 + $0x48] sm:$0xff]
    %v3633 = vld [vmem:[%s17 + $0x50] sm:$0xff]
    %v3634 = vld [vmem:[%s17 + $0x58] sm:$0xff]
    %v3635 = vld [vmem:[%s17 + $0x60] sm:$0xff]
    %v3636 = vld [vmem:[%s17 + $0x68] sm:$0xff]
    %v3637 = vld [vmem:[%s17 + $0x70] sm:$0xff]
    %v3638 = vld [vmem:[%s17 + $0x78] sm:$0xff]
    %v3639 = vld [vmem:[%s18] sm:$0x1]
    %v3641 = vlaneseq
    %v3642 = vshrl.u32 %v3641, 7
    %v3643 = vsub.s32 0, %v3642
    %v3644 = vrot.slane %v3639, %v3643
    %3646 = vmatprep.subr.mxu0 0.0
    %3647 = vmatpush1.msra.mxu0 %v3623
    %3648 = vmatprep.subr.mxu0 0.0
    %3649 = vmatpush1.msra.mxu0 %v3624
    %3650 = vmatprep.subr.mxu0 0.0
    %3651 = vmatpush1.msra.mxu0 %v3625
    %3652 = vmatprep.subr.mxu0 0.0
    %3653 = vmatpush1.msra.mxu0 %v3626
    %3654 = vmatprep.subr.mxu0 0.0
    %3655 = vmatpush1.msra.mxu0 %v3627
    %3656 = vmatprep.subr.mxu0 0.0
    %3657 = vmatpush1.msra.mxu0 %v3628
    %3658 = vmatprep.subr.mxu0 0.0
    %3659 = vmatpush1.msra.mxu0 %v3629
    %3660 = vmatprep.subr.mxu0 0.0
    %3661 = vmatpush1.msra.mxu0 %v3630
    %3662 = vmatprep.subr.mxu0 0.0
    %3663 = vmatpush1.msra.mxu0 %v3631
    %3664 = vmatprep.subr.mxu0 0.0
    %3665 = vmatpush1.msra.mxu0 %v3632
    %3666 = vmatprep.subr.mxu0 0.0
    %3667 = vmatpush1.msra.mxu0 %v3633
    %3668 = vmatprep.subr.mxu0 0.0
    %3669 = vmatpush1.msra.mxu0 %v3634
    %3670 = vmatprep.subr.mxu0 0.0
    %3671 = vmatpush1.msra.mxu0 %v3635
    %3672 = vmatprep.subr.mxu0 0.0
    %3673 = vmatpush1.msra.mxu0 %v3636
    %3674 = vmatprep.subr.mxu0 0.0
    %3675 = vmatpush1.msra.mxu0 %v3637
    %3676 = vmatprep.subr.mxu0 0.0
    %3677 = vmatpush1.msra.mxu0 %v3638
    %3678 = vmatprep.subr.mxu0 0.0
    %3679 = vmatpush1.msra.mxu0 0.0
    %3680 = vmatprep.subr.mxu0 0.0
    %3681 = vmatpush1.msra.mxu0 0.0
    %3682 = vmatprep.subr.mxu0 0.0
    %3683 = vmatpush1.msra.mxu0 0.0
    %3684 = vmatprep.subr.mxu0 0.0
    %3685 = vmatpush1.msra.mxu0 0.0
    %3686 = vmatprep.subr.mxu0 0.0
    %3687 = vmatpush1.msra.mxu0 0.0
    %3688 = vmatprep.subr.mxu0 0.0
    %3689 = vmatpush1.msra.mxu0 0.0
    %3690 = vmatprep.subr.mxu0 0.0
    %3691 = vmatpush1.msra.mxu0 0.0
    %3692 = vmatprep.subr.mxu0 0.0
    %3693 = vmatpush1.msra.mxu0 0.0
    %3694 = vmatprep.subr.mxu0 0.0
    %3695 = vmatpush1.msra.mxu0 0.0
    %3696 = vmatprep.subr.mxu0 0.0
    %3697 = vmatpush1.msra.mxu0 0.0
    %3698 = vmatprep.subr.mxu0 0.0
    %3699 = vmatpush1.msra.mxu0 0.0
    %3700 = vmatprep.subr.mxu0 0.0
    %3701 = vmatpush1.msra.mxu0 0.0
    %3702 = vmatprep.subr.mxu0 0.0
    %3703 = vmatpush1.msra.mxu0 0.0
    %3704 = vmatprep.subr.mxu0 0.0
    %3705 = vmatpush1.msra.mxu0 0.0
    %3706 = vmatprep.subr.mxu0 0.0
    %3707 = vmatpush1.msra.mxu0 0.0
    %3708 = vmatprep.subr.mxu0 0.0
    %3709 = vmatpush1.msra.mxu0 0.0
    %3710 = vmatprep.mubr.f32.mxu0 0.0
    %3711 = vmatmul.mubr.f32.gmra.mrb[0].mxu0 %v3622
    %v3712 = vpop.f32.mrb[0].mxu0
    %v3713 = vadd.f32 %v3644, %v3712
    %v3714 = vpop.f32.mrb[0].mxu0
    %3715 = vdwg.mxu0
    %v3716 = vld [vmem:[%s19] sm:$0x1]
    %v3717 = vld [vmem:[%s20] sm:$0x1]
    %vm3718 = vcmask 517120
    %v3719 = vsel %vm3718, %v3713, 0.0
    %v3720 = vrot.slane %v3719, 4
    %v3721 = vadd.f32 %v3719, %v3720
    %v3722 = vrot.slane %v3721, 2
    %v3723 = vadd.f32 %v3721, %v3722
    %v3724 = vrot.slane %v3723, 1
    %v3725 = vadd.f32 %v3723, %v3724
    %v3726 = vmul.f32 %v3725, %v3589
    %v3727 = vsub.f32 %v3713, %v3726
    %v3728 = vmul.f32 %v3727, %v3727
    %v3729 = vsel %vm3718, %v3728, 0.0
    %v3730 = vrot.slane %v3729, 4
    %v3731 = vadd.f32 %v3729, %v3730
    %v3732 = vrot.slane %v3731, 2
    %v3733 = vadd.f32 %v3731, %v3732
    %v3734 = vrot.slane %v3733, 1
    %v3735 = vadd.f32 %v3733, %v3734
    %v3736 = vmul.f32 %v3735, %v3589
    %v3737 = vadd.f32 %v3736, 1e-05
    %v3738 = vrsqrt.pop %v3737
    %v3739 = vmul.f32 %v3716, %v3738
    %v3740 = vmul.f32 %v3726, %v3739
    %v3741 = vsub.f32 %v3717, %v3740
    %v3743 = vlaneseq
    %v3744 = vshrl.u32 %v3743, 7
    %v3745 = vsub.s32 0, %v3744
    %v3746 = vrot.slane %v3739, %v3745
    %v3748 = vmul.f32 %v3713, %v3746
    %v3750 = vlaneseq
    %v3751 = vshrl.u32 %v3750, 7
    %v3752 = vsub.s32 0, %v3751
    %v3753 = vrot.slane %v3741, %v3752
    %v3755 = vadd.f32 %v3748, %v3753
    %vm3756 = vcmp.ge.f32.partialorder %v3755, 0.0
    %v3757 = vmul.f32 %v3755, 0.01
    %v3758 = vsel %vm3756, %v3755, %v3757
    %v3759 = vld [vmem:[#allocation8] sm:$0xff]
    %v3760 = vld [vmem:[#allocation8 + $0x8] sm:$0xff]
    %v3761 = vld [vmem:[#allocation8 + $0x10] sm:$0xff]
    %v3762 = vld [vmem:[#allocation8 + $0x18] sm:$0xff]
    %v3763 = vld [vmem:[#allocation8 + $0x20] sm:$0xff]
    %v3764 = vld [vmem:[#allocation8 + $0x28] sm:$0xff]
    %v3765 = vld [vmem:[#allocation8 + $0x30] sm:$0xff]
    %v3766 = vld [vmem:[#allocation8 + $0x38] sm:$0xff]
    %v3767 = vld [vmem:[%s22] sm:$0x1]
    %v3769 = vlaneseq
    %v3770 = vshrl.u32 %v3769, 7
    %v3771 = vsub.s32 0, %v3770
    %v3772 = vrot.slane %v3767, %v3771
    %v3775 = vsel %vm351, %v3758, 0
    %3777 = vmatprep.subr.mxu0 0.0
    %3778 = vmatpush1.msra.mxu0 %v3759
    %3779 = vmatprep.subr.mxu0 0.0
    %3780 = vmatpush1.msra.mxu0 %v3760
    %3781 = vmatprep.subr.mxu0 0.0
    %3782 = vmatpush1.msra.mxu0 %v3761
    %3783 = vmatprep.subr.mxu0 0.0
    %3784 = vmatpush1.msra.mxu0 %v3762
    %3785 = vmatprep.subr.mxu0 0.0
    %3786 = vmatpush1.msra.mxu0 %v3763
    %3787 = vmatprep.subr.mxu0 0.0
    %3788 = vmatpush1.msra.mxu0 %v3764
    %3789 = vmatprep.subr.mxu0 0.0
    %3790 = vmatpush1.msra.mxu0 %v3765
    %3791 = vmatprep.subr.mxu0 0.0
    %3792 = vmatpush1.msra.mxu0 %v3766
    %3793 = vmatprep.subr.mxu0 0.0
    %3794 = vmatpush1.msra.mxu0 0.0
    %3795 = vmatprep.subr.mxu0 0.0
    %3796 = vmatpush1.msra.mxu0 0.0
    %3797 = vmatprep.subr.mxu0 0.0
    %3798 = vmatpush1.msra.mxu0 0.0
    %3799 = vmatprep.subr.mxu0 0.0
    %3800 = vmatpush1.msra.mxu0 0.0
    %3801 = vmatprep.subr.mxu0 0.0
    %3802 = vmatpush1.msra.mxu0 0.0
    %3803 = vmatprep.subr.mxu0 0.0
    %3804 = vmatpush1.msra.mxu0 0.0
    %3805 = vmatprep.subr.mxu0 0.0
    %3806 = vmatpush1.msra.mxu0 0.0
    %3807 = vmatprep.subr.mxu0 0.0
    %3808 = vmatpush1.msra.mxu0 0.0
    %3809 = vmatprep.subr.mxu0 0.0
    %3810 = vmatpush1.msra.mxu0 0.0
    %3811 = vmatprep.subr.mxu0 0.0
    %3812 = vmatpush1.msra.mxu0 0.0
    %3813 = vmatprep.subr.mxu0 0.0
    %3814 = vmatpush1.msra.mxu0 0.0
    %3815 = vmatprep.subr.mxu0 0.0
    %3816 = vmatpush1.msra.mxu0 0.0
    %3817 = vmatprep.subr.mxu0 0.0
    %3818 = vmatpush1.msra.mxu0 0.0
    %3819 = vmatprep.subr.mxu0 0.0
    %3820 = vmatpush1.msra.mxu0 0.0
    %3821 = vmatprep.subr.mxu0 0.0
    %3822 = vmatpush1.msra.mxu0 0.0
    %3823 = vmatprep.subr.mxu0 0.0
    %3824 = vmatpush1.msra.mxu0 0.0
    %3825 = vmatprep.subr.mxu0 0.0
    %3826 = vmatpush1.msra.mxu0 0.0
    %3827 = vmatprep.subr.mxu0 0.0
    %3828 = vmatpush1.msra.mxu0 0.0
    %3829 = vmatprep.subr.mxu0 0.0
    %3830 = vmatpush1.msra.mxu0 0.0
    %3831 = vmatprep.subr.mxu0 0.0
    %3832 = vmatpush1.msra.mxu0 0.0
    %3833 = vmatprep.subr.mxu0 0.0
    %3834 = vmatpush1.msra.mxu0 0.0
    %3835 = vmatprep.subr.mxu0 0.0
    %3836 = vmatpush1.msra.mxu0 0.0
    %3837 = vmatprep.subr.mxu0 0.0
    %3838 = vmatpush1.msra.mxu0 0.0
    %3839 = vmatprep.subr.mxu0 0.0
    %3840 = vmatpush1.msra.mxu0 0.0
    %3841 = vmatprep.mubr.f32.mxu0 0.0
    %3842 = vmatmul.mubr.f32.gmra.mrb[0].mxu0 %v3775
    %v3843 = vpop.f32.mrb[0].mxu0
    %v3844 = vadd.f32 %v3772, %v3843
    %v3845 = vpop.f32.mrb[0].mxu0
    %3846 = vdwg.mxu0
    %vm3847 = vcmask 74752
    %3848 = vst.msk [vmem:[#allocation10] sm:$0x3] %vm3847, %v3844
    // Predicated region
    $region110: #{sound_classifier_forward.1} parent=1 // pred_check
      _
    $region111: #{sound_classifier_forward.1} parent=1 // pred_check_branch
      %3850 = sbr.rel (0) target = $region113
    $region112: #{sound_classifier_forward.1} parent=1 // pred_region
      %s3852 = ssub.s32 32, 32
      %3853 = vsyncadd [#allocation4], %s3852
      %s3855 = sshll.u32 [#allocation10], 4
      %s3856 = int_to_ptr.vmem [resolvable:$true] %s3855
      %3858 = dma.vmem_to_hbm [thread:$0]  %s3856, 32, %s23, [#allocation4]
    $region113: #{sound_classifier_forward.1} parent=1 // pred_fallthru
      _
    // Predicated region
    $region114: #{sound_classifier_forward.1} parent=1 // pred_check
      _
    $region115: #{sound_classifier_forward.1} parent=1 // pred_check_branch
      %3860 = sbr.rel (0) target = $region117
    $region116: #{sound_classifier_forward.1} parent=1 // pred_region
      %3861 = dma.done [#allocation4], 32
    $region117: #{sound_classifier_forward.1} parent=1 // pred_fallthru
      _
    %3862 = vsyncpa [#allocation3], 1
    %3863 = vsyncpa [#allocation6], 1
    %3864 = vsyncpa [#allocation9], 1
    %3865 = vsyncpa [#allocation4], 1

</llo_original>
